<compile_context>
chip_gen: v6e
topology: v6e:2x2x1
jax: 0.10.0
libtpu: 0.0.40
codegen_flags: <defaults>
</compile_context>

<pallas_src>
import functools
import math

import jax
import jax.numpy as jnp
from jax import lax
from jax.experimental import pallas as pl
from jax.experimental.pallas import tpu as pltpu


# ----------------------------------------------------------------------------
# Device-generation dispatch (perf only; semantics identical on all chips).
# ----------------------------------------------------------------------------
def _device_kind():
    try:
        return jax.devices()[0].device_kind.lower()
    except Exception:  # pragma: no cover
        return ""


def _pick_exp_dtype():
    # v6e / v7x have bf16 VPU/EUP -> run softmax exp in bf16 there.
    # v5e (and older) has no bf16 EUP -> keep softmax math in f32 and only cast to
    # bf16 immediately before the MXU matmul.
    kind = _device_kind()
    return jnp.bfloat16 if ("v6" in kind or "v7" in kind) else jnp.float32


def _is_single_tensorcore():
    # v7x (and v4/v5p megacore) expose >1 TensorCore per chip; v5e/v6e have one.
    kind = _device_kind()
    return not any(tag in kind for tag in ("v7", "v5p", "v4"))


def _pick_batch_block(batch, single_tc):
    # Single-TC chips: grid=(B,) is a serial loop, so collapse the tiny batch into one
    # grid step. Multi-TC chips: keep grid=(B,) marked "parallel" to fill both cores.
    if not single_tc:
        return 1
    bb = min(batch, 8)
    while batch % bb:
        bb -= 1
    return bb


def _const_index_map(ndim, i):
    return (0,) * ndim


# ----------------------------------------------------------------------------
# Fused kernel: all tasks, one grid step per batch block.
#   Attention task t (per source s, statically unrolled):
#     Q   = relu(Wq_s X_t + bq_s)           (Ci, N)   [1/sqrt(Ci) pre-folded]
#     KV1 = relu(Wkv_s X_s + bkv_s)         (2Ci+1, N)   last row == 1
#     S   = Q^T K  (channel contraction, no transpose materialized)   (N, N)
#     P   = exp(S - max_k S)                (N, N)   bf16 on v6e/v7x
#     C1  = [V;1] P^T                       (Ci+1, N)  row Ci = softmax denominators
#     ctx = C1[:Ci] * reciprocal(C1[Ci])    (Ci, N)
#     proj += Wp_s ctx                      (Cin, N)   (== out_proj(concat_s ctx))
#   out_t = relu(Wb0 X_t + Wb1 proj + bb)   (== bottleneck(concat([X_t, proj])))
#   Plain task: out_t = relu(Wb X_t + bb)
# ----------------------------------------------------------------------------
def _make_fused_kernel(task_plan, *, ci, batch_block, exp_dtype):
    bf16 = jnp.bfloat16
    f32 = jnp.float32

    def kernel(feats_ref, *refs):
        w = refs[:-1]
        o_ref = refs[-1]
        for bi in range(batch_block):            # static unroll over the batch block
            x_all = feats_ref[bi].astype(bf16)   # (T, Cin, N) — all task feats, cast once
            outs = []
            for plan in task_plan:
                x_t = x_all[plan["t"]]           # (Cin, N) bf16
                if plan["kind"] == "attn":
                    wq, bq, wkv, bkv, wp, bp, wb, bbias = (w[j] for j in plan["refs"])
                    proj = bp[...]               # (Cin, 1) f32, broadcasts over N
                    for si, s_idx in enumerate(plan["sources"]):   # static unroll
                        x_s = x_all[s_idx]       # (Cin, N) bf16
                        # 1x1 conv + folded BN + ReLU (scale 1/sqrt(Ci) pre-folded).
                        q = jnp.maximum(
                            jnp.dot(wq[si], x_t, preferred_element_type=f32) + bq[si], 0.0)
                        # [K; V; ones]: extra zero-weight/bias-1 row -> ReLU gives ones.
                        kv = jnp.maximum(
                            jnp.dot(wkv[si], x_s, preferred_element_type=f32) + bkv[si], 0.0)
                        k = kv[:ci, :].astype(bf16)          # (Ci, N)
                        v1 = kv[ci:, :].astype(bf16)         # (Ci+1, N), last row == 1
                        # scores: contract the channel dim directly (no q.T tile).
                        s = lax.dot_general(q.astype(bf16), k,
                                            dimension_numbers=(((0,), (0,)), ((), ())),
                                            preferred_element_type=f32)    # (N, N)
                        s = s - jnp.max(s, axis=-1, keepdims=True)
                        p = jnp.exp(s.astype(exp_dtype)).astype(bf16)      # bf16 exp on v6e/v7x
                        # ctx + softmax row-sums from ONE lane-dense NT matmul.
                        ctx1 = lax.dot_general(v1, p,
                                               dimension_numbers=(((1,), (1,)), ((), ())),
                                               preferred_element_type=f32)  # (Ci+1, N)
                        inv_l = pl.reciprocal(ctx1[ci:ci + 1, :], approx=True)   # (1, N)
                        ctx = (ctx1[:ci, :] * inv_l).astype(bf16)                # (Ci, N)
                        # out_proj over the source-concat == sum of per-source matmuls.
                        proj = proj + jnp.dot(wp[si], ctx, preferred_element_type=f32)
                    # bottleneck(concat([x_t, proj])) as a split matmul.
                    bott = (jnp.dot(wb[0], x_t, preferred_element_type=f32)
                            + jnp.dot(wb[1], proj.astype(bf16), preferred_element_type=f32)
                            + bbias[...])
                    outs.append(jnp.maximum(bott, 0.0))
                else:  # bottleneck-only task (no sources)
                    wb, bbias = (w[j] for j in plan["refs"])
                    y = jnp.dot(wb[...], x_t, preferred_element_type=f32) + bbias[...]
                    outs.append(jnp.maximum(y, 0.0))
            # Dropout2d(drop_rate) is identity in eval mode.
            # One sublane-dense (T*Cin, N) store per batch element.
            o_ref[bi] = jnp.concatenate(outs, axis=0).astype(o_ref.dtype)

    return kernel


# ----------------------------------------------------------------------------
# Host-side, one-time weight preparation.
# ----------------------------------------------------------------------------
def _fold_convbn(p, eps=1e-5):
    """Eval-mode BatchNorm folding; channels-first, bias as a (Cout, 1) column."""
    weight, bias, gamma, beta, mean, var = p
    scale = gamma / jnp.sqrt(var + eps)
    w = weight * scale[:, None]                          # (Cout, Cin)
    b = (bias - mean) * scale + beta                     # (Cout,)
    return w.astype(jnp.float32), b[:, None].astype(jnp.float32)


def _prepare_weights(params, tasks, genotype, in_channels, inter_channels):
    """Fold BN, fold 1/sqrt(Ci) into the query conv, append the ones row to the KV
    conv, stack per-source weights, split out_proj/bottleneck, cast matmul weights to
    bf16 (explicit precision choice). Runs once, outside the forward path."""
    bf16 = jnp.bfloat16
    inv_sqrt = 1.0 / math.sqrt(inter_channels)
    Cin, Ci = in_channels, inter_channels
    plan, weights = [], []
    for ti, t in enumerate(tasks):
        sources = [s for s in tasks if genotype[t][s] != 0]
        if sources:
            for s in sources:
                if genotype[t][s] != 1:
                    # TODO(synk): Local/Label context attention blocks (genotype 2/3/4) not implemented.
                    raise NotImplementedError(
                        "only GlobalContextAttentionBlock (genotype 1) supported")
            blks = params["cp_blocks"][t]
            q_w, q_b, kv_w, kv_b = [], [], [], []
            for s in sources:
                wq_s, bq_s = _fold_convbn(blks[s]["query"])
                wk_s, bk_s = _fold_convbn(blks[s]["key"])
                wv_s, bv_s = _fold_convbn(blks[s]["value"])
                # Fold the 1/sqrt(Ci) attention scale into the query conv (ReLU
                # commutes with a positive scale).
                q_w.append(wq_s * inv_sqrt)
                q_b.append(bq_s * inv_sqrt)
                # Ones-producing extra row: zero weights, bias 1 -> ReLU(1) = 1.
                kv_w.append(jnp.concatenate(
                    [wk_s, wv_s, jnp.zeros((1, Cin), jnp.float32)], axis=0))
                kv_b.append(jnp.concatenate(
                    [bk_s, bv_s, jnp.ones((1, 1), jnp.float32)], axis=0))
            S = len(sources)
            wq = jnp.stack(q_w).astype(bf16)            # (S, Ci, Cin)
            bq = jnp.stack(q_b)                         # (S, Ci, 1)  f32
            wkv = jnp.stack(kv_w).astype(bf16)          # (S, 2Ci+1, Cin)
            bkv = jnp.stack(kv_b)                       # (S, 2Ci+1, 1)  f32
            wp_full, bp = _fold_convbn(params["out_proj"][t])     # (Cin, S*Ci), (Cin, 1)
            wp = wp_full.reshape(Cin, S, Ci).transpose(1, 0, 2).astype(bf16)  # (S, Cin, Ci)
            wb_full, bb = _fold_convbn(params["bottleneck"][t])   # (Cin, 2Cin), (Cin, 1)
            wb = jnp.stack([wb_full[:, :Cin], wb_full[:, Cin:]]).astype(bf16)  # (2, Cin, Cin)
            i0 = len(weights)
            weights += [wq, bq, wkv, bkv, wp, bp, wb, bb]
            plan.append({"kind": "attn", "t": ti,
                         "sources": tuple(tasks.index(s) for s in sources),
                         "refs": tuple(range(i0, i0 + 8))})
        else:
            wb_f, bb = _fold_convbn(params["bottleneck"][t])      # (Cin, Cin), (Cin, 1)
            i0 = len(weights)
            weights += [wb_f.astype(bf16), bb]
            plan.append({"kind": "plain", "t": ti, "refs": (i0, i0 + 1)})
    return tuple(plan), tuple(weights)


# ----------------------------------------------------------------------------
# Glue: spatial_normalize_pred (aux_prob is not consumed by genotype-1 blocks;
# computed here for forward-pass parity only).
# ----------------------------------------------------------------------------
def spatial_normalize_pred(aux_pred, image):
    # TODO(synk): bilinear resize to image resolution and ignore-index/padding masking
    # from utils_heads are omitted (aux_prob is unused by GlobalContext blocks).
    del image
    prob = {}
    for task, pred in aux_pred.items():
        p = jax.nn.softmax(pred.astype(jnp.float32), axis=1)
        p = p / (jnp.sum(p, axis=(2, 3), keepdims=True) + 1e-12)
        prob[task] = p
    return prob


# ----------------------------------------------------------------------------
# Module wrapper
# ----------------------------------------------------------------------------
class ATRCPallas:
    """Eval-mode ATRCModule forward: all tasks fused into a single pallas_call."""

    def __init__(self, params, tasks, genotype, in_channels, inter_channels):
        self.tasks = tuple(tasks)
        self.genotype = genotype
        self.in_channels = in_channels
        self.inter_channels = inter_channels
        self.exp_dtype = _pick_exp_dtype()
        self.single_tc = _is_single_tensorcore()
        # One-time host-side weight prep (hoisted out of the per-forward path).
        self.task_plan, self.weights = _prepare_weights(
            params, self.tasks, genotype, in_channels, inter_channels)
        self._forward = jax.jit(self._forward_impl)

    def _forward_impl(self, feats):
        B, T, Cin, N = feats.shape
        batch_block = _pick_batch_block(B, self.single_tc)
        kernel = _make_fused_kernel(self.task_plan, ci=self.inter_channels,
                                    batch_block=batch_block, exp_dtype=self.exp_dtype)
        in_specs = [pl.BlockSpec((batch_block, T, Cin, N), lambda i: (i, 0, 0, 0))]
        for arr in self.weights:  # weights: whole array, constant block (fetched once)
            in_specs.append(pl.BlockSpec(arr.shape,
                                         functools.partial(_const_index_map, arr.ndim)))
        out_spec = pl.BlockSpec((batch_block, T * Cin, N), lambda i: (i, 0, 0))
        # TODO(synk): the dense (N,N) score tile is fine at N=256; for large feature
        # maps switch to a flash-style KV-tiled online softmax sized for v7x's 64 MiB
        # VMEM (bf16 score tile, KV tiles <= 1024 columns), not v6e's 128 MiB.
        return pl.pallas_call(
            kernel,
            out_shape=jax.ShapeDtypeStruct((B, T * Cin, N), jnp.float32),
            grid_spec=pltpu.PrefetchScalarGridSpec(
                num_scalar_prefetch=0,
                grid=(B // batch_block,),
                in_specs=in_specs,
                out_specs=out_spec,
            ),
            compiler_params=pltpu.CompilerParams(dimension_semantics=("parallel",)),
        )(feats, *self.weights)

    def __call__(self, task_specific_feats, aux_pred, image):
        # aux_prob is never consumed by genotype-1 blocks; computed for parity only.
        aux_prob = spatial_normalize_pred(aux_pred, image)
        del aux_prob
        B, Cin, H, W = task_specific_feats[self.tasks[0]].shape
        N = H * W
        # NCHW -> channels-first (B, T, Cin, N): pure reshape/stack, no transpose.
        feats = jnp.stack(
            [task_specific_feats[t].reshape(B, Cin, N).astype(jnp.float32)
             for t in self.tasks], axis=1)
        out = self._forward(feats)                    # (B, T*Cin, N)
        res = {}
        for ti, t in enumerate(self.tasks):
            res[t] = out[:, ti * Cin:(ti + 1) * Cin, :].reshape(B, Cin, H, W)
        return res


# ----------------------------------------------------------------------------
# Parameter construction (deterministic, synthetic)
# ----------------------------------------------------------------------------
def _make_convbn(key, cin, cout, *, zero_bn=False):
    kw, kb = jax.random.split(key)
    weight = 0.1 * jax.random.normal(kw, (cout, cin), jnp.float32)
    bias = 0.1 * jax.random.normal(kb, (cout,), jnp.float32)
    gamma = jnp.zeros((cout,), jnp.float32) if zero_bn else jnp.ones((cout,), jnp.float32)
    beta = jnp.zeros((cout,), jnp.float32)
    mean = jnp.zeros((cout,), jnp.float32)
    var = jnp.ones((cout,), jnp.float32)
    return (weight, bias, gamma, beta, mean, var)


def init_atrc_params(key, tasks, genotype, in_channels, inter_channels):
    params = {"cp_blocks": {}, "out_proj": {}, "bottleneck": {}}
    for t in tasks:
        params["cp_blocks"][t] = {}
        for s in tasks:
            g = genotype[t][s]
            if g == 0:
                continue
            if g != 1:
                # TODO(synk): Local/Label context attention blocks (genotype 2/3/4) not implemented.
                raise NotImplementedError("only GlobalContextAttentionBlock (genotype 1) supported")
            key, kq, kk, kv = jax.random.split(key, 4)
            params["cp_blocks"][t][s] = {
                "query": _make_convbn(kq, in_channels, inter_channels),
                "key": _make_convbn(kk, in_channels, inter_channels),
                "value": _make_convbn(kv, in_channels, inter_channels),
            }
        nr_sources = len(params["cp_blocks"][t])
        if nr_sources > 0:
            key, kp, kb = jax.random.split(key, 3)
            # zero_init=True: out_proj BN gamma/bias = 0 (matches the PyTorch __init__).
            params["out_proj"][t] = _make_convbn(kp, inter_channels * nr_sources, in_channels,
                                                 zero_bn=True)
            params["bottleneck"][t] = _make_convbn(kb, in_channels * 2, in_channels)
        else:
            key, kb = jax.random.split(key)
            params["bottleneck"][t] = _make_convbn(kb, in_channels, in_channels)
    return params


# ----------------------------------------------------------------------------
if __name__ == "__main__":
    tasks = ("semseg", "depth")
    genotype = {
        "semseg": {"semseg": 1, "depth": 1},
        "depth": {"semseg": 0, "depth": 0},
    }
    in_channels, inter_channels = 4, 8
    B, H, W = 2, 16, 16

    key = jax.random.PRNGKey(0)
    kparam, kf1, kf2, kp1, kp2, kimg = jax.random.split(key, 6)

    params = init_atrc_params(kparam, tasks, genotype, in_channels, inter_channels)
    module = ATRCPallas(params, tasks, genotype, in_channels, inter_channels)

    task_specific_feats = {
        "semseg": jax.random.normal(kf1, (B, in_channels, H, W), jnp.float32),
        "depth": jax.random.normal(kf2, (B, in_channels, H, W), jnp.float32),
    }
    aux_pred = {
        "semseg": jax.random.normal(kp1, (B, 5, H, W), jnp.float32),  # 5 semantic classes
        "depth": jax.random.normal(kp2, (B, 1, H, W), jnp.float32),
    }
    image = jax.random.normal(kimg, (B, 3, 64, 64), jnp.float32)

    out = module(task_specific_feats, aux_pred, image)
    for t in tasks:
        jax.block_until_ready(out[t])
        assert out[t].shape == (B, in_channels, H, W), out[t].shape
        assert jnp.all(jnp.isfinite(out[t]))
        assert jnp.all(out[t] >= 0.0)  # bottleneck ends in ReLU
    print("KERNEL_OK")
</pallas_src>

<mosaic_0001>
module attributes {stable_mosaic.version = 11 : i64} {
  func.func @kernel(%arg0: i32, %arg1: memref<2x2x4x256xf32, #tpu.memory_space<vmem>>, %arg2: memref<2x8x4xbf16, #tpu.memory_space<vmem>>, %arg3: memref<2x8x1xf32, #tpu.memory_space<vmem>>, %arg4: memref<2x17x4xbf16, #tpu.memory_space<vmem>>, %arg5: memref<2x17x1xf32, #tpu.memory_space<vmem>>, %arg6: memref<2x4x8xbf16, #tpu.memory_space<vmem>>, %arg7: memref<4x1xf32, #tpu.memory_space<vmem>>, %arg8: memref<2x4x4xbf16, #tpu.memory_space<vmem>>, %arg9: memref<4x1xf32, #tpu.memory_space<vmem>>, %arg10: memref<4x4xbf16, #tpu.memory_space<vmem>>, %arg11: memref<4x1xf32, #tpu.memory_space<vmem>>, %arg12: memref<2x8x256xf32, #tpu.memory_space<vmem>>) attributes {dimension_semantics = [#tpu.dimension_semantics<parallel>], iteration_bounds = array<i64: 1>, scalar_prefetch = 0 : i64, scratch_operands = 0 : i64, tpu.core_type = #tpu.core_type<tc>, window_params = [{transform_indices = @transform_0, window_bounds = array<i64: 2, 2, 4, 256>}, {pipeline_mode = #tpu.pipeline_mode<synchronous>, transform_indices = @transform_1, window_bounds = array<i64: 2, 8, 4>}, {pipeline_mode = #tpu.pipeline_mode<synchronous>, transform_indices = @transform_2, window_bounds = array<i64: 2, 8, 1>}, {pipeline_mode = #tpu.pipeline_mode<synchronous>, transform_indices = @transform_3, window_bounds = array<i64: 2, 17, 4>}, {pipeline_mode = #tpu.pipeline_mode<synchronous>, transform_indices = @transform_4, window_bounds = array<i64: 2, 17, 1>}, {pipeline_mode = #tpu.pipeline_mode<synchronous>, transform_indices = @transform_5, window_bounds = array<i64: 2, 4, 8>}, {pipeline_mode = #tpu.pipeline_mode<synchronous>, transform_indices = @transform_6, window_bounds = array<i64: 4, 1>}, {pipeline_mode = #tpu.pipeline_mode<synchronous>, transform_indices = @transform_7, window_bounds = array<i64: 2, 4, 4>}, {pipeline_mode = #tpu.pipeline_mode<synchronous>, transform_indices = @transform_8, window_bounds = array<i64: 4, 1>}, {pipeline_mode = #tpu.pipeline_mode<synchronous>, transform_indices = @transform_9, window_bounds = array<i64: 4, 4>}, {pipeline_mode = #tpu.pipeline_mode<synchronous>, transform_indices = @transform_10, window_bounds = array<i64: 4, 1>}, {transform_indices = @transform_11, window_bounds = array<i64: 2, 8, 256>}]} {
    %c0 = arith.constant 0 : index
    %c0_0 = arith.constant 0 : index
    %c0_1 = arith.constant 0 : index
    %c0_2 = arith.constant 0 : index
    %0 = vector.load %arg1[%c0, %c0_0, %c0_1, %c0_2] : memref<2x2x4x256xf32, #tpu.memory_space<vmem>>, vector<1x2x4x256xf32>
    %1 = vector.shape_cast %0 : vector<1x2x4x256xf32> to vector<2x4x256xf32>
    %2 = arith.truncf %1 : vector<2x4x256xf32> to vector<2x4x256xbf16>
    %3 = vector.extract_strided_slice %2 {offsets = [0, 0, 0], sizes = [1, 4, 256], strides = [1, 1, 1]} : vector<2x4x256xbf16> to vector<1x4x256xbf16>
    %4 = vector.shape_cast %3 : vector<1x4x256xbf16> to vector<4x256xbf16>
    %c0_3 = arith.constant 0 : index
    %c0_4 = arith.constant 0 : index
    %5 = vector.load %arg7[%c0_3, %c0_4] : memref<4x1xf32, #tpu.memory_space<vmem>>, vector<4x1xf32>
    %6 = vector.extract_strided_slice %2 {offsets = [0, 0, 0], sizes = [1, 4, 256], strides = [1, 1, 1]} : vector<2x4x256xbf16> to vector<1x4x256xbf16>
    %7 = vector.shape_cast %6 : vector<1x4x256xbf16> to vector<4x256xbf16>
    %c0_5 = arith.constant 0 : index
    %c0_6 = arith.constant 0 : index
    %c0_7 = arith.constant 0 : index
    %8 = vector.load %arg2[%c0_5, %c0_6, %c0_7] : memref<2x8x4xbf16, #tpu.memory_space<vmem>>, vector<1x8x4xbf16>
    %9 = vector.shape_cast %8 : vector<1x8x4xbf16> to vector<8x4xbf16>
    %cst = arith.constant dense<0.000000e+00> : vector<8x256xf32>
    %10 = tpu.matmul %9, %4, %cst {dimension_numbers = #tpu.dot_dimension_numbers<[1], [0], [0], [1], [0, 0, 1, 1], [], []>} : vector<8x4xbf16>, vector<4x256xbf16>, vector<8x256xf32> -> vector<8x256xf32>
    %c0_8 = arith.constant 0 : index
    %c0_9 = arith.constant 0 : index
    %c0_10 = arith.constant 0 : index
    %11 = vector.load %arg3[%c0_8, %c0_9, %c0_10] : memref<2x8x1xf32, #tpu.memory_space<vmem>>, vector<1x8x1xf32>
    %12 = vector.shape_cast %11 : vector<1x8x1xf32> to vector<8x1xf32>
    %13 = vector.broadcast %12 : vector<8x1xf32> to vector<8x256xf32>
    %14 = arith.addf %10, %13 : vector<8x256xf32>
    %cst_11 = arith.constant 0.000000e+00 : f32
    %15 = vector.broadcast %cst_11 : f32 to vector<8x256xf32>
    %16 = arith.maximumf %14, %15 : vector<8x256xf32>
    %c0_12 = arith.constant 0 : index
    %c0_13 = arith.constant 0 : index
    %c0_14 = arith.constant 0 : index
    %17 = vector.load %arg4[%c0_12, %c0_13, %c0_14] : memref<2x17x4xbf16, #tpu.memory_space<vmem>>, vector<1x17x4xbf16>
    %18 = vector.shape_cast %17 : vector<1x17x4xbf16> to vector<17x4xbf16>
    %cst_15 = arith.constant dense<0.000000e+00> : vector<17x256xf32>
    %19 = tpu.matmul %18, %7, %cst_15 {dimension_numbers = #tpu.dot_dimension_numbers<[1], [0], [0], [1], [0, 0, 1, 1], [], []>} : vector<17x4xbf16>, vector<4x256xbf16>, vector<17x256xf32> -> vector<17x256xf32>
    %c0_16 = arith.constant 0 : index
    %c0_17 = arith.constant 0 : index
    %c0_18 = arith.constant 0 : index
    %20 = vector.load %arg5[%c0_16, %c0_17, %c0_18] : memref<2x17x1xf32, #tpu.memory_space<vmem>>, vector<1x17x1xf32>
    %21 = vector.shape_cast %20 : vector<1x17x1xf32> to vector<17x1xf32>
    %22 = vector.broadcast %21 : vector<17x1xf32> to vector<17x256xf32>
    %23 = arith.addf %19, %22 : vector<17x256xf32>
    %cst_19 = arith.constant 0.000000e+00 : f32
    %24 = vector.broadcast %cst_19 : f32 to vector<17x256xf32>
    %25 = arith.maximumf %23, %24 : vector<17x256xf32>
    %26 = vector.extract_strided_slice %25 {offsets = [0, 0], sizes = [8, 256], strides = [1, 1]} : vector<17x256xf32> to vector<8x256xf32>
    %27 = arith.truncf %26 : vector<8x256xf32> to vector<8x256xbf16>
    %28 = vector.extract_strided_slice %25 {offsets = [8, 0], sizes = [9, 256], strides = [1, 1]} : vector<17x256xf32> to vector<9x256xf32>
    %29 = arith.truncf %28 : vector<9x256xf32> to vector<9x256xbf16>
    %30 = arith.truncf %16 : vector<8x256xf32> to vector<8x256xbf16>
    %cst_20 = arith.constant dense<0.000000e+00> : vector<256x256xf32>
    %31 = tpu.matmul %30, %27, %cst_20 {dimension_numbers = #tpu.dot_dimension_numbers<[0], [0], [1], [1], [0, 1, 1, 1], [], []>} : vector<8x256xbf16>, vector<8x256xbf16>, vector<256x256xf32> -> vector<256x256xf32>
    %cst_21 = arith.constant dense<0xFF800000> : vector<256xf32>
    %32 = vector.multi_reduction <maximumf>, %31, %cst_21 [1] : vector<256x256xf32> to vector<256xf32>
    %33 = vector.shape_cast %32 : vector<256xf32> to vector<256x1xf32>
    %34 = vector.broadcast %33 : vector<256x1xf32> to vector<256x256xf32>
    %35 = arith.subf %31, %34 : vector<256x256xf32>
    %36 = math.exp %35 : vector<256x256xf32>
    %37 = arith.truncf %36 : vector<256x256xf32> to vector<256x256xbf16>
    %cst_22 = arith.constant dense<0.000000e+00> : vector<9x256xf32>
    %38 = tpu.matmul %29, %37, %cst_22 {dimension_numbers = #tpu.dot_dimension_numbers<[1], [1], [0], [0], [0, 0, 1, 0], [], []>} : vector<9x256xbf16>, vector<256x256xbf16>, vector<9x256xf32> -> vector<9x256xf32>
    %39 = vector.extract_strided_slice %38 {offsets = [8, 0], sizes = [1, 256], strides = [1, 1]} : vector<9x256xf32> to vector<1x256xf32>
    %40 = tpu.reciprocal %39 {approx = true} : vector<1x256xf32> -> vector<1x256xf32>
    %41 = vector.extract_strided_slice %38 {offsets = [0, 0], sizes = [8, 256], strides = [1, 1]} : vector<9x256xf32> to vector<8x256xf32>
    %42 = vector.broadcast %40 : vector<1x256xf32> to vector<8x256xf32>
    %43 = arith.mulf %41, %42 : vector<8x256xf32>
    %44 = arith.truncf %43 : vector<8x256xf32> to vector<8x256xbf16>
    %c0_23 = arith.constant 0 : index
    %c0_24 = arith.constant 0 : index
    %c0_25 = arith.constant 0 : index
    %45 = vector.load %arg6[%c0_23, %c0_24, %c0_25] : memref<2x4x8xbf16, #tpu.memory_space<vmem>>, vector<1x4x8xbf16>
    %46 = vector.shape_cast %45 : vector<1x4x8xbf16> to vector<4x8xbf16>
    %cst_26 = arith.constant dense<0.000000e+00> : vector<4x256xf32>
    %47 = tpu.matmul %46, %44, %cst_26 {dimension_numbers = #tpu.dot_dimension_numbers<[1], [0], [0], [1], [0, 0, 1, 1], [], []>} : vector<4x8xbf16>, vector<8x256xbf16>, vector<4x256xf32> -> vector<4x256xf32>
    %48 = vector.broadcast %5 : vector<4x1xf32> to vector<4x256xf32>
    %49 = arith.addf %48, %47 : vector<4x256xf32>
    %50 = vector.extract_strided_slice %2 {offsets = [1, 0, 0], sizes = [1, 4, 256], strides = [1, 1, 1]} : vector<2x4x256xbf16> to vector<1x4x256xbf16>
    %51 = vector.shape_cast %50 : vector<1x4x256xbf16> to vector<4x256xbf16>
    %c1 = arith.constant 1 : index
    %c0_27 = arith.constant 0 : index
    %c0_28 = arith.constant 0 : index
    %52 = vector.load %arg2[%c1, %c0_27, %c0_28] : memref<2x8x4xbf16, #tpu.memory_space<vmem>>, vector<1x8x4xbf16>
    %53 = vector.shape_cast %52 : vector<1x8x4xbf16> to vector<8x4xbf16>
    %cst_29 = arith.constant dense<0.000000e+00> : vector<8x256xf32>
    %54 = tpu.matmul %53, %4, %cst_29 {dimension_numbers = #tpu.dot_dimension_numbers<[1], [0], [0], [1], [0, 0, 1, 1], [], []>} : vector<8x4xbf16>, vector<4x256xbf16>, vector<8x256xf32> -> vector<8x256xf32>
    %c1_30 = arith.constant 1 : index
    %c0_31 = arith.constant 0 : index
    %c0_32 = arith.constant 0 : index
    %55 = vector.load %arg3[%c1_30, %c0_31, %c0_32] : memref<2x8x1xf32, #tpu.memory_space<vmem>>, vector<1x8x1xf32>
    %56 = vector.shape_cast %55 : vector<1x8x1xf32> to vector<8x1xf32>
    %57 = vector.broadcast %56 : vector<8x1xf32> to vector<8x256xf32>
    %58 = arith.addf %54, %57 : vector<8x256xf32>
    %cst_33 = arith.constant 0.000000e+00 : f32
    %59 = vector.broadcast %cst_33 : f32 to vector<8x256xf32>
    %60 = arith.maximumf %58, %59 : vector<8x256xf32>
    %c1_34 = arith.constant 1 : index
    %c0_35 = arith.constant 0 : index
    %c0_36 = arith.constant 0 : index
    %61 = vector.load %arg4[%c1_34, %c0_35, %c0_36] : memref<2x17x4xbf16, #tpu.memory_space<vmem>>, vector<1x17x4xbf16>
    %62 = vector.shape_cast %61 : vector<1x17x4xbf16> to vector<17x4xbf16>
    %cst_37 = arith.constant dense<0.000000e+00> : vector<17x256xf32>
    %63 = tpu.matmul %62, %51, %cst_37 {dimension_numbers = #tpu.dot_dimension_numbers<[1], [0], [0], [1], [0, 0, 1, 1], [], []>} : vector<17x4xbf16>, vector<4x256xbf16>, vector<17x256xf32> -> vector<17x256xf32>
    %c1_38 = arith.constant 1 : index
    %c0_39 = arith.constant 0 : index
    %c0_40 = arith.constant 0 : index
    %64 = vector.load %arg5[%c1_38, %c0_39, %c0_40] : memref<2x17x1xf32, #tpu.memory_space<vmem>>, vector<1x17x1xf32>
    %65 = vector.shape_cast %64 : vector<1x17x1xf32> to vector<17x1xf32>
    %66 = vector.broadcast %65 : vector<17x1xf32> to vector<17x256xf32>
    %67 = arith.addf %63, %66 : vector<17x256xf32>
    %cst_41 = arith.constant 0.000000e+00 : f32
    %68 = vector.broadcast %cst_41 : f32 to vector<17x256xf32>
    %69 = arith.maximumf %67, %68 : vector<17x256xf32>
    %70 = vector.extract_strided_slice %69 {offsets = [0, 0], sizes = [8, 256], strides = [1, 1]} : vector<17x256xf32> to vector<8x256xf32>
    %71 = arith.truncf %70 : vector<8x256xf32> to vector<8x256xbf16>
    %72 = vector.extract_strided_slice %69 {offsets = [8, 0], sizes = [9, 256], strides = [1, 1]} : vector<17x256xf32> to vector<9x256xf32>
    %73 = arith.truncf %72 : vector<9x256xf32> to vector<9x256xbf16>
    %74 = arith.truncf %60 : vector<8x256xf32> to vector<8x256xbf16>
    %cst_42 = arith.constant dense<0.000000e+00> : vector<256x256xf32>
    %75 = tpu.matmul %74, %71, %cst_42 {dimension_numbers = #tpu.dot_dimension_numbers<[0], [0], [1], [1], [0, 1, 1, 1], [], []>} : vector<8x256xbf16>, vector<8x256xbf16>, vector<256x256xf32> -> vector<256x256xf32>
    %cst_43 = arith.constant dense<0xFF800000> : vector<256xf32>
    %76 = vector.multi_reduction <maximumf>, %75, %cst_43 [1] : vector<256x256xf32> to vector<256xf32>
    %77 = vector.shape_cast %76 : vector<256xf32> to vector<256x1xf32>
    %78 = vector.broadcast %77 : vector<256x1xf32> to vector<256x256xf32>
    %79 = arith.subf %75, %78 : vector<256x256xf32>
    %80 = math.exp %79 : vector<256x256xf32>
    %81 = arith.truncf %80 : vector<256x256xf32> to vector<256x256xbf16>
    %cst_44 = arith.constant dense<0.000000e+00> : vector<9x256xf32>
    %82 = tpu.matmul %73, %81, %cst_44 {dimension_numbers = #tpu.dot_dimension_numbers<[1], [1], [0], [0], [0, 0, 1, 0], [], []>} : vector<9x256xbf16>, vector<256x256xbf16>, vector<9x256xf32> -> vector<9x256xf32>
    %83 = vector.extract_strided_slice %82 {offsets = [8, 0], sizes = [1, 256], strides = [1, 1]} : vector<9x256xf32> to vector<1x256xf32>
    %84 = tpu.reciprocal %83 {approx = true} : vector<1x256xf32> -> vector<1x256xf32>
    %85 = vector.extract_strided_slice %82 {offsets = [0, 0], sizes = [8, 256], strides = [1, 1]} : vector<9x256xf32> to vector<8x256xf32>
    %86 = vector.broadcast %84 : vector<1x256xf32> to vector<8x256xf32>
    %87 = arith.mulf %85, %86 : vector<8x256xf32>
    %88 = arith.truncf %87 : vector<8x256xf32> to vector<8x256xbf16>
    %c1_45 = arith.constant 1 : index
    %c0_46 = arith.constant 0 : index
    %c0_47 = arith.constant 0 : index
    %89 = vector.load %arg6[%c1_45, %c0_46, %c0_47] : memref<2x4x8xbf16, #tpu.memory_space<vmem>>, vector<1x4x8xbf16>
    %90 = vector.shape_cast %89 : vector<1x4x8xbf16> to vector<4x8xbf16>
    %cst_48 = arith.constant dense<0.000000e+00> : vector<4x256xf32>
    %91 = tpu.matmul %90, %88, %cst_48 {dimension_numbers = #tpu.dot_dimension_numbers<[1], [0], [0], [1], [0, 0, 1, 1], [], []>} : vector<4x8xbf16>, vector<8x256xbf16>, vector<4x256xf32> -> vector<4x256xf32>
    %92 = arith.addf %49, %91 : vector<4x256xf32>
    %c0_49 = arith.constant 0 : index
    %c0_50 = arith.constant 0 : index
    %c0_51 = arith.constant 0 : index
    %93 = vector.load %arg8[%c0_49, %c0_50, %c0_51] : memref<2x4x4xbf16, #tpu.memory_space<vmem>>, vector<1x4x4xbf16>
    %94 = vector.shape_cast %93 : vector<1x4x4xbf16> to vector<4x4xbf16>
    %cst_52 = arith.constant dense<0.000000e+00> : vector<4x256xf32>
    %95 = tpu.matmul %94, %4, %cst_52 {dimension_numbers = #tpu.dot_dimension_numbers<[1], [0], [0], [1], [0, 0, 1, 1], [], []>} : vector<4x4xbf16>, vector<4x256xbf16>, vector<4x256xf32> -> vector<4x256xf32>
    %c1_53 = arith.constant 1 : index
    %c0_54 = arith.constant 0 : index
    %c0_55 = arith.constant 0 : index
    %96 = vector.load %arg8[%c1_53, %c0_54, %c0_55] : memref<2x4x4xbf16, #tpu.memory_space<vmem>>, vector<1x4x4xbf16>
    %97 = vector.shape_cast %96 : vector<1x4x4xbf16> to vector<4x4xbf16>
    %98 = arith.truncf %92 : vector<4x256xf32> to vector<4x256xbf16>
    %cst_56 = arith.constant dense<0.000000e+00> : vector<4x256xf32>
    %99 = tpu.matmul %97, %98, %cst_56 {dimension_numbers = #tpu.dot_dimension_numbers<[1], [0], [0], [1], [0, 0, 1, 1], [], []>} : vector<4x4xbf16>, vector<4x256xbf16>, vector<4x256xf32> -> vector<4x256xf32>
    %100 = arith.addf %95, %99 : vector<4x256xf32>
    %c0_57 = arith.constant 0 : index
    %c0_58 = arith.constant 0 : index
    %101 = vector.load %arg9[%c0_57, %c0_58] : memref<4x1xf32, #tpu.memory_space<vmem>>, vector<4x1xf32>
    %102 = vector.broadcast %101 : vector<4x1xf32> to vector<4x256xf32>
    %103 = arith.addf %100, %102 : vector<4x256xf32>
    %cst_59 = arith.constant 0.000000e+00 : f32
    %104 = vector.broadcast %cst_59 : f32 to vector<4x256xf32>
    %105 = arith.maximumf %103, %104 : vector<4x256xf32>
    %106 = vector.extract_strided_slice %2 {offsets = [1, 0, 0], sizes = [1, 4, 256], strides = [1, 1, 1]} : vector<2x4x256xbf16> to vector<1x4x256xbf16>
    %107 = vector.shape_cast %106 : vector<1x4x256xbf16> to vector<4x256xbf16>
    %c0_60 = arith.constant 0 : index
    %c0_61 = arith.constant 0 : index
    %108 = vector.load %arg10[%c0_60, %c0_61] : memref<4x4xbf16, #tpu.memory_space<vmem>>, vector<4x4xbf16>
    %cst_62 = arith.constant dense<0.000000e+00> : vector<4x256xf32>
    %109 = tpu.matmul %108, %107, %cst_62 {dimension_numbers = #tpu.dot_dimension_numbers<[1], [0], [0], [1], [0, 0, 1, 1], [], []>} : vector<4x4xbf16>, vector<4x256xbf16>, vector<4x256xf32> -> vector<4x256xf32>
    %c0_63 = arith.constant 0 : index
    %c0_64 = arith.constant 0 : index
    %110 = vector.load %arg11[%c0_63, %c0_64] : memref<4x1xf32, #tpu.memory_space<vmem>>, vector<4x1xf32>
    %111 = vector.broadcast %110 : vector<4x1xf32> to vector<4x256xf32>
    %112 = arith.addf %109, %111 : vector<4x256xf32>
    %cst_65 = arith.constant 0.000000e+00 : f32
    %113 = vector.broadcast %cst_65 : f32 to vector<4x256xf32>
    %114 = arith.maximumf %112, %113 : vector<4x256xf32>
    %115 = tpu.concatenate %105, %114 in 0 : vector<4x256xf32>, vector<4x256xf32> -> vector<8x256xf32>
    %c0_66 = arith.constant 0 : index
    %c0_67 = arith.constant 0 : index
    %c0_68 = arith.constant 0 : index
    %116 = vector.load %arg12[%c0_66, %c0_67, %c0_68] : memref<2x8x256xf32, #tpu.memory_space<vmem>>, vector<1x8x256xf32>
    %117 = vector.shape_cast %116 : vector<1x8x256xf32> to vector<8x256xf32>
    %118 = vector.shape_cast %115 : vector<8x256xf32> to vector<1x8x256xf32>
    tpu.vector_store %arg12[%c0_66, %c0_67, %c0_68], %118 {strides = array<i32>} : memref<2x8x256xf32, #tpu.memory_space<vmem>>, vector<1x8x256xf32>,
    %c1_69 = arith.constant 1 : index
    %c0_70 = arith.constant 0 : index
    %c0_71 = arith.constant 0 : index
    %c0_72 = arith.constant 0 : index
    %119 = vector.load %arg1[%c1_69, %c0_70, %c0_71, %c0_72] : memref<2x2x4x256xf32, #tpu.memory_space<vmem>>, vector<1x2x4x256xf32>
    %120 = vector.shape_cast %119 : vector<1x2x4x256xf32> to vector<2x4x256xf32>
    %121 = arith.truncf %120 : vector<2x4x256xf32> to vector<2x4x256xbf16>
    %122 = vector.extract_strided_slice %121 {offsets = [0, 0, 0], sizes = [1, 4, 256], strides = [1, 1, 1]} : vector<2x4x256xbf16> to vector<1x4x256xbf16>
    %123 = vector.shape_cast %122 : vector<1x4x256xbf16> to vector<4x256xbf16>
    %c0_73 = arith.constant 0 : index
    %c0_74 = arith.constant 0 : index
    %124 = vector.load %arg7[%c0_73, %c0_74] : memref<4x1xf32, #tpu.memory_space<vmem>>, vector<4x1xf32>
    %125 = vector.extract_strided_slice %121 {offsets = [0, 0, 0], sizes = [1, 4, 256], strides = [1, 1, 1]} : vector<2x4x256xbf16> to vector<1x4x256xbf16>
    %126 = vector.shape_cast %125 : vector<1x4x256xbf16> to vector<4x256xbf16>
    %c0_75 = arith.constant 0 : index
    %c0_76 = arith.constant 0 : index
    %c0_77 = arith.constant 0 : index
    %127 = vector.load %arg2[%c0_75, %c0_76, %c0_77] : memref<2x8x4xbf16, #tpu.memory_space<vmem>>, vector<1x8x4xbf16>
    %128 = vector.shape_cast %127 : vector<1x8x4xbf16> to vector<8x4xbf16>
    %cst_78 = arith.constant dense<0.000000e+00> : vector<8x256xf32>
    %129 = tpu.matmul %128, %123, %cst_78 {dimension_numbers = #tpu.dot_dimension_numbers<[1], [0], [0], [1], [0, 0, 1, 1], [], []>} : vector<8x4xbf16>, vector<4x256xbf16>, vector<8x256xf32> -> vector<8x256xf32>
    %c0_79 = arith.constant 0 : index
    %c0_80 = arith.constant 0 : index
    %c0_81 = arith.constant 0 : index
    %130 = vector.load %arg3[%c0_79, %c0_80, %c0_81] : memref<2x8x1xf32, #tpu.memory_space<vmem>>, vector<1x8x1xf32>
    %131 = vector.shape_cast %130 : vector<1x8x1xf32> to vector<8x1xf32>
    %132 = vector.broadcast %131 : vector<8x1xf32> to vector<8x256xf32>
    %133 = arith.addf %129, %132 : vector<8x256xf32>
    %cst_82 = arith.constant 0.000000e+00 : f32
    %134 = vector.broadcast %cst_82 : f32 to vector<8x256xf32>
    %135 = arith.maximumf %133, %134 : vector<8x256xf32>
    %c0_83 = arith.constant 0 : index
    %c0_84 = arith.constant 0 : index
    %c0_85 = arith.constant 0 : index
    %136 = vector.load %arg4[%c0_83, %c0_84, %c0_85] : memref<2x17x4xbf16, #tpu.memory_space<vmem>>, vector<1x17x4xbf16>
    %137 = vector.shape_cast %136 : vector<1x17x4xbf16> to vector<17x4xbf16>
    %cst_86 = arith.constant dense<0.000000e+00> : vector<17x256xf32>
    %138 = tpu.matmul %137, %126, %cst_86 {dimension_numbers = #tpu.dot_dimension_numbers<[1], [0], [0], [1], [0, 0, 1, 1], [], []>} : vector<17x4xbf16>, vector<4x256xbf16>, vector<17x256xf32> -> vector<17x256xf32>
    %c0_87 = arith.constant 0 : index
    %c0_88 = arith.constant 0 : index
    %c0_89 = arith.constant 0 : index
    %139 = vector.load %arg5[%c0_87, %c0_88, %c0_89] : memref<2x17x1xf32, #tpu.memory_space<vmem>>, vector<1x17x1xf32>
    %140 = vector.shape_cast %139 : vector<1x17x1xf32> to vector<17x1xf32>
    %141 = vector.broadcast %140 : vector<17x1xf32> to vector<17x256xf32>
    %142 = arith.addf %138, %141 : vector<17x256xf32>
    %cst_90 = arith.constant 0.000000e+00 : f32
    %143 = vector.broadcast %cst_90 : f32 to vector<17x256xf32>
    %144 = arith.maximumf %142, %143 : vector<17x256xf32>
    %145 = vector.extract_strided_slice %144 {offsets = [0, 0], sizes = [8, 256], strides = [1, 1]} : vector<17x256xf32> to vector<8x256xf32>
    %146 = arith.truncf %145 : vector<8x256xf32> to vector<8x256xbf16>
    %147 = vector.extract_strided_slice %144 {offsets = [8, 0], sizes = [9, 256], strides = [1, 1]} : vector<17x256xf32> to vector<9x256xf32>
    %148 = arith.truncf %147 : vector<9x256xf32> to vector<9x256xbf16>
    %149 = arith.truncf %135 : vector<8x256xf32> to vector<8x256xbf16>
    %cst_91 = arith.constant dense<0.000000e+00> : vector<256x256xf32>
    %150 = tpu.matmul %149, %146, %cst_91 {dimension_numbers = #tpu.dot_dimension_numbers<[0], [0], [1], [1], [0, 1, 1, 1], [], []>} : vector<8x256xbf16>, vector<8x256xbf16>, vector<256x256xf32> -> vector<256x256xf32>
    %cst_92 = arith.constant dense<0xFF800000> : vector<256xf32>
    %151 = vector.multi_reduction <maximumf>, %150, %cst_92 [1] : vector<256x256xf32> to vector<256xf32>
    %152 = vector.shape_cast %151 : vector<256xf32> to vector<256x1xf32>
    %153 = vector.broadcast %152 : vector<256x1xf32> to vector<256x256xf32>
    %154 = arith.subf %150, %153 : vector<256x256xf32>
    %155 = math.exp %154 : vector<256x256xf32>
    %156 = arith.truncf %155 : vector<256x256xf32> to vector<256x256xbf16>
    %cst_93 = arith.constant dense<0.000000e+00> : vector<9x256xf32>
    %157 = tpu.matmul %148, %156, %cst_93 {dimension_numbers = #tpu.dot_dimension_numbers<[1], [1], [0], [0], [0, 0, 1, 0], [], []>} : vector<9x256xbf16>, vector<256x256xbf16>, vector<9x256xf32> -> vector<9x256xf32>
    %158 = vector.extract_strided_slice %157 {offsets = [8, 0], sizes = [1, 256], strides = [1, 1]} : vector<9x256xf32> to vector<1x256xf32>
    %159 = tpu.reciprocal %158 {approx = true} : vector<1x256xf32> -> vector<1x256xf32>
    %160 = vector.extract_strided_slice %157 {offsets = [0, 0], sizes = [8, 256], strides = [1, 1]} : vector<9x256xf32> to vector<8x256xf32>
    %161 = vector.broadcast %159 : vector<1x256xf32> to vector<8x256xf32>
    %162 = arith.mulf %160, %161 : vector<8x256xf32>
    %163 = arith.truncf %162 : vector<8x256xf32> to vector<8x256xbf16>
    %c0_94 = arith.constant 0 : index
    %c0_95 = arith.constant 0 : index
    %c0_96 = arith.constant 0 : index
    %164 = vector.load %arg6[%c0_94, %c0_95, %c0_96] : memref<2x4x8xbf16, #tpu.memory_space<vmem>>, vector<1x4x8xbf16>
    %165 = vector.shape_cast %164 : vector<1x4x8xbf16> to vector<4x8xbf16>
    %cst_97 = arith.constant dense<0.000000e+00> : vector<4x256xf32>
    %166 = tpu.matmul %165, %163, %cst_97 {dimension_numbers = #tpu.dot_dimension_numbers<[1], [0], [0], [1], [0, 0, 1, 1], [], []>} : vector<4x8xbf16>, vector<8x256xbf16>, vector<4x256xf32> -> vector<4x256xf32>
    %167 = vector.broadcast %124 : vector<4x1xf32> to vector<4x256xf32>
    %168 = arith.addf %167, %166 : vector<4x256xf32>
    %169 = vector.extract_strided_slice %121 {offsets = [1, 0, 0], sizes = [1, 4, 256], strides = [1, 1, 1]} : vector<2x4x256xbf16> to vector<1x4x256xbf16>
    %170 = vector.shape_cast %169 : vector<1x4x256xbf16> to vector<4x256xbf16>
    %c1_98 = arith.constant 1 : index
    %c0_99 = arith.constant 0 : index
    %c0_100 = arith.constant 0 : index
    %171 = vector.load %arg2[%c1_98, %c0_99, %c0_100] : memref<2x8x4xbf16, #tpu.memory_space<vmem>>, vector<1x8x4xbf16>
    %172 = vector.shape_cast %171 : vector<1x8x4xbf16> to vector<8x4xbf16>
    %cst_101 = arith.constant dense<0.000000e+00> : vector<8x256xf32>
    %173 = tpu.matmul %172, %123, %cst_101 {dimension_numbers = #tpu.dot_dimension_numbers<[1], [0], [0], [1], [0, 0, 1, 1], [], []>} : vector<8x4xbf16>, vector<4x256xbf16>, vector<8x256xf32> -> vector<8x256xf32>
    %c1_102 = arith.constant 1 : index
    %c0_103 = arith.constant 0 : index
    %c0_104 = arith.constant 0 : index
    %174 = vector.load %arg3[%c1_102, %c0_103, %c0_104] : memref<2x8x1xf32, #tpu.memory_space<vmem>>, vector<1x8x1xf32>
    %175 = vector.shape_cast %174 : vector<1x8x1xf32> to vector<8x1xf32>
    %176 = vector.broadcast %175 : vector<8x1xf32> to vector<8x256xf32>
    %177 = arith.addf %173, %176 : vector<8x256xf32>
    %cst_105 = arith.constant 0.000000e+00 : f32
    %178 = vector.broadcast %cst_105 : f32 to vector<8x256xf32>
    %179 = arith.maximumf %177, %178 : vector<8x256xf32>
    %c1_106 = arith.constant 1 : index
    %c0_107 = arith.constant 0 : index
    %c0_108 = arith.constant 0 : index
    %180 = vector.load %arg4[%c1_106, %c0_107, %c0_108] : memref<2x17x4xbf16, #tpu.memory_space<vmem>>, vector<1x17x4xbf16>
    %181 = vector.shape_cast %180 : vector<1x17x4xbf16> to vector<17x4xbf16>
    %cst_109 = arith.constant dense<0.000000e+00> : vector<17x256xf32>
    %182 = tpu.matmul %181, %170, %cst_109 {dimension_numbers = #tpu.dot_dimension_numbers<[1], [0], [0], [1], [0, 0, 1, 1], [], []>} : vector<17x4xbf16>, vector<4x256xbf16>, vector<17x256xf32> -> vector<17x256xf32>
    %c1_110 = arith.constant 1 : index
    %c0_111 = arith.constant 0 : index
    %c0_112 = arith.constant 0 : index
    %183 = vector.load %arg5[%c1_110, %c0_111, %c0_112] : memref<2x17x1xf32, #tpu.memory_space<vmem>>, vector<1x17x1xf32>
    %184 = vector.shape_cast %183 : vector<1x17x1xf32> to vector<17x1xf32>
    %185 = vector.broadcast %184 : vector<17x1xf32> to vector<17x256xf32>
    %186 = arith.addf %182, %185 : vector<17x256xf32>
    %cst_113 = arith.constant 0.000000e+00 : f32
    %187 = vector.broadcast %cst_113 : f32 to vector<17x256xf32>
    %188 = arith.maximumf %186, %187 : vector<17x256xf32>
    %189 = vector.extract_strided_slice %188 {offsets = [0, 0], sizes = [8, 256], strides = [1, 1]} : vector<17x256xf32> to vector<8x256xf32>
    %190 = arith.truncf %189 : vector<8x256xf32> to vector<8x256xbf16>
    %191 = vector.extract_strided_slice %188 {offsets = [8, 0], sizes = [9, 256], strides = [1, 1]} : vector<17x256xf32> to vector<9x256xf32>
    %192 = arith.truncf %191 : vector<9x256xf32> to vector<9x256xbf16>
    %193 = arith.truncf %179 : vector<8x256xf32> to vector<8x256xbf16>
    %cst_114 = arith.constant dense<0.000000e+00> : vector<256x256xf32>
    %194 = tpu.matmul %193, %190, %cst_114 {dimension_numbers = #tpu.dot_dimension_numbers<[0], [0], [1], [1], [0, 1, 1, 1], [], []>} : vector<8x256xbf16>, vector<8x256xbf16>, vector<256x256xf32> -> vector<256x256xf32>
    %cst_115 = arith.constant dense<0xFF800000> : vector<256xf32>
    %195 = vector.multi_reduction <maximumf>, %194, %cst_115 [1] : vector<256x256xf32> to vector<256xf32>
    %196 = vector.shape_cast %195 : vector<256xf32> to vector<256x1xf32>
    %197 = vector.broadcast %196 : vector<256x1xf32> to vector<256x256xf32>
    %198 = arith.subf %194, %197 : vector<256x256xf32>
    %199 = math.exp %198 : vector<256x256xf32>
    %200 = arith.truncf %199 : vector<256x256xf32> to vector<256x256xbf16>
    %cst_116 = arith.constant dense<0.000000e+00> : vector<9x256xf32>
    %201 = tpu.matmul %192, %200, %cst_116 {dimension_numbers = #tpu.dot_dimension_numbers<[1], [1], [0], [0], [0, 0, 1, 0], [], []>} : vector<9x256xbf16>, vector<256x256xbf16>, vector<9x256xf32> -> vector<9x256xf32>
    %202 = vector.extract_strided_slice %201 {offsets = [8, 0], sizes = [1, 256], strides = [1, 1]} : vector<9x256xf32> to vector<1x256xf32>
    %203 = tpu.reciprocal %202 {approx = true} : vector<1x256xf32> -> vector<1x256xf32>
    %204 = vector.extract_strided_slice %201 {offsets = [0, 0], sizes = [8, 256], strides = [1, 1]} : vector<9x256xf32> to vector<8x256xf32>
    %205 = vector.broadcast %203 : vector<1x256xf32> to vector<8x256xf32>
    %206 = arith.mulf %204, %205 : vector<8x256xf32>
    %207 = arith.truncf %206 : vector<8x256xf32> to vector<8x256xbf16>
    %c1_117 = arith.constant 1 : index
    %c0_118 = arith.constant 0 : index
    %c0_119 = arith.constant 0 : index
    %208 = vector.load %arg6[%c1_117, %c0_118, %c0_119] : memref<2x4x8xbf16, #tpu.memory_space<vmem>>, vector<1x4x8xbf16>
    %209 = vector.shape_cast %208 : vector<1x4x8xbf16> to vector<4x8xbf16>
    %cst_120 = arith.constant dense<0.000000e+00> : vector<4x256xf32>
    %210 = tpu.matmul %209, %207, %cst_120 {dimension_numbers = #tpu.dot_dimension_numbers<[1], [0], [0], [1], [0, 0, 1, 1], [], []>} : vector<4x8xbf16>, vector<8x256xbf16>, vector<4x256xf32> -> vector<4x256xf32>
    %211 = arith.addf %168, %210 : vector<4x256xf32>
    %c0_121 = arith.constant 0 : index
    %c0_122 = arith.constant 0 : index
    %c0_123 = arith.constant 0 : index
    %212 = vector.load %arg8[%c0_121, %c0_122, %c0_123] : memref<2x4x4xbf16, #tpu.memory_space<vmem>>, vector<1x4x4xbf16>
    %213 = vector.shape_cast %212 : vector<1x4x4xbf16> to vector<4x4xbf16>
    %cst_124 = arith.constant dense<0.000000e+00> : vector<4x256xf32>
    %214 = tpu.matmul %213, %123, %cst_124 {dimension_numbers = #tpu.dot_dimension_numbers<[1], [0], [0], [1], [0, 0, 1, 1], [], []>} : vector<4x4xbf16>, vector<4x256xbf16>, vector<4x256xf32> -> vector<4x256xf32>
    %c1_125 = arith.constant 1 : index
    %c0_126 = arith.constant 0 : index
    %c0_127 = arith.constant 0 : index
    %215 = vector.load %arg8[%c1_125, %c0_126, %c0_127] : memref<2x4x4xbf16, #tpu.memory_space<vmem>>, vector<1x4x4xbf16>
    %216 = vector.shape_cast %215 : vector<1x4x4xbf16> to vector<4x4xbf16>
    %217 = arith.truncf %211 : vector<4x256xf32> to vector<4x256xbf16>
    %cst_128 = arith.constant dense<0.000000e+00> : vector<4x256xf32>
    %218 = tpu.matmul %216, %217, %cst_128 {dimension_numbers = #tpu.dot_dimension_numbers<[1], [0], [0], [1], [0, 0, 1, 1], [], []>} : vector<4x4xbf16>, vector<4x256xbf16>, vector<4x256xf32> -> vector<4x256xf32>
    %219 = arith.addf %214, %218 : vector<4x256xf32>
    %c0_129 = arith.constant 0 : index
    %c0_130 = arith.constant 0 : index
    %220 = vector.load %arg9[%c0_129, %c0_130] : memref<4x1xf32, #tpu.memory_space<vmem>>, vector<4x1xf32>
    %221 = vector.broadcast %220 : vector<4x1xf32> to vector<4x256xf32>
    %222 = arith.addf %219, %221 : vector<4x256xf32>
    %cst_131 = arith.constant 0.000000e+00 : f32
    %223 = vector.broadcast %cst_131 : f32 to vector<4x256xf32>
    %224 = arith.maximumf %222, %223 : vector<4x256xf32>
    %225 = vector.extract_strided_slice %121 {offsets = [1, 0, 0], sizes = [1, 4, 256], strides = [1, 1, 1]} : vector<2x4x256xbf16> to vector<1x4x256xbf16>
    %226 = vector.shape_cast %225 : vector<1x4x256xbf16> to vector<4x256xbf16>
    %c0_132 = arith.constant 0 : index
    %c0_133 = arith.constant 0 : index
    %227 = vector.load %arg10[%c0_132, %c0_133] : memref<4x4xbf16, #tpu.memory_space<vmem>>, vector<4x4xbf16>
    %cst_134 = arith.constant dense<0.000000e+00> : vector<4x256xf32>
    %228 = tpu.matmul %227, %226, %cst_134 {dimension_numbers = #tpu.dot_dimension_numbers<[1], [0], [0], [1], [0, 0, 1, 1], [], []>} : vector<4x4xbf16>, vector<4x256xbf16>, vector<4x256xf32> -> vector<4x256xf32>
    %c0_135 = arith.constant 0 : index
    %c0_136 = arith.constant 0 : index
    %229 = vector.load %arg11[%c0_135, %c0_136] : memref<4x1xf32, #tpu.memory_space<vmem>>, vector<4x1xf32>
    %230 = vector.broadcast %229 : vector<4x1xf32> to vector<4x256xf32>
    %231 = arith.addf %228, %230 : vector<4x256xf32>
    %cst_137 = arith.constant 0.000000e+00 : f32
    %232 = vector.broadcast %cst_137 : f32 to vector<4x256xf32>
    %233 = arith.maximumf %231, %232 : vector<4x256xf32>
    %234 = tpu.concatenate %224, %233 in 0 : vector<4x256xf32>, vector<4x256xf32> -> vector<8x256xf32>
    %c1_138 = arith.constant 1 : index
    %c0_139 = arith.constant 0 : index
    %c0_140 = arith.constant 0 : index
    %235 = vector.load %arg12[%c1_138, %c0_139, %c0_140] : memref<2x8x256xf32, #tpu.memory_space<vmem>>, vector<1x8x256xf32>
    %236 = vector.shape_cast %235 : vector<1x8x256xf32> to vector<8x256xf32>
    %237 = vector.shape_cast %234 : vector<8x256xf32> to vector<1x8x256xf32>
    tpu.vector_store %arg12[%c1_138, %c0_139, %c0_140], %237 {strides = array<i32>} : memref<2x8x256xf32, #tpu.memory_space<vmem>>, vector<1x8x256xf32>,
    return
  }
  func.func @transform_0(%arg0: i32) -> (i32, i32, i32, i32) {
    %c0_i32 = arith.constant 0 : i32
    %c0_i32_0 = arith.constant 0 : i32
    %c0_i32_1 = arith.constant 0 : i32
    %c0_i32_2 = arith.constant 0 : i32
    return %arg0, %c0_i32, %c0_i32_0, %c0_i32_1 : i32, i32, i32, i32
  }
  func.func @transform_1(%arg0: i32) -> (i32, i32, i32) {
    %c0_i32 = arith.constant 0 : i32
    %c0_i32_0 = arith.constant 0 : i32
    %c0_i32_1 = arith.constant 0 : i32
    %c0_i32_2 = arith.constant 0 : i32
    return %c0_i32, %c0_i32_0, %c0_i32_1 : i32, i32, i32
  }
  func.func @transform_2(%arg0: i32) -> (i32, i32, i32) {
    %c0_i32 = arith.constant 0 : i32
    %c0_i32_0 = arith.constant 0 : i32
    %c0_i32_1 = arith.constant 0 : i32
    %c0_i32_2 = arith.constant 0 : i32
    return %c0_i32, %c0_i32_0, %c0_i32_1 : i32, i32, i32
  }
  func.func @transform_3(%arg0: i32) -> (i32, i32, i32) {
    %c0_i32 = arith.constant 0 : i32
    %c0_i32_0 = arith.constant 0 : i32
    %c0_i32_1 = arith.constant 0 : i32
    %c0_i32_2 = arith.constant 0 : i32
    return %c0_i32, %c0_i32_0, %c0_i32_1 : i32, i32, i32
  }
  func.func @transform_4(%arg0: i32) -> (i32, i32, i32) {
    %c0_i32 = arith.constant 0 : i32
    %c0_i32_0 = arith.constant 0 : i32
    %c0_i32_1 = arith.constant 0 : i32
    %c0_i32_2 = arith.constant 0 : i32
    return %c0_i32, %c0_i32_0, %c0_i32_1 : i32, i32, i32
  }
  func.func @transform_5(%arg0: i32) -> (i32, i32, i32) {
    %c0_i32 = arith.constant 0 : i32
    %c0_i32_0 = arith.constant 0 : i32
    %c0_i32_1 = arith.constant 0 : i32
    %c0_i32_2 = arith.constant 0 : i32
    return %c0_i32, %c0_i32_0, %c0_i32_1 : i32, i32, i32
  }
  func.func @transform_6(%arg0: i32) -> (i32, i32) {
    %c0_i32 = arith.constant 0 : i32
    %c0_i32_0 = arith.constant 0 : i32
    %c0_i32_1 = arith.constant 0 : i32
    return %c0_i32, %c0_i32_0 : i32, i32
  }
  func.func @transform_7(%arg0: i32) -> (i32, i32, i32) {
    %c0_i32 = arith.constant 0 : i32
    %c0_i32_0 = arith.constant 0 : i32
    %c0_i32_1 = arith.constant 0 : i32
    %c0_i32_2 = arith.constant 0 : i32
    return %c0_i32, %c0_i32_0, %c0_i32_1 : i32, i32, i32
  }
  func.func @transform_8(%arg0: i32) -> (i32, i32) {
    %c0_i32 = arith.constant 0 : i32
    %c0_i32_0 = arith.constant 0 : i32
    %c0_i32_1 = arith.constant 0 : i32
    return %c0_i32, %c0_i32_0 : i32, i32
  }
  func.func @transform_9(%arg0: i32) -> (i32, i32) {
    %c0_i32 = arith.constant 0 : i32
    %c0_i32_0 = arith.constant 0 : i32
    %c0_i32_1 = arith.constant 0 : i32
    return %c0_i32, %c0_i32_0 : i32, i32
  }
  func.func @transform_10(%arg0: i32) -> (i32, i32) {
    %c0_i32 = arith.constant 0 : i32
    %c0_i32_0 = arith.constant 0 : i32
    %c0_i32_1 = arith.constant 0 : i32
    return %c0_i32, %c0_i32_0 : i32, i32
  }
  func.func @transform_11(%arg0: i32) -> (i32, i32, i32) {
    %c0_i32 = arith.constant 0 : i32
    %c0_i32_0 = arith.constant 0 : i32
    %c0_i32_1 = arith.constant 0 : i32
    return %arg0, %c0_i32, %c0_i32_0 : i32, i32, i32
  }
}

</mosaic_0001>

<llo_original>
// kernel: _forward_impl.1
$region0: #{_forward_impl.1}
  #allocation0 [shape = 'u32[]', space=smem, size = 0x4, offset = 0x4, fixed_abs, tag = 'smem constant byte address 0x4 - core index']
  #allocation1 [shape = 'u32[144,128]{1,0:T(1,128)}', space=vmem, size = 0x12000, scoped, tag = 'internal scratch']
  %s0 = inlined_call_operand.hbm [shape: f32[2,2,4,256], index: 0, kind: input, shape index: {}]
  %s1 = inlined_call_operand.vmem [shape: bf16[2,8,4], index: 1, kind: input, shape index: {}]
  %s2 = inlined_call_operand.hbm [shape: f32[2,8,1], index: 2, kind: input, shape index: {}]
  %s3 = inlined_call_operand.hbm [shape: bf16[2,17,4], index: 3, kind: input, shape index: {}]
  %s4 = inlined_call_operand.hbm [shape: f32[2,17,1], index: 4, kind: input, shape index: {}]
  %s5 = inlined_call_operand.hbm [shape: bf16[2,4,8], index: 5, kind: input, shape index: {}]
  %s6 = inlined_call_operand.vmem [shape: f32[4,1], index: 6, kind: input, shape index: {}]
  %s7 = inlined_call_operand.hbm [shape: bf16[2,4,4], index: 7, kind: input, shape index: {}]
  %s8 = inlined_call_operand.vmem [shape: f32[4,1], index: 8, kind: input, shape index: {}]
  %s9 = inlined_call_operand.vmem [shape: bf16[4,4], index: 9, kind: input, shape index: {}]
  %s10 = inlined_call_operand.vmem [shape: f32[4,1], index: 10, kind: input, shape index: {}]
  %s11 = inlined_call_operand.hbm [shape: f32[2,8,256], index: 11, kind: output, shape index: {}]
  %s12 = sld [smem:[#allocation0]]
  $region78: #{_forward_impl.1} parent=0
    _
  %s14 = ssub.s32 1, %s12
  %s15 = scalar_select 0, %s14, %s12
  $region1: #{_forward_impl.1} parent=0
    #allocation2 [shape = 'u8[16384]{0}', space=vmem, size = 0x4000, scoped, tag = 'input window, operand 0, single buffered']
    #allocation3 [shape = 's32[1]{0}', space=sflag, size = 0x4, scoped, tag = 'scoped memory for _forward_impl.1']
    #allocation4 [shape = 's32[1]{0}', space=sflag, size = 0x4, scoped, tag = 'scoped memory for _forward_impl.1']
    #allocation5 [shape = 'u8[8192]{0}', space=vmem, size = 0x2000, scoped, tag = 'input window, operand 2, single buffered']
    #allocation6 [shape = 's32[1]{0}', space=sflag, size = 0x4, scoped, tag = 'scoped memory for _forward_impl.1']
    #allocation7 [shape = 'u8[12288]{0}', space=vmem, size = 0x3000, scoped, tag = 'input window, operand 3, single buffered']
    #allocation8 [shape = 'u8[24576]{0}', space=vmem, size = 0x6000, scoped, tag = 'input window, operand 4, single buffered']
    #allocation9 [shape = 's32[1]{0}', space=sflag, size = 0x4, scoped, tag = 'scoped memory for _forward_impl.1']
    #allocation10 [shape = 'u8[2048]{0}', space=vmem, size = 0x800, scoped, tag = 'input window, operand 5, single buffered']
    #allocation11 [shape = 'u8[2048]{0}', space=vmem, size = 0x800, scoped, tag = 'input window, operand 7, single buffered']
    #allocation12 [shape = 's32[1]{0}', space=sflag, size = 0x4, scoped, tag = 'scoped memory for _forward_impl.1']
    #allocation13 [shape = 'u8[16384]{0}', space=vmem, size = 0x4000, scoped, tag = 'output window, operand 0, single buffered']
    %16 = vsyncpa [#allocation3], 0
    %17 = vsyncpa [#allocation6], 0
    %18 = vsyncpa [#allocation9], 0
    %19 = vsyncpa [#allocation12], 0
    %20 = vsyncpa [#allocation4], 0
    // Predicated region
    $region2: #{_forward_impl.1} parent=1 // pred_check
      _
    $region3: #{_forward_impl.1} parent=1 // pred_check_branch
      %22 = sbr.rel (0) target = $region5
    $region4: #{_forward_impl.1} parent=1 // pred_region
      %s24 = ssub.s32 512, 512
      %25 = vsyncadd [#allocation3], %s24
      %s26 = sshll.u32 [#allocation2], 4
      %s27 = int_to_ptr.vmem [resolvable:$true] %s26
      %32 = dma.hbm_to_vmem [thread:$0]  %s0, 512, %s27, [#allocation3], 128, 128, 8
    $region5: #{_forward_impl.1} parent=1 // pred_fallthru
      _
    // Predicated region
    $region6: #{_forward_impl.1} parent=1 // pred_check
      _
    $region7: #{_forward_impl.1} parent=1 // pred_check_branch
      %34 = sbr.rel (0) target = $region9
    $region8: #{_forward_impl.1} parent=1 // pred_region
      _
    $region9: #{_forward_impl.1} parent=1 // pred_fallthru
      _
    // Predicated region
    $region10: #{_forward_impl.1} parent=1 // pred_check
      _
    $region11: #{_forward_impl.1} parent=1 // pred_check_branch
      %36 = sbr.rel (0) target = $region13
    $region12: #{_forward_impl.1} parent=1 // pred_region
      %s38 = ssub.s32 256, 256
      %39 = vsyncadd [#allocation6], %s38
      %s40 = sshll.u32 [#allocation5], 4
      %s41 = int_to_ptr.vmem [resolvable:$true] %s40
      %46 = dma.hbm_to_vmem [thread:$0]  %s2, 256, %s41, [#allocation6], 128, 128, 8
    $region13: #{_forward_impl.1} parent=1 // pred_fallthru
      _
    // Predicated region
    $region14: #{_forward_impl.1} parent=1 // pred_check
      _
    $region15: #{_forward_impl.1} parent=1 // pred_check_branch
      %48 = sbr.rel (0) target = $region17
    $region16: #{_forward_impl.1} parent=1 // pred_region
      %s50 = ssub.s32 384, 384
      %51 = vsyncadd [#allocation6], %s50
      %s52 = sshll.u32 [#allocation7], 4
      %s53 = int_to_ptr.vmem [resolvable:$true] %s52
      %58 = dma.hbm_to_vmem [thread:$0]  %s3, 384, %s53, [#allocation6], 64, 64, 4
    $region17: #{_forward_impl.1} parent=1 // pred_fallthru
      _
    // Predicated region
    $region18: #{_forward_impl.1} parent=1 // pred_check
      _
    $region19: #{_forward_impl.1} parent=1 // pred_check_branch
      %60 = sbr.rel (0) target = $region21
    $region20: #{_forward_impl.1} parent=1 // pred_region
      %s62 = ssub.s32 768, 768
      %63 = vsyncadd [#allocation9], %s62
      %s64 = sshll.u32 [#allocation8], 4
      %s65 = int_to_ptr.vmem [resolvable:$true] %s64
      %70 = dma.hbm_to_vmem [thread:$0]  %s4, 768, %s65, [#allocation9], 128, 128, 8
    $region21: #{_forward_impl.1} parent=1 // pred_fallthru
      _
    // Predicated region
    $region22: #{_forward_impl.1} parent=1 // pred_check
      _
    $region23: #{_forward_impl.1} parent=1 // pred_check_branch
      %72 = sbr.rel (0) target = $region25
    $region24: #{_forward_impl.1} parent=1 // pred_region
      %s74 = ssub.s32 64, 64
      %75 = vsyncadd [#allocation9], %s74
      %s76 = sshll.u32 [#allocation10], 4
      %s77 = int_to_ptr.vmem [resolvable:$true] %s76
      %82 = dma.hbm_to_vmem [thread:$0]  %s5, 64, %s77, [#allocation9], 32, 32, 2
    $region25: #{_forward_impl.1} parent=1 // pred_fallthru
      _
    // Predicated region
    $region26: #{_forward_impl.1} parent=1 // pred_check
      _
    $region27: #{_forward_impl.1} parent=1 // pred_check_branch
      %84 = sbr.rel (0) target = $region29
    $region28: #{_forward_impl.1} parent=1 // pred_region
      _
    $region29: #{_forward_impl.1} parent=1 // pred_fallthru
      _
    // Predicated region
    $region30: #{_forward_impl.1} parent=1 // pred_check
      _
    $region31: #{_forward_impl.1} parent=1 // pred_check_branch
      %86 = sbr.rel (0) target = $region33
    $region32: #{_forward_impl.1} parent=1 // pred_region
      %s88 = ssub.s32 64, 64
      %89 = vsyncadd [#allocation12], %s88
      %s90 = sshll.u32 [#allocation11], 4
      %s91 = int_to_ptr.vmem [resolvable:$true] %s90
      %96 = dma.hbm_to_vmem [thread:$0]  %s7, 64, %s91, [#allocation12], 32, 32, 2
    $region33: #{_forward_impl.1} parent=1 // pred_fallthru
      _
    // Predicated region
    $region34: #{_forward_impl.1} parent=1 // pred_check
      _
    $region35: #{_forward_impl.1} parent=1 // pred_check_branch
      %98 = sbr.rel (0) target = $region37
    $region36: #{_forward_impl.1} parent=1 // pred_region
      _
    $region37: #{_forward_impl.1} parent=1 // pred_fallthru
      _
    // Predicated region
    $region38: #{_forward_impl.1} parent=1 // pred_check
      _
    $region39: #{_forward_impl.1} parent=1 // pred_check_branch
      %100 = sbr.rel (0) target = $region41
    $region40: #{_forward_impl.1} parent=1 // pred_region
      _
    $region41: #{_forward_impl.1} parent=1 // pred_fallthru
      _
    // Predicated region
    $region42: #{_forward_impl.1} parent=1 // pred_check
      _
    $region43: #{_forward_impl.1} parent=1 // pred_check_branch
      %102 = sbr.rel (0) target = $region45
    $region44: #{_forward_impl.1} parent=1 // pred_region
      _
    $region45: #{_forward_impl.1} parent=1 // pred_fallthru
      _
    // Predicated region
    $region46: #{_forward_impl.1} parent=1 // pred_check
      _
    $region47: #{_forward_impl.1} parent=1 // pred_check_branch
      %104 = sbr.rel (0) target = $region49
    $region48: #{_forward_impl.1} parent=1 // pred_region
      %105 = dma.done [#allocation3], 512
    $region49: #{_forward_impl.1} parent=1 // pred_fallthru
      _
    // Predicated region
    $region50: #{_forward_impl.1} parent=1 // pred_check
      _
    $region51: #{_forward_impl.1} parent=1 // pred_check_branch
      %107 = sbr.rel (0) target = $region53
    $region52: #{_forward_impl.1} parent=1 // pred_region
      %108 = dma.done [#allocation6], 256
    $region53: #{_forward_impl.1} parent=1 // pred_fallthru
      _
    // Predicated region
    $region54: #{_forward_impl.1} parent=1 // pred_check
      _
    $region55: #{_forward_impl.1} parent=1 // pred_check_branch
      %110 = sbr.rel (0) target = $region57
    $region56: #{_forward_impl.1} parent=1 // pred_region
      %111 = dma.done [#allocation6], 384
    $region57: #{_forward_impl.1} parent=1 // pred_fallthru
      _
    // Predicated region
    $region58: #{_forward_impl.1} parent=1 // pred_check
      _
    $region59: #{_forward_impl.1} parent=1 // pred_check_branch
      %113 = sbr.rel (0) target = $region61
    $region60: #{_forward_impl.1} parent=1 // pred_region
      %114 = dma.done [#allocation9], 768
    $region61: #{_forward_impl.1} parent=1 // pred_fallthru
      _
    // Predicated region
    $region62: #{_forward_impl.1} parent=1 // pred_check
      _
    $region63: #{_forward_impl.1} parent=1 // pred_check_branch
      %116 = sbr.rel (0) target = $region65
    $region64: #{_forward_impl.1} parent=1 // pred_region
      %117 = dma.done [#allocation9], 64
    $region65: #{_forward_impl.1} parent=1 // pred_fallthru
      _
    // Predicated region
    $region66: #{_forward_impl.1} parent=1 // pred_check
      _
    $region67: #{_forward_impl.1} parent=1 // pred_check_branch
      %119 = sbr.rel (0) target = $region69
    $region68: #{_forward_impl.1} parent=1 // pred_region
      %120 = dma.done [#allocation12], 64
    $region69: #{_forward_impl.1} parent=1 // pred_fallthru
      _
    %v122 = vld [vmem:[#allocation2] sm:$0xff]
    %v123 = vld [vmem:[#allocation2 + $0x8] sm:$0xff]
    %v126 = vcombine.high %v122, %v122
    %v127 = vcombine.high %v123, %v123
    %v130 = vpack.c.bf16 %v122, %v122
    %v131 = vpack.c.bf16 %v126, %v126
    %v132 = vpack.c.bf16 %v123, %v123
    %v133 = vpack.c.bf16 %v127, %v127
    %v134 = vld [vmem:[%s6] sm:$0xf]
    %v135 = vld [vmem:[%s1] sm:$0xf]
    %v136 = vld [vmem:[#allocation5] sm:$0xff]
    %138 = vset.pattern.permute.xlu0 0
    %139 = vperm.xlu0 %138, %v136
    %v140 = vpop.permute.xlu0 %139
    %vm142 = vcmask 31744
    %v144 = vsel %vm142, %v135, 0
    %vm146 = vcmask 1041408
    %v148 = vsel %vm146, %v130, 0
    %v151 = vsel %vm146, %v131, 0
    %153 = vmatprep.subr.bf16.mxu0 0
    %154 = vmatpush1.bf16.msra.mxu0 0
    %155 = vmatprep.subr.bf16.mxu0 0
    %156 = vmatpush1.bf16.msra.mxu0 0
    %157 = vmatprep.subr.bf16.mxu0 0
    %158 = vmatpush1.bf16.msra.mxu0 0
    %159 = vmatprep.subr.bf16.mxu0 0
    %160 = vmatpush1.bf16.msra.mxu0 0
    %161 = vmatprep.subr.bf16.mxu0 0
    %162 = vmatpush1.bf16.msra.mxu0 0
    %163 = vmatprep.subr.bf16.mxu0 0
    %164 = vmatpush1.bf16.msra.mxu0 0
    %165 = vmatprep.subr.bf16.mxu0 0
    %166 = vmatpush1.bf16.msra.mxu0 0
    %167 = vmatprep.subr.bf16.mxu0 %v151
    %168 = vmatpush1.bf16.msra.mxu0 %v148
    %169 = vmatprep.subr.bf16.mxu0 0
    %170 = vmatpush2.bf16.msra.mxu0 0
    %171 = vmatprep.subr.bf16.mxu0 0
    %172 = vmatpush2.bf16.msra.mxu0 0
    %173 = vmatprep.subr.bf16.mxu0 0
    %174 = vmatpush2.bf16.msra.mxu0 0
    %175 = vmatprep.subr.bf16.mxu0 0
    %176 = vmatpush2.bf16.msra.mxu0 0
    %177 = vmatprep.subr.bf16.mxu0 0
    %178 = vmatpush2.bf16.msra.mxu0 0
    %179 = vmatprep.subr.bf16.mxu0 0
    %180 = vmatpush2.bf16.msra.mxu0 0
    %181 = vmatprep.subr.bf16.mxu0 0
    %182 = vmatpush2.bf16.msra.mxu0 0
    %183 = vmatprep.subr.bf16.mxu0 0
    %184 = vmatpush2.bf16.msra.mxu0 0
    %185 = vmatprep.mubr.bf16.mxu0 0
    %186 = vmatmul.mubr.bf16.gmra.mxu0 %v144
    %v187 = vpop.f32.mrf.mxu0
    %v188 = vadd.f32 %v140, %v187
    %v189 = vpop.f32.mrf.mxu0
    %v190 = vadd.f32 %v140, %v189
    %v191 = vpop.f32.mrf.mxu0
    %v192 = vpop.f32.mrf.mxu0
    %193 = vdwg.mxu0
    %v194 = vmax.f32 %v188, 0.0
    %v195 = vmax.f32 %v190, 0.0
    %v196 = vld [vmem:[#allocation7] sm:$0xf]
    %v197 = vld [vmem:[#allocation7 + $0x4] sm:$0xf]
    %v198 = vld [vmem:[#allocation7 + $0x8] sm:$0x1]
    %v199 = vld [vmem:[#allocation8] sm:$0xff]
    %v200 = vld [vmem:[#allocation8 + $0x8] sm:$0xff]
    %v201 = vld [vmem:[#allocation8 + $0x10] sm:$0x1]
    %203 = vset.pattern.permute.xlu0 0
    %204 = vperm.xlu0 %203, %v199
    %v205 = vpop.permute.xlu0 %204
    %208 = vset.pattern.permute.xlu0 0
    %209 = vperm.xlu0 %208, %v200
    %v210 = vpop.permute.xlu0 %209
    %213 = vset.pattern.permute.xlu0 0
    %214 = vperm.xlu0 %213, %v201
    %v215 = vpop.permute.xlu0 %214
    %v220 = vunpack.c.l.b16 %v196
    %v221 = vunpack.c.l.b16 %v197
    %v222 = vunpack.c.l.b16 %v198
    %v223 = vpack.c.b16 %v221, %v220
    %v224 = vpack.c.b16 %v222, %v222
    %v226 = vsel %vm142, %v223, 0
    %v229 = vsel %vm142, %v224, 0
    %231 = vmatprep.subr.bf16.mxu0 0
    %232 = vmatpush1.bf16.msra.mxu0 0
    %233 = vmatprep.subr.bf16.mxu0 0
    %234 = vmatpush1.bf16.msra.mxu0 0
    %235 = vmatprep.subr.bf16.mxu0 0
    %236 = vmatpush1.bf16.msra.mxu0 0
    %237 = vmatprep.subr.bf16.mxu0 0
    %238 = vmatpush1.bf16.msra.mxu0 0
    %239 = vmatprep.subr.bf16.mxu0 0
    %240 = vmatpush1.bf16.msra.mxu0 0
    %241 = vmatprep.subr.bf16.mxu0 0
    %242 = vmatpush1.bf16.msra.mxu0 0
    %243 = vmatprep.subr.bf16.mxu0 0
    %244 = vmatpush1.bf16.msra.mxu0 0
    %245 = vmatprep.subr.bf16.mxu0 %v151
    %246 = vmatpush1.bf16.msra.mxu0 %v148
    %247 = vmatprep.subr.bf16.mxu0 0
    %248 = vmatpush2.bf16.msra.mxu0 0
    %249 = vmatprep.subr.bf16.mxu0 0
    %250 = vmatpush2.bf16.msra.mxu0 0
    %251 = vmatprep.subr.bf16.mxu0 0
    %252 = vmatpush2.bf16.msra.mxu0 0
    %253 = vmatprep.subr.bf16.mxu0 0
    %254 = vmatpush2.bf16.msra.mxu0 0
    %255 = vmatprep.subr.bf16.mxu0 0
    %256 = vmatpush2.bf16.msra.mxu0 0
    %257 = vmatprep.subr.bf16.mxu0 0
    %258 = vmatpush2.bf16.msra.mxu0 0
    %259 = vmatprep.subr.bf16.mxu0 0
    %260 = vmatpush2.bf16.msra.mxu0 0
    %261 = vmatprep.subr.bf16.mxu0 0
    %262 = vmatpush2.bf16.msra.mxu0 0
    %263 = vmatprep.mubr.bf16.mxu0 0
    %264 = vmatmul.mubr.bf16.gmra.mxu0 %v226
    %v265 = vpop.f32.mrf.mxu0
    %v266 = vadd.f32 %v205, %v265
    %v267 = vpop.f32.mrf.mxu0
    %v268 = vadd.f32 %v205, %v267
    %v269 = vpop.f32.mrf.mxu0
    %v270 = vadd.f32 %v210, %v269
    %v271 = vpop.f32.mrf.mxu0
    %v272 = vadd.f32 %v210, %v271
    %273 = vmatprep.mubr.bf16.mxu0 0
    %274 = vmatmul.mubr.bf16.gmra.mxu0 %v229
    %v275 = vpop.f32.mrf.mxu0
    %v276 = vadd.f32 %v215, %v275
    %v277 = vpop.f32.mrf.mxu0
    %v278 = vadd.f32 %v215, %v277
    %v279 = vpop.f32.mrf.mxu0
    %v280 = vpop.f32.mrf.mxu0
    %281 = vdwg.mxu0
    %v282 = vmax.f32 %v266, 0.0
    %v283 = vmax.f32 %v268, 0.0
    %v284 = vmax.f32 %v270, 0.0
    %v285 = vmax.f32 %v272, 0.0
    %v286 = vmax.f32 %v276, 0.0
    %v287 = vmax.f32 %v278, 0.0
    %v288 = vpack.c.bf16 %v282, %v282
    %v289 = vpack.c.bf16 %v283, %v283
    %v290 = vpack.c.bf16 %v286, %v284
    %v291 = vpack.c.bf16 %v287, %v285
    %v292 = vpack.c.bf16 %v194, %v194
    %v293 = vpack.c.bf16 %v195, %v195
    %294 = vxpose.xlu0.c.b16.start [1/8] %v292, 128
    %295 = vxpose.xlu0.c.b16.cont [2/8] 0, 128
    %296 = vxpose.xlu0.c.b16.cont [3/8] 0, 128
    %297 = vxpose.xlu0.c.b16.cont [4/8] 0, 128
    %298 = vxpose.xlu0.c.b16.cont [5/8] 0, 128
    %299 = vxpose.xlu0.c.b16.cont [6/8] 0, 128
    %300 = vxpose.xlu0.c.b16.cont [7/8] 0, 128
    %301 = vxpose.xlu0.c.b16.end [8/8] 0, 128
    %v302 = vpop.trf.xlu0
    %v303 = vpop.trf.xlu0
    %v304 = vpop.trf.xlu0
    %v305 = vpop.trf.xlu0
    %v306 = vpop.trf.xlu0
    %v307 = vpop.trf.xlu0
    %v308 = vpop.trf.xlu0
    %v309 = vpop.trf.xlu0
    %310 = vxpose.xlu0.c.b16.start [1/8] %v293, 128
    %311 = vxpose.xlu0.c.b16.cont [2/8] 0, 128
    %312 = vxpose.xlu0.c.b16.cont [3/8] 0, 128
    %313 = vxpose.xlu0.c.b16.cont [4/8] 0, 128
    %314 = vxpose.xlu0.c.b16.cont [5/8] 0, 128
    %315 = vxpose.xlu0.c.b16.cont [6/8] 0, 128
    %316 = vxpose.xlu0.c.b16.cont [7/8] 0, 128
    %317 = vxpose.xlu0.c.b16.end [8/8] 0, 128
    %v318 = vpop.trf.xlu0
    %v319 = vpop.trf.xlu0
    %v320 = vpop.trf.xlu0
    %v321 = vpop.trf.xlu0
    %v322 = vpop.trf.xlu0
    %v323 = vpop.trf.xlu0
    %v324 = vpop.trf.xlu0
    %v325 = vpop.trf.xlu0
    %vm326 = vcmask 64512
    %v328 = vsel %vm326, %v302, 0
    %v331 = vsel %vm326, %v303, 0
    %v334 = vsel %vm326, %v304, 0
    %v337 = vsel %vm326, %v305, 0
    %v340 = vsel %vm326, %v306, 0
    %v343 = vsel %vm326, %v307, 0
    %v346 = vsel %vm326, %v308, 0
    %v349 = vsel %vm326, %v309, 0
    %v352 = vsel %vm326, %v318, 0
    %v355 = vsel %vm326, %v319, 0
    %v358 = vsel %vm326, %v320, 0
    %v361 = vsel %vm326, %v321, 0
    %v364 = vsel %vm326, %v322, 0
    %v367 = vsel %vm326, %v323, 0
    %v370 = vsel %vm326, %v324, 0
    %v373 = vsel %vm326, %v325, 0
    %vm375 = vcmask 1043456
    %v377 = vsel %vm375, %v288, 0
    %v380 = vsel %vm375, %v289, 0
    %382 = vmatprep.subr.bf16.mxu0 0
    %383 = vmatpush1.bf16.msra.mxu0 0
    %384 = vmatprep.subr.bf16.mxu0 0
    %385 = vmatpush1.bf16.msra.mxu0 0
    %386 = vmatprep.subr.bf16.mxu0 0
    %387 = vmatpush1.bf16.msra.mxu0 0
    %388 = vmatprep.subr.bf16.mxu0 0
    %389 = vmatpush1.bf16.msra.mxu0 0
    %390 = vmatprep.subr.bf16.mxu0 0
    %391 = vmatpush1.bf16.msra.mxu0 0
    %392 = vmatprep.subr.bf16.mxu0 0
    %393 = vmatpush1.bf16.msra.mxu0 0
    %394 = vmatprep.subr.bf16.mxu0 0
    %395 = vmatpush1.bf16.msra.mxu0 0
    %396 = vmatprep.subr.bf16.mxu0 %v380
    %397 = vmatpush1.bf16.msra.mxu0 %v377
    %398 = vmatprep.subr.bf16.mxu0 0
    %399 = vmatpush2.bf16.msra.mxu0 0
    %400 = vmatprep.subr.bf16.mxu0 0
    %401 = vmatpush2.bf16.msra.mxu0 0
    %402 = vmatprep.subr.bf16.mxu0 0
    %403 = vmatpush2.bf16.msra.mxu0 0
    %404 = vmatprep.subr.bf16.mxu0 0
    %405 = vmatpush2.bf16.msra.mxu0 0
    %406 = vmatprep.subr.bf16.mxu0 0
    %407 = vmatpush2.bf16.msra.mxu0 0
    %408 = vmatprep.subr.bf16.mxu0 0
    %409 = vmatpush2.bf16.msra.mxu0 0
    %410 = vmatprep.subr.bf16.mxu0 0
    %411 = vmatpush2.bf16.msra.mxu0 0
    %412 = vmatprep.subr.bf16.mxu0 0
    %413 = vmatpush2.bf16.msra.mxu0 0
    %414 = vmatprep.mubr.bf16.mxu0 0
    %415 = vmatmul.mubr.bf16.gmra.mxu0 %v328
    %v416 = vpop.f32.mrf.mxu0
    %v417 = vadd.f32 0.0, %v416
    %v418 = vpop.f32.mrf.mxu0
    %v419 = vadd.f32 0.0, %v418
    %v420 = vpop.f32.mrf.mxu0
    %v421 = vadd.f32 0.0, %v420
    %v422 = vpop.f32.mrf.mxu0
    %v423 = vadd.f32 0.0, %v422
    %424 = vmatprep.mubr.bf16.mxu0 0
    %425 = vmatmul.mubr.bf16.gmra.mxu0 %v331
    %v426 = vpop.f32.mrf.mxu0
    %v427 = vadd.f32 0.0, %v426
    %v428 = vpop.f32.mrf.mxu0
    %v429 = vadd.f32 0.0, %v428
    %v430 = vpop.f32.mrf.mxu0
    %v431 = vadd.f32 0.0, %v430
    %v432 = vpop.f32.mrf.mxu0
    %v433 = vadd.f32 0.0, %v432
    %434 = vmatprep.mubr.bf16.mxu0 0
    %435 = vmatmul.mubr.bf16.gmra.mxu0 %v334
    %v436 = vpop.f32.mrf.mxu0
    %v437 = vadd.f32 0.0, %v436
    %v438 = vpop.f32.mrf.mxu0
    %v439 = vadd.f32 0.0, %v438
    %v440 = vpop.f32.mrf.mxu0
    %v441 = vadd.f32 0.0, %v440
    %v442 = vpop.f32.mrf.mxu0
    %v443 = vadd.f32 0.0, %v442
    %444 = vmatprep.mubr.bf16.mxu0 0
    %445 = vmatmul.mubr.bf16.gmra.mxu0 %v337
    %v446 = vpop.f32.mrf.mxu0
    %v447 = vadd.f32 0.0, %v446
    %v448 = vpop.f32.mrf.mxu0
    %v449 = vadd.f32 0.0, %v448
    %v450 = vpop.f32.mrf.mxu0
    %v451 = vadd.f32 0.0, %v450
    %v452 = vpop.f32.mrf.mxu0
    %v453 = vadd.f32 0.0, %v452
    %454 = vmatprep.mubr.bf16.mxu0 0
    %455 = vmatmul.mubr.bf16.gmra.mxu0 %v340
    %v456 = vpop.f32.mrf.mxu0
    %v457 = vadd.f32 0.0, %v456
    %v458 = vpop.f32.mrf.mxu0
    %v459 = vadd.f32 0.0, %v458
    %v460 = vpop.f32.mrf.mxu0
    %v461 = vadd.f32 0.0, %v460
    %v462 = vpop.f32.mrf.mxu0
    %v463 = vadd.f32 0.0, %v462
    %464 = vmatprep.mubr.bf16.mxu0 0
    %465 = vmatmul.mubr.bf16.gmra.mxu0 %v343
    %v466 = vpop.f32.mrf.mxu0
    %v467 = vadd.f32 0.0, %v466
    %v468 = vpop.f32.mrf.mxu0
    %v469 = vadd.f32 0.0, %v468
    %v470 = vpop.f32.mrf.mxu0
    %v471 = vadd.f32 0.0, %v470
    %v472 = vpop.f32.mrf.mxu0
    %v473 = vadd.f32 0.0, %v472
    %474 = vmatprep.mubr.bf16.mxu0 0
    %475 = vmatmul.mubr.bf16.gmra.mxu0 %v346
    %v476 = vpop.f32.mrf.mxu0
    %v477 = vadd.f32 0.0, %v476
    %v478 = vpop.f32.mrf.mxu0
    %v479 = vadd.f32 0.0, %v478
    %v480 = vpop.f32.mrf.mxu0
    %v481 = vadd.f32 0.0, %v480
    %v482 = vpop.f32.mrf.mxu0
    %v483 = vadd.f32 0.0, %v482
    %484 = vmatprep.mubr.bf16.mxu0 0
    %485 = vmatmul.mubr.bf16.gmra.mxu0 %v349
    %v486 = vpop.f32.mrf.mxu0
    %v487 = vadd.f32 0.0, %v486
    %v488 = vpop.f32.mrf.mxu0
    %v489 = vadd.f32 0.0, %v488
    %v490 = vpop.f32.mrf.mxu0
    %v491 = vadd.f32 0.0, %v490
    %v492 = vpop.f32.mrf.mxu0
    %v493 = vadd.f32 0.0, %v492
    %494 = vmatprep.mubr.bf16.mxu0 0
    %495 = vmatmul.mubr.bf16.gmra.mxu0 %v352
    %v496 = vpop.f32.mrf.mxu0
    %v497 = vadd.f32 0.0, %v496
    %v498 = vpop.f32.mrf.mxu0
    %v499 = vadd.f32 0.0, %v498
    %v500 = vpop.f32.mrf.mxu0
    %v501 = vadd.f32 0.0, %v500
    %v502 = vpop.f32.mrf.mxu0
    %v503 = vadd.f32 0.0, %v502
    %504 = vmatprep.mubr.bf16.mxu0 0
    %505 = vmatmul.mubr.bf16.gmra.mxu0 %v355
    %v506 = vpop.f32.mrf.mxu0
    %v507 = vadd.f32 0.0, %v506
    %v508 = vpop.f32.mrf.mxu0
    %v509 = vadd.f32 0.0, %v508
    %v510 = vpop.f32.mrf.mxu0
    %v511 = vadd.f32 0.0, %v510
    %v512 = vpop.f32.mrf.mxu0
    %v513 = vadd.f32 0.0, %v512
    %514 = vmatprep.mubr.bf16.mxu0 0
    %515 = vmatmul.mubr.bf16.gmra.mxu0 %v358
    %v516 = vpop.f32.mrf.mxu0
    %v517 = vadd.f32 0.0, %v516
    %v518 = vpop.f32.mrf.mxu0
    %v519 = vadd.f32 0.0, %v518
    %v520 = vpop.f32.mrf.mxu0
    %v521 = vadd.f32 0.0, %v520
    %v522 = vpop.f32.mrf.mxu0
    %v523 = vadd.f32 0.0, %v522
    %524 = vmatprep.mubr.bf16.mxu0 0
    %525 = vmatmul.mubr.bf16.gmra.mxu0 %v361
    %v526 = vpop.f32.mrf.mxu0
    %v527 = vadd.f32 0.0, %v526
    %v528 = vpop.f32.mrf.mxu0
    %v529 = vadd.f32 0.0, %v528
    %v530 = vpop.f32.mrf.mxu0
    %v531 = vadd.f32 0.0, %v530
    %v532 = vpop.f32.mrf.mxu0
    %v533 = vadd.f32 0.0, %v532
    %534 = vmatprep.mubr.bf16.mxu0 0
    %535 = vmatmul.mubr.bf16.gmra.mxu0 %v364
    %v536 = vpop.f32.mrf.mxu0
    %v537 = vadd.f32 0.0, %v536
    %v538 = vpop.f32.mrf.mxu0
    %v539 = vadd.f32 0.0, %v538
    %v540 = vpop.f32.mrf.mxu0
    %v541 = vadd.f32 0.0, %v540
    %v542 = vpop.f32.mrf.mxu0
    %v543 = vadd.f32 0.0, %v542
    %544 = vmatprep.mubr.bf16.mxu0 0
    %545 = vmatmul.mubr.bf16.gmra.mxu0 %v367
    %v546 = vpop.f32.mrf.mxu0
    %v547 = vadd.f32 0.0, %v546
    %v548 = vpop.f32.mrf.mxu0
    %v549 = vadd.f32 0.0, %v548
    %v550 = vpop.f32.mrf.mxu0
    %v551 = vadd.f32 0.0, %v550
    %v552 = vpop.f32.mrf.mxu0
    %v553 = vadd.f32 0.0, %v552
    %554 = vmatprep.mubr.bf16.mxu0 0
    %555 = vmatmul.mubr.bf16.gmra.mxu0 %v370
    %v556 = vpop.f32.mrf.mxu0
    %v557 = vadd.f32 0.0, %v556
    %v558 = vpop.f32.mrf.mxu0
    %v559 = vadd.f32 0.0, %v558
    %v560 = vpop.f32.mrf.mxu0
    %v561 = vadd.f32 0.0, %v560
    %v562 = vpop.f32.mrf.mxu0
    %v563 = vadd.f32 0.0, %v562
    %564 = vmatprep.mubr.bf16.mxu0 0
    %565 = vmatmul.mubr.bf16.gmra.mxu0 %v373
    %v566 = vpop.f32.mrf.mxu0
    %v567 = vadd.f32 0.0, %v566
    %v568 = vpop.f32.mrf.mxu0
    %v569 = vadd.f32 0.0, %v568
    %v570 = vpop.f32.mrf.mxu0
    %v571 = vadd.f32 0.0, %v570
    %v572 = vpop.f32.mrf.mxu0
    %v573 = vadd.f32 0.0, %v572
    %574 = vdwg.mxu0
    %v575 = vmax.f32 %v417, %v419
    %576 = vmax.xlane.f32.xlu0 %v575
    %v577 = vpop.xlane.xlu0 %576
    %v578 = vmax.f32 %v421, %v423
    %579 = vmax.xlane.f32.xlu0 %v578
    %v580 = vpop.xlane.xlu0 %579
    %v581 = vmax.f32 %v427, %v429
    %582 = vmax.xlane.f32.xlu0 %v581
    %v583 = vpop.xlane.xlu0 %582
    %v584 = vmax.f32 %v431, %v433
    %585 = vmax.xlane.f32.xlu0 %v584
    %v586 = vpop.xlane.xlu0 %585
    %v587 = vmax.f32 %v437, %v439
    %588 = vmax.xlane.f32.xlu0 %v587
    %v589 = vpop.xlane.xlu0 %588
    %v590 = vmax.f32 %v441, %v443
    %591 = vmax.xlane.f32.xlu0 %v590
    %v592 = vpop.xlane.xlu0 %591
    %v593 = vmax.f32 %v447, %v449
    %594 = vmax.xlane.f32.xlu0 %v593
    %v595 = vpop.xlane.xlu0 %594
    %v596 = vmax.f32 %v451, %v453
    %597 = vmax.xlane.f32.xlu0 %v596
    %v598 = vpop.xlane.xlu0 %597
    %v599 = vmax.f32 %v457, %v459
    %600 = vmax.xlane.f32.xlu0 %v599
    %v601 = vpop.xlane.xlu0 %600
    %v602 = vmax.f32 %v461, %v463
    %603 = vmax.xlane.f32.xlu0 %v602
    %v604 = vpop.xlane.xlu0 %603
    %v605 = vmax.f32 %v467, %v469
    %606 = vmax.xlane.f32.xlu0 %v605
    %v607 = vpop.xlane.xlu0 %606
    %v608 = vmax.f32 %v471, %v473
    %609 = vmax.xlane.f32.xlu0 %v608
    %v610 = vpop.xlane.xlu0 %609
    %v611 = vmax.f32 %v477, %v479
    %612 = vmax.xlane.f32.xlu0 %v611
    %v613 = vpop.xlane.xlu0 %612
    %v614 = vmax.f32 %v481, %v483
    %615 = vmax.xlane.f32.xlu0 %v614
    %v616 = vpop.xlane.xlu0 %615
    %v617 = vmax.f32 %v487, %v489
    %618 = vmax.xlane.f32.xlu0 %v617
    %v619 = vpop.xlane.xlu0 %618
    %v620 = vmax.f32 %v491, %v493
    %621 = vmax.xlane.f32.xlu0 %v620
    %v622 = vpop.xlane.xlu0 %621
    %v623 = vmax.f32 %v497, %v499
    %624 = vmax.xlane.f32.xlu0 %v623
    %v625 = vpop.xlane.xlu0 %624
    %v626 = vmax.f32 %v501, %v503
    %627 = vmax.xlane.f32.xlu0 %v626
    %v628 = vpop.xlane.xlu0 %627
    %v629 = vmax.f32 %v507, %v509
    %630 = vmax.xlane.f32.xlu0 %v629
    %v631 = vpop.xlane.xlu0 %630
    %v632 = vmax.f32 %v511, %v513
    %633 = vmax.xlane.f32.xlu0 %v632
    %v634 = vpop.xlane.xlu0 %633
    %v635 = vmax.f32 %v517, %v519
    %636 = vmax.xlane.f32.xlu0 %v635
    %v637 = vpop.xlane.xlu0 %636
    %v638 = vmax.f32 %v521, %v523
    %639 = vmax.xlane.f32.xlu0 %v638
    %v640 = vpop.xlane.xlu0 %639
    %v641 = vmax.f32 %v527, %v529
    %642 = vmax.xlane.f32.xlu0 %v641
    %v643 = vpop.xlane.xlu0 %642
    %v644 = vmax.f32 %v531, %v533
    %645 = vmax.xlane.f32.xlu0 %v644
    %v646 = vpop.xlane.xlu0 %645
    %v647 = vmax.f32 %v537, %v539
    %648 = vmax.xlane.f32.xlu0 %v647
    %v649 = vpop.xlane.xlu0 %648
    %v650 = vmax.f32 %v541, %v543
    %651 = vmax.xlane.f32.xlu0 %v650
    %v652 = vpop.xlane.xlu0 %651
    %v653 = vmax.f32 %v547, %v549
    %654 = vmax.xlane.f32.xlu0 %v653
    %v655 = vpop.xlane.xlu0 %654
    %v656 = vmax.f32 %v551, %v553
    %657 = vmax.xlane.f32.xlu0 %v656
    %v658 = vpop.xlane.xlu0 %657
    %v659 = vmax.f32 %v557, %v559
    %660 = vmax.xlane.f32.xlu0 %v659
    %v661 = vpop.xlane.xlu0 %660
    %v662 = vmax.f32 %v561, %v563
    %663 = vmax.xlane.f32.xlu0 %v662
    %v664 = vpop.xlane.xlu0 %663
    %v665 = vmax.f32 %v567, %v569
    %666 = vmax.xlane.f32.xlu0 %v665
    %v667 = vpop.xlane.xlu0 %666
    %v668 = vmax.f32 %v571, %v573
    %669 = vmax.xlane.f32.xlu0 %v668
    %v670 = vpop.xlane.xlu0 %669
    %v671 = vsub.f32 %v417, %v577
    %v672 = vsub.f32 %v419, %v577
    %v673 = vsub.f32 %v421, %v580
    %v674 = vsub.f32 %v423, %v580
    %v675 = vsub.f32 %v427, %v583
    %v676 = vsub.f32 %v429, %v583
    %v677 = vsub.f32 %v431, %v586
    %v678 = vsub.f32 %v433, %v586
    %v679 = vsub.f32 %v437, %v589
    %v680 = vsub.f32 %v439, %v589
    %v681 = vsub.f32 %v441, %v592
    %v682 = vsub.f32 %v443, %v592
    %v683 = vsub.f32 %v447, %v595
    %v684 = vsub.f32 %v449, %v595
    %v685 = vsub.f32 %v451, %v598
    %v686 = vsub.f32 %v453, %v598
    %v687 = vsub.f32 %v457, %v601
    %v688 = vsub.f32 %v459, %v601
    %v689 = vsub.f32 %v461, %v604
    %v690 = vsub.f32 %v463, %v604
    %v691 = vsub.f32 %v467, %v607
    %v692 = vsub.f32 %v469, %v607
    %v693 = vsub.f32 %v471, %v610
    %v694 = vsub.f32 %v473, %v610
    %v695 = vsub.f32 %v477, %v613
    %v696 = vsub.f32 %v479, %v613
    %v697 = vsub.f32 %v481, %v616
    %v698 = vsub.f32 %v483, %v616
    %v699 = vsub.f32 %v487, %v619
    %v700 = vsub.f32 %v489, %v619
    %v701 = vsub.f32 %v491, %v622
    %v702 = vsub.f32 %v493, %v622
    %v703 = vsub.f32 %v497, %v625
    %v704 = vsub.f32 %v499, %v625
    %v705 = vsub.f32 %v501, %v628
    %v706 = vsub.f32 %v503, %v628
    %v707 = vsub.f32 %v507, %v631
    %v708 = vsub.f32 %v509, %v631
    %v709 = vsub.f32 %v511, %v634
    %v710 = vsub.f32 %v513, %v634
    %v711 = vsub.f32 %v517, %v637
    %v712 = vsub.f32 %v519, %v637
    %v713 = vsub.f32 %v521, %v640
    %v714 = vsub.f32 %v523, %v640
    %v715 = vsub.f32 %v527, %v643
    %v716 = vsub.f32 %v529, %v643
    %v717 = vsub.f32 %v531, %v646
    %v718 = vsub.f32 %v533, %v646
    %v719 = vsub.f32 %v537, %v649
    %v720 = vsub.f32 %v539, %v649
    %v721 = vsub.f32 %v541, %v652
    %v722 = vsub.f32 %v543, %v652
    %v723 = vsub.f32 %v547, %v655
    %v724 = vsub.f32 %v549, %v655
    %v725 = vsub.f32 %v551, %v658
    %v726 = vsub.f32 %v553, %v658
    %v727 = vsub.f32 %v557, %v661
    %v728 = vsub.f32 %v559, %v661
    %v729 = vsub.f32 %v561, %v664
    %v730 = vsub.f32 %v563, %v664
    %v731 = vsub.f32 %v567, %v667
    %v732 = vsub.f32 %v569, %v667
    %v733 = vsub.f32 %v571, %v670
    %v734 = vsub.f32 %v573, %v670
    %v735 = vmul.f32 %v671, 1.442695
    %v736 = vpow.pop %v735
    %v737 = vmul.f32 %v672, 1.442695
    %v738 = vpow.pop %v737
    %v739 = vmul.f32 %v673, 1.442695
    %v740 = vpow.pop %v739
    %v741 = vmul.f32 %v674, 1.442695
    %v742 = vpow.pop %v741
    %v743 = vmul.f32 %v675, 1.442695
    %v744 = vpow.pop %v743
    %v745 = vmul.f32 %v676, 1.442695
    %v746 = vpow.pop %v745
    %v747 = vmul.f32 %v677, 1.442695
    %v748 = vpow.pop %v747
    %v749 = vmul.f32 %v678, 1.442695
    %v750 = vpow.pop %v749
    %v751 = vmul.f32 %v679, 1.442695
    %v752 = vpow.pop %v751
    %v753 = vmul.f32 %v680, 1.442695
    %v754 = vpow.pop %v753
    %v755 = vmul.f32 %v681, 1.442695
    %v756 = vpow.pop %v755
    %v757 = vmul.f32 %v682, 1.442695
    %v758 = vpow.pop %v757
    %v759 = vmul.f32 %v683, 1.442695
    %v760 = vpow.pop %v759
    %v761 = vmul.f32 %v684, 1.442695
    %v762 = vpow.pop %v761
    %v763 = vmul.f32 %v685, 1.442695
    %v764 = vpow.pop %v763
    %v765 = vmul.f32 %v686, 1.442695
    %v766 = vpow.pop %v765
    %v767 = vmul.f32 %v687, 1.442695
    %v768 = vpow.pop %v767
    %v769 = vmul.f32 %v688, 1.442695
    %v770 = vpow.pop %v769
    %v771 = vmul.f32 %v689, 1.442695
    %v772 = vpow.pop %v771
    %v773 = vmul.f32 %v690, 1.442695
    %v774 = vpow.pop %v773
    %v775 = vmul.f32 %v691, 1.442695
    %v776 = vpow.pop %v775
    %v777 = vmul.f32 %v692, 1.442695
    %v778 = vpow.pop %v777
    %v779 = vmul.f32 %v693, 1.442695
    %v780 = vpow.pop %v779
    %v781 = vmul.f32 %v694, 1.442695
    %v782 = vpow.pop %v781
    %v783 = vmul.f32 %v695, 1.442695
    %v784 = vpow.pop %v783
    %v785 = vmul.f32 %v696, 1.442695
    %v786 = vpow.pop %v785
    %v787 = vmul.f32 %v697, 1.442695
    %v788 = vpow.pop %v787
    %v789 = vmul.f32 %v698, 1.442695
    %v790 = vpow.pop %v789
    %v791 = vmul.f32 %v699, 1.442695
    %v792 = vpow.pop %v791
    %v793 = vmul.f32 %v700, 1.442695
    %v794 = vpow.pop %v793
    %v795 = vmul.f32 %v701, 1.442695
    %v796 = vpow.pop %v795
    %v797 = vmul.f32 %v702, 1.442695
    %v798 = vpow.pop %v797
    %v799 = vmul.f32 %v703, 1.442695
    %v800 = vpow.pop %v799
    %v801 = vmul.f32 %v704, 1.442695
    %v802 = vpow.pop %v801
    %v803 = vmul.f32 %v705, 1.442695
    %v804 = vpow.pop %v803
    %v805 = vmul.f32 %v706, 1.442695
    %v806 = vpow.pop %v805
    %v807 = vmul.f32 %v707, 1.442695
    %v808 = vpow.pop %v807
    %v809 = vmul.f32 %v708, 1.442695
    %v810 = vpow.pop %v809
    %v811 = vmul.f32 %v709, 1.442695
    %v812 = vpow.pop %v811
    %v813 = vmul.f32 %v710, 1.442695
    %v814 = vpow.pop %v813
    %v815 = vmul.f32 %v711, 1.442695
    %v816 = vpow.pop %v815
    %v817 = vmul.f32 %v712, 1.442695
    %v818 = vpow.pop %v817
    %v819 = vmul.f32 %v713, 1.442695
    %v820 = vpow.pop %v819
    %v821 = vmul.f32 %v714, 1.442695
    %v822 = vpow.pop %v821
    %v823 = vmul.f32 %v715, 1.442695
    %v824 = vpow.pop %v823
    %v825 = vmul.f32 %v716, 1.442695
    %v826 = vpow.pop %v825
    %v827 = vmul.f32 %v717, 1.442695
    %v828 = vpow.pop %v827
    %v829 = vmul.f32 %v718, 1.442695
    %v830 = vpow.pop %v829
    %v831 = vmul.f32 %v719, 1.442695
    %v832 = vpow.pop %v831
    %v833 = vmul.f32 %v720, 1.442695
    %v834 = vpow.pop %v833
    %v835 = vmul.f32 %v721, 1.442695
    %v836 = vpow.pop %v835
    %v837 = vmul.f32 %v722, 1.442695
    %v838 = vpow.pop %v837
    %v839 = vmul.f32 %v723, 1.442695
    %v840 = vpow.pop %v839
    %v841 = vmul.f32 %v724, 1.442695
    %v842 = vpow.pop %v841
    %v843 = vmul.f32 %v725, 1.442695
    %v844 = vpow.pop %v843
    %v845 = vmul.f32 %v726, 1.442695
    %v846 = vpow.pop %v845
    %v847 = vmul.f32 %v727, 1.442695
    %v848 = vpow.pop %v847
    %v849 = vmul.f32 %v728, 1.442695
    %v850 = vpow.pop %v849
    %v851 = vmul.f32 %v729, 1.442695
    %v852 = vpow.pop %v851
    %v853 = vmul.f32 %v730, 1.442695
    %v854 = vpow.pop %v853
    %v855 = vmul.f32 %v731, 1.442695
    %v856 = vpow.pop %v855
    %v857 = vmul.f32 %v732, 1.442695
    %v858 = vpow.pop %v857
    %v859 = vmul.f32 %v733, 1.442695
    %v860 = vpow.pop %v859
    %v861 = vmul.f32 %v734, 1.442695
    %v862 = vpow.pop %v861
    %v863 = vpack.c.bf16 %v740, %v736
    %v864 = vpack.c.bf16 %v742, %v738
    %v865 = vpack.c.bf16 %v748, %v744
    %v866 = vpack.c.bf16 %v750, %v746
    %v867 = vpack.c.bf16 %v756, %v752
    %v868 = vpack.c.bf16 %v758, %v754
    %v869 = vpack.c.bf16 %v764, %v760
    %v870 = vpack.c.bf16 %v766, %v762
    %v871 = vpack.c.bf16 %v772, %v768
    %v872 = vpack.c.bf16 %v774, %v770
    %v873 = vpack.c.bf16 %v780, %v776
    %v874 = vpack.c.bf16 %v782, %v778
    %v875 = vpack.c.bf16 %v788, %v784
    %v876 = vpack.c.bf16 %v790, %v786
    %v877 = vpack.c.bf16 %v796, %v792
    %v878 = vpack.c.bf16 %v798, %v794
    %v879 = vpack.c.bf16 %v804, %v800
    %v880 = vpack.c.bf16 %v806, %v802
    %v881 = vpack.c.bf16 %v812, %v808
    %v882 = vpack.c.bf16 %v814, %v810
    %v883 = vpack.c.bf16 %v820, %v816
    %v884 = vpack.c.bf16 %v822, %v818
    %v885 = vpack.c.bf16 %v828, %v824
    %v886 = vpack.c.bf16 %v830, %v826
    %v887 = vpack.c.bf16 %v836, %v832
    %v888 = vpack.c.bf16 %v838, %v834
    %v889 = vpack.c.bf16 %v844, %v840
    %v890 = vpack.c.bf16 %v846, %v842
    %v891 = vpack.c.bf16 %v852, %v848
    %v892 = vpack.c.bf16 %v854, %v850
    %v893 = vpack.c.bf16 %v860, %v856
    %v894 = vpack.c.bf16 %v862, %v858
    %895 = vmatprep.subr.bf16.mxu0 %v878
    %896 = vmatpush1.bf16.xpose.msra.mxu0 %v877
    %897 = vmatprep.subr.bf16.mxu0 %v876
    %898 = vmatpush1.bf16.xpose.msra.mxu0 %v875
    %899 = vmatprep.subr.bf16.mxu0 %v874
    %900 = vmatpush1.bf16.xpose.msra.mxu0 %v873
    %901 = vmatprep.subr.bf16.mxu0 %v872
    %902 = vmatpush1.bf16.xpose.msra.mxu0 %v871
    %903 = vmatprep.subr.bf16.mxu0 %v870
    %904 = vmatpush1.bf16.xpose.msra.mxu0 %v869
    %905 = vmatprep.subr.bf16.mxu0 %v868
    %906 = vmatpush1.bf16.xpose.msra.mxu0 %v867
    %907 = vmatprep.subr.bf16.mxu0 %v866
    %908 = vmatpush1.bf16.xpose.msra.mxu0 %v865
    %909 = vmatprep.subr.bf16.mxu0 %v864
    %910 = vmatpush1.bf16.xpose.msra.mxu0 %v863
    %911 = vmatprep.subr.bf16.mxu0 %v894
    %912 = vmatpush2.bf16.xpose.msra.mxu0 %v893
    %913 = vmatprep.subr.bf16.mxu0 %v892
    %914 = vmatpush2.bf16.xpose.msra.mxu0 %v891
    %915 = vmatprep.subr.bf16.mxu0 %v890
    %916 = vmatpush2.bf16.xpose.msra.mxu0 %v889
    %917 = vmatprep.subr.bf16.mxu0 %v888
    %918 = vmatpush2.bf16.xpose.msra.mxu0 %v887
    %919 = vmatprep.subr.bf16.mxu0 %v886
    %920 = vmatpush2.bf16.xpose.msra.mxu0 %v885
    %921 = vmatprep.subr.bf16.mxu0 %v884
    %922 = vmatpush2.bf16.xpose.msra.mxu0 %v883
    %923 = vmatprep.subr.bf16.mxu0 %v882
    %924 = vmatpush2.bf16.xpose.msra.mxu0 %v881
    %925 = vmatprep.subr.bf16.mxu0 %v880
    %926 = vmatpush2.bf16.xpose.msra.mxu0 %v879
    %927 = vmatprep.mubr.bf16.mxu0 %v291
    %928 = vmatmul.mubr.bf16.gmra.mxu0 %v290
    %v929 = vpop.f32.mrf.mxu0
    %v930 = vadd.f32 0.0, %v929
    %v931 = vpop.f32.mrf.mxu0
    %v932 = vadd.f32 0.0, %v931
    %v933 = vpop.f32.mrf.mxu0
    %v934 = vadd.f32 0.0, %v933
    %v935 = vpop.f32.mrf.mxu0
    %v936 = vadd.f32 0.0, %v935
    %937 = vdwg.mxu0
    %v938 = vrcp.pop %v934
    %v939 = vrcp.pop %v936
    %v940 = vlaneseq
    %v941 = vshrl.u32 %v940, 7
    %v942 = vsub.s32 0, %v941
    %v943 = vrot.slane %v938, %v942
    %v944 = vlaneseq
    %v945 = vshrl.u32 %v944, 7
    %v946 = vsub.s32 0, %v945
    %v947 = vrot.slane %v939, %v946
    %v948 = vmul.f32 %v930, %v943
    %v949 = vmul.f32 %v932, %v947
    %v950 = vpack.c.bf16 %v948, %v948
    %v951 = vpack.c.bf16 %v949, %v949
    %v952 = vld [vmem:[#allocation10] sm:$0x3]
    %v954 = vsel %vm326, %v952, 0
    %v957 = vsel %vm375, %v950, 0
    %v960 = vsel %vm375, %v951, 0
    %962 = vmatprep.subr.bf16.mxu0 0
    %963 = vmatpush1.bf16.msra.mxu0 0
    %964 = vmatprep.subr.bf16.mxu0 0
    %965 = vmatpush1.bf16.msra.mxu0 0
    %966 = vmatprep.subr.bf16.mxu0 0
    %967 = vmatpush1.bf16.msra.mxu0 0
    %968 = vmatprep.subr.bf16.mxu0 0
    %969 = vmatpush1.bf16.msra.mxu0 0
    %970 = vmatprep.subr.bf16.mxu0 0
    %971 = vmatpush1.bf16.msra.mxu0 0
    %972 = vmatprep.subr.bf16.mxu0 0
    %973 = vmatpush1.bf16.msra.mxu0 0
    %974 = vmatprep.subr.bf16.mxu0 0
    %975 = vmatpush1.bf16.msra.mxu0 0
    %976 = vmatprep.subr.bf16.mxu0 %v960
    %977 = vmatpush1.bf16.msra.mxu0 %v957
    %978 = vmatprep.subr.bf16.mxu0 0
    %979 = vmatpush2.bf16.msra.mxu0 0
    %980 = vmatprep.subr.bf16.mxu0 0
    %981 = vmatpush2.bf16.msra.mxu0 0
    %982 = vmatprep.subr.bf16.mxu0 0
    %983 = vmatpush2.bf16.msra.mxu0 0
    %984 = vmatprep.subr.bf16.mxu0 0
    %985 = vmatpush2.bf16.msra.mxu0 0
    %986 = vmatprep.subr.bf16.mxu0 0
    %987 = vmatpush2.bf16.msra.mxu0 0
    %988 = vmatprep.subr.bf16.mxu0 0
    %989 = vmatpush2.bf16.msra.mxu0 0
    %990 = vmatprep.subr.bf16.mxu0 0
    %991 = vmatpush2.bf16.msra.mxu0 0
    %992 = vmatprep.subr.bf16.mxu0 0
    %993 = vmatpush2.bf16.msra.mxu0 0
    %994 = vmatprep.mubr.bf16.mxu0 0
    %995 = vmatmul.mubr.bf16.gmra.mxu0 %v954
    %v996 = vpop.f32.mrf.mxu0
    %v997 = vadd.f32 0.0, %v996
    %v998 = vpop.f32.mrf.mxu0
    %v999 = vadd.f32 0.0, %v998
    %v1000 = vpop.f32.mrf.mxu0
    %v1001 = vpop.f32.mrf.mxu0
    %1002 = vdwg.mxu0
    %1004 = vset.pattern.permute.xlu0 0
    %1005 = vperm.xlu0 %1004, %v134
    %v1006 = vpop.permute.xlu0 %1005
    %v1008 = vadd.f32 %v1006, %v997
    %v1009 = vadd.f32 %v1006, %v999
    %s1010 = scalar_lea.vmem %s1, 4
    %v1011 = vld [vmem:[%s1010] sm:$0xf]
    %s1012 = scalar_lea.vmem [#allocation5], 8
    %v1013 = vld [vmem:[%s1012] sm:$0xff]
    %1015 = vset.pattern.permute.xlu0 0
    %1016 = vperm.xlu0 %1015, %v1013
    %v1017 = vpop.permute.xlu0 %1016
    %v1020 = vsel %vm142, %v1011, 0
    %1022 = vmatprep.subr.bf16.mxu0 0
    %1023 = vmatpush1.bf16.msra.mxu0 0
    %1024 = vmatprep.subr.bf16.mxu0 0
    %1025 = vmatpush1.bf16.msra.mxu0 0
    %1026 = vmatprep.subr.bf16.mxu0 0
    %1027 = vmatpush1.bf16.msra.mxu0 0
    %1028 = vmatprep.subr.bf16.mxu0 0
    %1029 = vmatpush1.bf16.msra.mxu0 0
    %1030 = vmatprep.subr.bf16.mxu0 0
    %1031 = vmatpush1.bf16.msra.mxu0 0
    %1032 = vmatprep.subr.bf16.mxu0 0
    %1033 = vmatpush1.bf16.msra.mxu0 0
    %1034 = vmatprep.subr.bf16.mxu0 0
    %1035 = vmatpush1.bf16.msra.mxu0 0
    %1036 = vmatprep.subr.bf16.mxu0 %v151
    %1037 = vmatpush1.bf16.msra.mxu0 %v148
    %1038 = vmatprep.subr.bf16.mxu0 0
    %1039 = vmatpush2.bf16.msra.mxu0 0
    %1040 = vmatprep.subr.bf16.mxu0 0
    %1041 = vmatpush2.bf16.msra.mxu0 0
    %1042 = vmatprep.subr.bf16.mxu0 0
    %1043 = vmatpush2.bf16.msra.mxu0 0
    %1044 = vmatprep.subr.bf16.mxu0 0
    %1045 = vmatpush2.bf16.msra.mxu0 0
    %1046 = vmatprep.subr.bf16.mxu0 0
    %1047 = vmatpush2.bf16.msra.mxu0 0
    %1048 = vmatprep.subr.bf16.mxu0 0
    %1049 = vmatpush2.bf16.msra.mxu0 0
    %1050 = vmatprep.subr.bf16.mxu0 0
    %1051 = vmatpush2.bf16.msra.mxu0 0
    %1052 = vmatprep.subr.bf16.mxu0 0
    %1053 = vmatpush2.bf16.msra.mxu0 0
    %1054 = vmatprep.mubr.bf16.mxu0 0
    %1055 = vmatmul.mubr.bf16.gmra.mxu0 %v1020
    %v1056 = vpop.f32.mrf.mxu0
    %v1057 = vadd.f32 %v1017, %v1056
    %v1058 = vpop.f32.mrf.mxu0
    %v1059 = vadd.f32 %v1017, %v1058
    %v1060 = vpop.f32.mrf.mxu0
    %v1061 = vpop.f32.mrf.mxu0
    %1062 = vdwg.mxu0
    %v1063 = vmax.f32 %v1057, 0.0
    %v1064 = vmax.f32 %v1059, 0.0
    %s1065 = scalar_lea.vmem [#allocation7], 12
    %v1066 = vld [vmem:[%s1065] sm:$0xf]
    %v1067 = vld [vmem:[%s1065 + $0x4] sm:$0xf]
    %v1068 = vld [vmem:[%s1065 + $0x8] sm:$0x1]
    %s1069 = scalar_lea.vmem [#allocation8], 24
    %v1070 = vld [vmem:[%s1069] sm:$0xff]
    %v1071 = vld [vmem:[%s1069 + $0x8] sm:$0xff]
    %v1072 = vld [vmem:[%s1069 + $0x10] sm:$0x1]
    %1074 = vset.pattern.permute.xlu0 0
    %1075 = vperm.xlu0 %1074, %v1070
    %v1076 = vpop.permute.xlu0 %1075
    %1079 = vset.pattern.permute.xlu0 0
    %1080 = vperm.xlu0 %1079, %v1071
    %v1081 = vpop.permute.xlu0 %1080
    %1084 = vset.pattern.permute.xlu0 0
    %1085 = vperm.xlu0 %1084, %v1072
    %v1086 = vpop.permute.xlu0 %1085
    %v1091 = vunpack.c.l.b16 %v1066
    %v1092 = vunpack.c.l.b16 %v1067
    %v1093 = vunpack.c.l.b16 %v1068
    %v1094 = vpack.c.b16 %v1092, %v1091
    %v1095 = vpack.c.b16 %v1093, %v1093
    %v1097 = vsel %vm142, %v1094, 0
    %v1100 = vsel %vm142, %v1095, 0
    %v1103 = vsel %vm146, %v132, 0
    %v1106 = vsel %vm146, %v133, 0
    %1108 = vmatprep.subr.bf16.mxu0 0
    %1109 = vmatpush1.bf16.msra.mxu0 0
    %1110 = vmatprep.subr.bf16.mxu0 0
    %1111 = vmatpush1.bf16.msra.mxu0 0
    %1112 = vmatprep.subr.bf16.mxu0 0
    %1113 = vmatpush1.bf16.msra.mxu0 0
    %1114 = vmatprep.subr.bf16.mxu0 0
    %1115 = vmatpush1.bf16.msra.mxu0 0
    %1116 = vmatprep.subr.bf16.mxu0 0
    %1117 = vmatpush1.bf16.msra.mxu0 0
    %1118 = vmatprep.subr.bf16.mxu0 0
    %1119 = vmatpush1.bf16.msra.mxu0 0
    %1120 = vmatprep.subr.bf16.mxu0 0
    %1121 = vmatpush1.bf16.msra.mxu0 0
    %1122 = vmatprep.subr.bf16.mxu0 %v1106
    %1123 = vmatpush1.bf16.msra.mxu0 %v1103
    %1124 = vmatprep.subr.bf16.mxu0 0
    %1125 = vmatpush2.bf16.msra.mxu0 0
    %1126 = vmatprep.subr.bf16.mxu0 0
    %1127 = vmatpush2.bf16.msra.mxu0 0
    %1128 = vmatprep.subr.bf16.mxu0 0
    %1129 = vmatpush2.bf16.msra.mxu0 0
    %1130 = vmatprep.subr.bf16.mxu0 0
    %1131 = vmatpush2.bf16.msra.mxu0 0
    %1132 = vmatprep.subr.bf16.mxu0 0
    %1133 = vmatpush2.bf16.msra.mxu0 0
    %1134 = vmatprep.subr.bf16.mxu0 0
    %1135 = vmatpush2.bf16.msra.mxu0 0
    %1136 = vmatprep.subr.bf16.mxu0 0
    %1137 = vmatpush2.bf16.msra.mxu0 0
    %1138 = vmatprep.subr.bf16.mxu0 0
    %1139 = vmatpush2.bf16.msra.mxu0 0
    %1140 = vmatprep.mubr.bf16.mxu0 0
    %1141 = vmatmul.mubr.bf16.gmra.mxu0 %v1097
    %v1142 = vpop.f32.mrf.mxu0
    %v1143 = vadd.f32 %v1076, %v1142
    %v1144 = vpop.f32.mrf.mxu0
    %v1145 = vadd.f32 %v1076, %v1144
    %v1146 = vpop.f32.mrf.mxu0
    %v1147 = vadd.f32 %v1081, %v1146
    %v1148 = vpop.f32.mrf.mxu0
    %v1149 = vadd.f32 %v1081, %v1148
    %1150 = vmatprep.mubr.bf16.mxu0 0
    %1151 = vmatmul.mubr.bf16.gmra.mxu0 %v1100
    %v1152 = vpop.f32.mrf.mxu0
    %v1153 = vadd.f32 %v1086, %v1152
    %v1154 = vpop.f32.mrf.mxu0
    %v1155 = vadd.f32 %v1086, %v1154
    %v1156 = vpop.f32.mrf.mxu0
    %v1157 = vpop.f32.mrf.mxu0
    %1158 = vdwg.mxu0
    %v1159 = vmax.f32 %v1143, 0.0
    %v1160 = vmax.f32 %v1145, 0.0
    %v1161 = vmax.f32 %v1147, 0.0
    %v1162 = vmax.f32 %v1149, 0.0
    %v1163 = vmax.f32 %v1153, 0.0
    %v1164 = vmax.f32 %v1155, 0.0
    %v1165 = vpack.c.bf16 %v1159, %v1159
    %v1166 = vpack.c.bf16 %v1160, %v1160
    %v1167 = vpack.c.bf16 %v1163, %v1161
    %v1168 = vpack.c.bf16 %v1164, %v1162
    %v1169 = vpack.c.bf16 %v1063, %v1063
    %v1170 = vpack.c.bf16 %v1064, %v1064
    %1171 = vxpose.xlu0.c.b16.start [1/8] %v1169, 128
    %1172 = vxpose.xlu0.c.b16.cont [2/8] 0, 128
    %1173 = vxpose.xlu0.c.b16.cont [3/8] 0, 128
    %1174 = vxpose.xlu0.c.b16.cont [4/8] 0, 128
    %1175 = vxpose.xlu0.c.b16.cont [5/8] 0, 128
    %1176 = vxpose.xlu0.c.b16.cont [6/8] 0, 128
    %1177 = vxpose.xlu0.c.b16.cont [7/8] 0, 128
    %1178 = vxpose.xlu0.c.b16.end [8/8] 0, 128
    %v1179 = vpop.trf.xlu0
    %v1180 = vpop.trf.xlu0
    %v1181 = vpop.trf.xlu0
    %v1182 = vpop.trf.xlu0
    %v1183 = vpop.trf.xlu0
    %v1184 = vpop.trf.xlu0
    %v1185 = vpop.trf.xlu0
    %v1186 = vpop.trf.xlu0
    %1187 = vxpose.xlu0.c.b16.start [1/8] %v1170, 128
    %1188 = vxpose.xlu0.c.b16.cont [2/8] 0, 128
    %1189 = vxpose.xlu0.c.b16.cont [3/8] 0, 128
    %1190 = vxpose.xlu0.c.b16.cont [4/8] 0, 128
    %1191 = vxpose.xlu0.c.b16.cont [5/8] 0, 128
    %1192 = vxpose.xlu0.c.b16.cont [6/8] 0, 128
    %1193 = vxpose.xlu0.c.b16.cont [7/8] 0, 128
    %1194 = vxpose.xlu0.c.b16.end [8/8] 0, 128
    %v1195 = vpop.trf.xlu0
    %v1196 = vpop.trf.xlu0
    %v1197 = vpop.trf.xlu0
    %v1198 = vpop.trf.xlu0
    %v1199 = vpop.trf.xlu0
    %v1200 = vpop.trf.xlu0
    %v1201 = vpop.trf.xlu0
    %v1202 = vpop.trf.xlu0
    %v1204 = vsel %vm326, %v1179, 0
    %v1207 = vsel %vm326, %v1180, 0
    %v1210 = vsel %vm326, %v1181, 0
    %v1213 = vsel %vm326, %v1182, 0
    %v1216 = vsel %vm326, %v1183, 0
    %v1219 = vsel %vm326, %v1184, 0
    %v1222 = vsel %vm326, %v1185, 0
    %v1225 = vsel %vm326, %v1186, 0
    %v1228 = vsel %vm326, %v1195, 0
    %v1231 = vsel %vm326, %v1196, 0
    %v1234 = vsel %vm326, %v1197, 0
    %v1237 = vsel %vm326, %v1198, 0
    %v1240 = vsel %vm326, %v1199, 0
    %v1243 = vsel %vm326, %v1200, 0
    %v1246 = vsel %vm326, %v1201, 0
    %v1249 = vsel %vm326, %v1202, 0
    %v1252 = vsel %vm375, %v1165, 0
    %v1255 = vsel %vm375, %v1166, 0
    %1257 = vmatprep.subr.bf16.mxu0 0
    %1258 = vmatpush1.bf16.msra.mxu0 0
    %1259 = vmatprep.subr.bf16.mxu0 0
    %1260 = vmatpush1.bf16.msra.mxu0 0
    %1261 = vmatprep.subr.bf16.mxu0 0
    %1262 = vmatpush1.bf16.msra.mxu0 0
    %1263 = vmatprep.subr.bf16.mxu0 0
    %1264 = vmatpush1.bf16.msra.mxu0 0
    %1265 = vmatprep.subr.bf16.mxu0 0
    %1266 = vmatpush1.bf16.msra.mxu0 0
    %1267 = vmatprep.subr.bf16.mxu0 0
    %1268 = vmatpush1.bf16.msra.mxu0 0
    %1269 = vmatprep.subr.bf16.mxu0 0
    %1270 = vmatpush1.bf16.msra.mxu0 0
    %1271 = vmatprep.subr.bf16.mxu0 %v1255
    %1272 = vmatpush1.bf16.msra.mxu0 %v1252
    %1273 = vmatprep.subr.bf16.mxu0 0
    %1274 = vmatpush2.bf16.msra.mxu0 0
    %1275 = vmatprep.subr.bf16.mxu0 0
    %1276 = vmatpush2.bf16.msra.mxu0 0
    %1277 = vmatprep.subr.bf16.mxu0 0
    %1278 = vmatpush2.bf16.msra.mxu0 0
    %1279 = vmatprep.subr.bf16.mxu0 0
    %1280 = vmatpush2.bf16.msra.mxu0 0
    %1281 = vmatprep.subr.bf16.mxu0 0
    %1282 = vmatpush2.bf16.msra.mxu0 0
    %1283 = vmatprep.subr.bf16.mxu0 0
    %1284 = vmatpush2.bf16.msra.mxu0 0
    %1285 = vmatprep.subr.bf16.mxu0 0
    %1286 = vmatpush2.bf16.msra.mxu0 0
    %1287 = vmatprep.subr.bf16.mxu0 0
    %1288 = vmatpush2.bf16.msra.mxu0 0
    %1289 = vmatprep.mubr.bf16.mxu0 0
    %1290 = vmatmul.mubr.bf16.gmra.mxu0 %v1204
    %v1291 = vpop.f32.mrf.mxu0
    %v1292 = vadd.f32 0.0, %v1291
    %v1293 = vpop.f32.mrf.mxu0
    %v1294 = vadd.f32 0.0, %v1293
    %v1295 = vpop.f32.mrf.mxu0
    %v1296 = vadd.f32 0.0, %v1295
    %v1297 = vpop.f32.mrf.mxu0
    %v1298 = vadd.f32 0.0, %v1297
    %1299 = vmatprep.mubr.bf16.mxu0 0
    %1300 = vmatmul.mubr.bf16.gmra.mxu0 %v1207
    %v1301 = vpop.f32.mrf.mxu0
    %v1302 = vadd.f32 0.0, %v1301
    %v1303 = vpop.f32.mrf.mxu0
    %v1304 = vadd.f32 0.0, %v1303
    %v1305 = vpop.f32.mrf.mxu0
    %v1306 = vadd.f32 0.0, %v1305
    %v1307 = vpop.f32.mrf.mxu0
    %v1308 = vadd.f32 0.0, %v1307
    %1309 = vmatprep.mubr.bf16.mxu0 0
    %1310 = vmatmul.mubr.bf16.gmra.mxu0 %v1210
    %v1311 = vpop.f32.mrf.mxu0
    %v1312 = vadd.f32 0.0, %v1311
    %v1313 = vpop.f32.mrf.mxu0
    %v1314 = vadd.f32 0.0, %v1313
    %v1315 = vpop.f32.mrf.mxu0
    %v1316 = vadd.f32 0.0, %v1315
    %v1317 = vpop.f32.mrf.mxu0
    %v1318 = vadd.f32 0.0, %v1317
    %1319 = vmatprep.mubr.bf16.mxu0 0
    %1320 = vmatmul.mubr.bf16.gmra.mxu0 %v1213
    %v1321 = vpop.f32.mrf.mxu0
    %v1322 = vadd.f32 0.0, %v1321
    %v1323 = vpop.f32.mrf.mxu0
    %v1324 = vadd.f32 0.0, %v1323
    %v1325 = vpop.f32.mrf.mxu0
    %v1326 = vadd.f32 0.0, %v1325
    %v1327 = vpop.f32.mrf.mxu0
    %v1328 = vadd.f32 0.0, %v1327
    %1329 = vmatprep.mubr.bf16.mxu0 0
    %1330 = vmatmul.mubr.bf16.gmra.mxu0 %v1216
    %v1331 = vpop.f32.mrf.mxu0
    %v1332 = vadd.f32 0.0, %v1331
    %v1333 = vpop.f32.mrf.mxu0
    %v1334 = vadd.f32 0.0, %v1333
    %v1335 = vpop.f32.mrf.mxu0
    %v1336 = vadd.f32 0.0, %v1335
    %v1337 = vpop.f32.mrf.mxu0
    %v1338 = vadd.f32 0.0, %v1337
    %1339 = vmatprep.mubr.bf16.mxu0 0
    %1340 = vmatmul.mubr.bf16.gmra.mxu0 %v1219
    %v1341 = vpop.f32.mrf.mxu0
    %v1342 = vadd.f32 0.0, %v1341
    %v1343 = vpop.f32.mrf.mxu0
    %v1344 = vadd.f32 0.0, %v1343
    %v1345 = vpop.f32.mrf.mxu0
    %v1346 = vadd.f32 0.0, %v1345
    %v1347 = vpop.f32.mrf.mxu0
    %v1348 = vadd.f32 0.0, %v1347
    %1349 = vmatprep.mubr.bf16.mxu0 0
    %1350 = vmatmul.mubr.bf16.gmra.mxu0 %v1222
    %v1351 = vpop.f32.mrf.mxu0
    %v1352 = vadd.f32 0.0, %v1351
    %v1353 = vpop.f32.mrf.mxu0
    %v1354 = vadd.f32 0.0, %v1353
    %v1355 = vpop.f32.mrf.mxu0
    %v1356 = vadd.f32 0.0, %v1355
    %v1357 = vpop.f32.mrf.mxu0
    %v1358 = vadd.f32 0.0, %v1357
    %1359 = vmatprep.mubr.bf16.mxu0 0
    %1360 = vmatmul.mubr.bf16.gmra.mxu0 %v1225
    %v1361 = vpop.f32.mrf.mxu0
    %v1362 = vadd.f32 0.0, %v1361
    %v1363 = vpop.f32.mrf.mxu0
    %v1364 = vadd.f32 0.0, %v1363
    %v1365 = vpop.f32.mrf.mxu0
    %v1366 = vadd.f32 0.0, %v1365
    %v1367 = vpop.f32.mrf.mxu0
    %v1368 = vadd.f32 0.0, %v1367
    %1369 = vmatprep.mubr.bf16.mxu0 0
    %1370 = vmatmul.mubr.bf16.gmra.mxu0 %v1228
    %v1371 = vpop.f32.mrf.mxu0
    %v1372 = vadd.f32 0.0, %v1371
    %v1373 = vpop.f32.mrf.mxu0
    %v1374 = vadd.f32 0.0, %v1373
    %v1375 = vpop.f32.mrf.mxu0
    %v1376 = vadd.f32 0.0, %v1375
    %v1377 = vpop.f32.mrf.mxu0
    %v1378 = vadd.f32 0.0, %v1377
    %1379 = vmatprep.mubr.bf16.mxu0 0
    %1380 = vmatmul.mubr.bf16.gmra.mxu0 %v1231
    %v1381 = vpop.f32.mrf.mxu0
    %v1382 = vadd.f32 0.0, %v1381
    %v1383 = vpop.f32.mrf.mxu0
    %v1384 = vadd.f32 0.0, %v1383
    %v1385 = vpop.f32.mrf.mxu0
    %v1386 = vadd.f32 0.0, %v1385
    %v1387 = vpop.f32.mrf.mxu0
    %v1388 = vadd.f32 0.0, %v1387
    %1389 = vmatprep.mubr.bf16.mxu0 0
    %1390 = vmatmul.mubr.bf16.gmra.mxu0 %v1234
    %v1391 = vpop.f32.mrf.mxu0
    %v1392 = vadd.f32 0.0, %v1391
    %v1393 = vpop.f32.mrf.mxu0
    %v1394 = vadd.f32 0.0, %v1393
    %v1395 = vpop.f32.mrf.mxu0
    %v1396 = vadd.f32 0.0, %v1395
    %v1397 = vpop.f32.mrf.mxu0
    %v1398 = vadd.f32 0.0, %v1397
    %1399 = vmatprep.mubr.bf16.mxu0 0
    %1400 = vmatmul.mubr.bf16.gmra.mxu0 %v1237
    %v1401 = vpop.f32.mrf.mxu0
    %v1402 = vadd.f32 0.0, %v1401
    %v1403 = vpop.f32.mrf.mxu0
    %v1404 = vadd.f32 0.0, %v1403
    %v1405 = vpop.f32.mrf.mxu0
    %v1406 = vadd.f32 0.0, %v1405
    %v1407 = vpop.f32.mrf.mxu0
    %v1408 = vadd.f32 0.0, %v1407
    %1409 = vmatprep.mubr.bf16.mxu0 0
    %1410 = vmatmul.mubr.bf16.gmra.mxu0 %v1240
    %v1411 = vpop.f32.mrf.mxu0
    %v1412 = vadd.f32 0.0, %v1411
    %v1413 = vpop.f32.mrf.mxu0
    %v1414 = vadd.f32 0.0, %v1413
    %v1415 = vpop.f32.mrf.mxu0
    %v1416 = vadd.f32 0.0, %v1415
    %v1417 = vpop.f32.mrf.mxu0
    %v1418 = vadd.f32 0.0, %v1417
    %1419 = vmatprep.mubr.bf16.mxu0 0
    %1420 = vmatmul.mubr.bf16.gmra.mxu0 %v1243
    %v1421 = vpop.f32.mrf.mxu0
    %v1422 = vadd.f32 0.0, %v1421
    %v1423 = vpop.f32.mrf.mxu0
    %v1424 = vadd.f32 0.0, %v1423
    %v1425 = vpop.f32.mrf.mxu0
    %v1426 = vadd.f32 0.0, %v1425
    %v1427 = vpop.f32.mrf.mxu0
    %v1428 = vadd.f32 0.0, %v1427
    %1429 = vmatprep.mubr.bf16.mxu0 0
    %1430 = vmatmul.mubr.bf16.gmra.mxu0 %v1246
    %v1431 = vpop.f32.mrf.mxu0
    %v1432 = vadd.f32 0.0, %v1431
    %v1433 = vpop.f32.mrf.mxu0
    %v1434 = vadd.f32 0.0, %v1433
    %v1435 = vpop.f32.mrf.mxu0
    %v1436 = vadd.f32 0.0, %v1435
    %v1437 = vpop.f32.mrf.mxu0
    %v1438 = vadd.f32 0.0, %v1437
    %1439 = vmatprep.mubr.bf16.mxu0 0
    %1440 = vmatmul.mubr.bf16.gmra.mxu0 %v1249
    %v1441 = vpop.f32.mrf.mxu0
    %v1442 = vadd.f32 0.0, %v1441
    %v1443 = vpop.f32.mrf.mxu0
    %v1444 = vadd.f32 0.0, %v1443
    %v1445 = vpop.f32.mrf.mxu0
    %v1446 = vadd.f32 0.0, %v1445
    %v1447 = vpop.f32.mrf.mxu0
    %v1448 = vadd.f32 0.0, %v1447
    %1449 = vdwg.mxu0
    %v1450 = vmax.f32 %v1292, %v1294
    %1451 = vmax.xlane.f32.xlu0 %v1450
    %v1452 = vpop.xlane.xlu0 %1451
    %v1453 = vmax.f32 %v1296, %v1298
    %1454 = vmax.xlane.f32.xlu0 %v1453
    %v1455 = vpop.xlane.xlu0 %1454
    %v1456 = vmax.f32 %v1302, %v1304
    %1457 = vmax.xlane.f32.xlu0 %v1456
    %v1458 = vpop.xlane.xlu0 %1457
    %v1459 = vmax.f32 %v1306, %v1308
    %1460 = vmax.xlane.f32.xlu0 %v1459
    %v1461 = vpop.xlane.xlu0 %1460
    %v1462 = vmax.f32 %v1312, %v1314
    %1463 = vmax.xlane.f32.xlu0 %v1462
    %v1464 = vpop.xlane.xlu0 %1463
    %v1465 = vmax.f32 %v1316, %v1318
    %1466 = vmax.xlane.f32.xlu0 %v1465
    %v1467 = vpop.xlane.xlu0 %1466
    %v1468 = vmax.f32 %v1322, %v1324
    %1469 = vmax.xlane.f32.xlu0 %v1468
    %v1470 = vpop.xlane.xlu0 %1469
    %v1471 = vmax.f32 %v1326, %v1328
    %1472 = vmax.xlane.f32.xlu0 %v1471
    %v1473 = vpop.xlane.xlu0 %1472
    %v1474 = vmax.f32 %v1332, %v1334
    %1475 = vmax.xlane.f32.xlu0 %v1474
    %v1476 = vpop.xlane.xlu0 %1475
    %v1477 = vmax.f32 %v1336, %v1338
    %1478 = vmax.xlane.f32.xlu0 %v1477
    %v1479 = vpop.xlane.xlu0 %1478
    %v1480 = vmax.f32 %v1342, %v1344
    %1481 = vmax.xlane.f32.xlu0 %v1480
    %v1482 = vpop.xlane.xlu0 %1481
    %v1483 = vmax.f32 %v1346, %v1348
    %1484 = vmax.xlane.f32.xlu0 %v1483
    %v1485 = vpop.xlane.xlu0 %1484
    %v1486 = vmax.f32 %v1352, %v1354
    %1487 = vmax.xlane.f32.xlu0 %v1486
    %v1488 = vpop.xlane.xlu0 %1487
    %v1489 = vmax.f32 %v1356, %v1358
    %1490 = vmax.xlane.f32.xlu0 %v1489
    %v1491 = vpop.xlane.xlu0 %1490
    %v1492 = vmax.f32 %v1362, %v1364
    %1493 = vmax.xlane.f32.xlu0 %v1492
    %v1494 = vpop.xlane.xlu0 %1493
    %v1495 = vmax.f32 %v1366, %v1368
    %1496 = vmax.xlane.f32.xlu0 %v1495
    %v1497 = vpop.xlane.xlu0 %1496
    %v1498 = vmax.f32 %v1372, %v1374
    %1499 = vmax.xlane.f32.xlu0 %v1498
    %v1500 = vpop.xlane.xlu0 %1499
    %v1501 = vmax.f32 %v1376, %v1378
    %1502 = vmax.xlane.f32.xlu0 %v1501
    %v1503 = vpop.xlane.xlu0 %1502
    %v1504 = vmax.f32 %v1382, %v1384
    %1505 = vmax.xlane.f32.xlu0 %v1504
    %v1506 = vpop.xlane.xlu0 %1505
    %v1507 = vmax.f32 %v1386, %v1388
    %1508 = vmax.xlane.f32.xlu0 %v1507
    %v1509 = vpop.xlane.xlu0 %1508
    %v1510 = vmax.f32 %v1392, %v1394
    %1511 = vmax.xlane.f32.xlu0 %v1510
    %v1512 = vpop.xlane.xlu0 %1511
    %v1513 = vmax.f32 %v1396, %v1398
    %1514 = vmax.xlane.f32.xlu0 %v1513
    %v1515 = vpop.xlane.xlu0 %1514
    %v1516 = vmax.f32 %v1402, %v1404
    %1517 = vmax.xlane.f32.xlu0 %v1516
    %v1518 = vpop.xlane.xlu0 %1517
    %v1519 = vmax.f32 %v1406, %v1408
    %1520 = vmax.xlane.f32.xlu0 %v1519
    %v1521 = vpop.xlane.xlu0 %1520
    %v1522 = vmax.f32 %v1412, %v1414
    %1523 = vmax.xlane.f32.xlu0 %v1522
    %v1524 = vpop.xlane.xlu0 %1523
    %v1525 = vmax.f32 %v1416, %v1418
    %1526 = vmax.xlane.f32.xlu0 %v1525
    %v1527 = vpop.xlane.xlu0 %1526
    %v1528 = vmax.f32 %v1422, %v1424
    %1529 = vmax.xlane.f32.xlu0 %v1528
    %v1530 = vpop.xlane.xlu0 %1529
    %v1531 = vmax.f32 %v1426, %v1428
    %1532 = vmax.xlane.f32.xlu0 %v1531
    %v1533 = vpop.xlane.xlu0 %1532
    %v1534 = vmax.f32 %v1432, %v1434
    %1535 = vmax.xlane.f32.xlu0 %v1534
    %v1536 = vpop.xlane.xlu0 %1535
    %v1537 = vmax.f32 %v1436, %v1438
    %1538 = vmax.xlane.f32.xlu0 %v1537
    %v1539 = vpop.xlane.xlu0 %1538
    %v1540 = vmax.f32 %v1442, %v1444
    %1541 = vmax.xlane.f32.xlu0 %v1540
    %v1542 = vpop.xlane.xlu0 %1541
    %v1543 = vmax.f32 %v1446, %v1448
    %1544 = vmax.xlane.f32.xlu0 %v1543
    %v1545 = vpop.xlane.xlu0 %1544
    %v1546 = vsub.f32 %v1292, %v1452
    %v1547 = vsub.f32 %v1294, %v1452
    %v1548 = vsub.f32 %v1296, %v1455
    %v1549 = vsub.f32 %v1298, %v1455
    %v1550 = vsub.f32 %v1302, %v1458
    %v1551 = vsub.f32 %v1304, %v1458
    %v1552 = vsub.f32 %v1306, %v1461
    %v1553 = vsub.f32 %v1308, %v1461
    %v1554 = vsub.f32 %v1312, %v1464
    %v1555 = vsub.f32 %v1314, %v1464
    %v1556 = vsub.f32 %v1316, %v1467
    %v1557 = vsub.f32 %v1318, %v1467
    %v1558 = vsub.f32 %v1322, %v1470
    %v1559 = vsub.f32 %v1324, %v1470
    %v1560 = vsub.f32 %v1326, %v1473
    %v1561 = vsub.f32 %v1328, %v1473
    %v1562 = vsub.f32 %v1332, %v1476
    %v1563 = vsub.f32 %v1334, %v1476
    %v1564 = vsub.f32 %v1336, %v1479
    %v1565 = vsub.f32 %v1338, %v1479
    %v1566 = vsub.f32 %v1342, %v1482
    %v1567 = vsub.f32 %v1344, %v1482
    %v1568 = vsub.f32 %v1346, %v1485
    %v1569 = vsub.f32 %v1348, %v1485
    %v1570 = vsub.f32 %v1352, %v1488
    %v1571 = vsub.f32 %v1354, %v1488
    %v1572 = vsub.f32 %v1356, %v1491
    %v1573 = vsub.f32 %v1358, %v1491
    %v1574 = vsub.f32 %v1362, %v1494
    %v1575 = vsub.f32 %v1364, %v1494
    %v1576 = vsub.f32 %v1366, %v1497
    %v1577 = vsub.f32 %v1368, %v1497
    %v1578 = vsub.f32 %v1372, %v1500
    %v1579 = vsub.f32 %v1374, %v1500
    %v1580 = vsub.f32 %v1376, %v1503
    %v1581 = vsub.f32 %v1378, %v1503
    %v1582 = vsub.f32 %v1382, %v1506
    %v1583 = vsub.f32 %v1384, %v1506
    %v1584 = vsub.f32 %v1386, %v1509
    %v1585 = vsub.f32 %v1388, %v1509
    %v1586 = vsub.f32 %v1392, %v1512
    %v1587 = vsub.f32 %v1394, %v1512
    %v1588 = vsub.f32 %v1396, %v1515
    %v1589 = vsub.f32 %v1398, %v1515
    %v1590 = vsub.f32 %v1402, %v1518
    %v1591 = vsub.f32 %v1404, %v1518
    %v1592 = vsub.f32 %v1406, %v1521
    %v1593 = vsub.f32 %v1408, %v1521
    %v1594 = vsub.f32 %v1412, %v1524
    %v1595 = vsub.f32 %v1414, %v1524
    %v1596 = vsub.f32 %v1416, %v1527
    %v1597 = vsub.f32 %v1418, %v1527
    %v1598 = vsub.f32 %v1422, %v1530
    %v1599 = vsub.f32 %v1424, %v1530
    %v1600 = vsub.f32 %v1426, %v1533
    %v1601 = vsub.f32 %v1428, %v1533
    %v1602 = vsub.f32 %v1432, %v1536
    %v1603 = vsub.f32 %v1434, %v1536
    %v1604 = vsub.f32 %v1436, %v1539
    %v1605 = vsub.f32 %v1438, %v1539
    %v1606 = vsub.f32 %v1442, %v1542
    %v1607 = vsub.f32 %v1444, %v1542
    %v1608 = vsub.f32 %v1446, %v1545
    %v1609 = vsub.f32 %v1448, %v1545
    %v1610 = vmul.f32 %v1546, 1.442695
    %v1611 = vpow.pop %v1610
    %v1612 = vmul.f32 %v1547, 1.442695
    %v1613 = vpow.pop %v1612
    %v1614 = vmul.f32 %v1548, 1.442695
    %v1615 = vpow.pop %v1614
    %v1616 = vmul.f32 %v1549, 1.442695
    %v1617 = vpow.pop %v1616
    %v1618 = vmul.f32 %v1550, 1.442695
    %v1619 = vpow.pop %v1618
    %v1620 = vmul.f32 %v1551, 1.442695
    %v1621 = vpow.pop %v1620
    %v1622 = vmul.f32 %v1552, 1.442695
    %v1623 = vpow.pop %v1622
    %v1624 = vmul.f32 %v1553, 1.442695
    %v1625 = vpow.pop %v1624
    %v1626 = vmul.f32 %v1554, 1.442695
    %v1627 = vpow.pop %v1626
    %v1628 = vmul.f32 %v1555, 1.442695
    %v1629 = vpow.pop %v1628
    %v1630 = vmul.f32 %v1556, 1.442695
    %v1631 = vpow.pop %v1630
    %v1632 = vmul.f32 %v1557, 1.442695
    %v1633 = vpow.pop %v1632
    %v1634 = vmul.f32 %v1558, 1.442695
    %v1635 = vpow.pop %v1634
    %v1636 = vmul.f32 %v1559, 1.442695
    %v1637 = vpow.pop %v1636
    %v1638 = vmul.f32 %v1560, 1.442695
    %v1639 = vpow.pop %v1638
    %v1640 = vmul.f32 %v1561, 1.442695
    %v1641 = vpow.pop %v1640
    %v1642 = vmul.f32 %v1562, 1.442695
    %v1643 = vpow.pop %v1642
    %v1644 = vmul.f32 %v1563, 1.442695
    %v1645 = vpow.pop %v1644
    %v1646 = vmul.f32 %v1564, 1.442695
    %v1647 = vpow.pop %v1646
    %v1648 = vmul.f32 %v1565, 1.442695
    %v1649 = vpow.pop %v1648
    %v1650 = vmul.f32 %v1566, 1.442695
    %v1651 = vpow.pop %v1650
    %v1652 = vmul.f32 %v1567, 1.442695
    %v1653 = vpow.pop %v1652
    %v1654 = vmul.f32 %v1568, 1.442695
    %v1655 = vpow.pop %v1654
    %v1656 = vmul.f32 %v1569, 1.442695
    %v1657 = vpow.pop %v1656
    %v1658 = vmul.f32 %v1570, 1.442695
    %v1659 = vpow.pop %v1658
    %v1660 = vmul.f32 %v1571, 1.442695
    %v1661 = vpow.pop %v1660
    %v1662 = vmul.f32 %v1572, 1.442695
    %v1663 = vpow.pop %v1662
    %v1664 = vmul.f32 %v1573, 1.442695
    %v1665 = vpow.pop %v1664
    %v1666 = vmul.f32 %v1574, 1.442695
    %v1667 = vpow.pop %v1666
    %v1668 = vmul.f32 %v1575, 1.442695
    %v1669 = vpow.pop %v1668
    %v1670 = vmul.f32 %v1576, 1.442695
    %v1671 = vpow.pop %v1670
    %v1672 = vmul.f32 %v1577, 1.442695
    %v1673 = vpow.pop %v1672
    %v1674 = vmul.f32 %v1578, 1.442695
    %v1675 = vpow.pop %v1674
    %v1676 = vmul.f32 %v1579, 1.442695
    %v1677 = vpow.pop %v1676
    %v1678 = vmul.f32 %v1580, 1.442695
    %v1679 = vpow.pop %v1678
    %v1680 = vmul.f32 %v1581, 1.442695
    %v1681 = vpow.pop %v1680
    %v1682 = vmul.f32 %v1582, 1.442695
    %v1683 = vpow.pop %v1682
    %v1684 = vmul.f32 %v1583, 1.442695
    %v1685 = vpow.pop %v1684
    %v1686 = vmul.f32 %v1584, 1.442695
    %v1687 = vpow.pop %v1686
    %v1688 = vmul.f32 %v1585, 1.442695
    %v1689 = vpow.pop %v1688
    %v1690 = vmul.f32 %v1586, 1.442695
    %v1691 = vpow.pop %v1690
    %v1692 = vmul.f32 %v1587, 1.442695
    %v1693 = vpow.pop %v1692
    %v1694 = vmul.f32 %v1588, 1.442695
    %v1695 = vpow.pop %v1694
    %v1696 = vmul.f32 %v1589, 1.442695
    %v1697 = vpow.pop %v1696
    %v1698 = vmul.f32 %v1590, 1.442695
    %v1699 = vpow.pop %v1698
    %v1700 = vmul.f32 %v1591, 1.442695
    %v1701 = vpow.pop %v1700
    %v1702 = vmul.f32 %v1592, 1.442695
    %v1703 = vpow.pop %v1702
    %v1704 = vmul.f32 %v1593, 1.442695
    %v1705 = vpow.pop %v1704
    %v1706 = vmul.f32 %v1594, 1.442695
    %v1707 = vpow.pop %v1706
    %v1708 = vmul.f32 %v1595, 1.442695
    %v1709 = vpow.pop %v1708
    %v1710 = vmul.f32 %v1596, 1.442695
    %v1711 = vpow.pop %v1710
    %v1712 = vmul.f32 %v1597, 1.442695
    %v1713 = vpow.pop %v1712
    %v1714 = vmul.f32 %v1598, 1.442695
    %v1715 = vpow.pop %v1714
    %v1716 = vmul.f32 %v1599, 1.442695
    %v1717 = vpow.pop %v1716
    %v1718 = vmul.f32 %v1600, 1.442695
    %v1719 = vpow.pop %v1718
    %v1720 = vmul.f32 %v1601, 1.442695
    %v1721 = vpow.pop %v1720
    %v1722 = vmul.f32 %v1602, 1.442695
    %v1723 = vpow.pop %v1722
    %v1724 = vmul.f32 %v1603, 1.442695
    %v1725 = vpow.pop %v1724
    %v1726 = vmul.f32 %v1604, 1.442695
    %v1727 = vpow.pop %v1726
    %v1728 = vmul.f32 %v1605, 1.442695
    %v1729 = vpow.pop %v1728
    %v1730 = vmul.f32 %v1606, 1.442695
    %v1731 = vpow.pop %v1730
    %v1732 = vmul.f32 %v1607, 1.442695
    %v1733 = vpow.pop %v1732
    %v1734 = vmul.f32 %v1608, 1.442695
    %v1735 = vpow.pop %v1734
    %v1736 = vmul.f32 %v1609, 1.442695
    %v1737 = vpow.pop %v1736
    %v1738 = vpack.c.bf16 %v1615, %v1611
    %v1739 = vpack.c.bf16 %v1617, %v1613
    %v1740 = vpack.c.bf16 %v1623, %v1619
    %v1741 = vpack.c.bf16 %v1625, %v1621
    %v1742 = vpack.c.bf16 %v1631, %v1627
    %v1743 = vpack.c.bf16 %v1633, %v1629
    %v1744 = vpack.c.bf16 %v1639, %v1635
    %v1745 = vpack.c.bf16 %v1641, %v1637
    %v1746 = vpack.c.bf16 %v1647, %v1643
    %v1747 = vpack.c.bf16 %v1649, %v1645
    %v1748 = vpack.c.bf16 %v1655, %v1651
    %v1749 = vpack.c.bf16 %v1657, %v1653
    %v1750 = vpack.c.bf16 %v1663, %v1659
    %v1751 = vpack.c.bf16 %v1665, %v1661
    %v1752 = vpack.c.bf16 %v1671, %v1667
    %v1753 = vpack.c.bf16 %v1673, %v1669
    %v1754 = vpack.c.bf16 %v1679, %v1675
    %v1755 = vpack.c.bf16 %v1681, %v1677
    %v1756 = vpack.c.bf16 %v1687, %v1683
    %v1757 = vpack.c.bf16 %v1689, %v1685
    %v1758 = vpack.c.bf16 %v1695, %v1691
    %v1759 = vpack.c.bf16 %v1697, %v1693
    %v1760 = vpack.c.bf16 %v1703, %v1699
    %v1761 = vpack.c.bf16 %v1705, %v1701
    %v1762 = vpack.c.bf16 %v1711, %v1707
    %v1763 = vpack.c.bf16 %v1713, %v1709
    %v1764 = vpack.c.bf16 %v1719, %v1715
    %v1765 = vpack.c.bf16 %v1721, %v1717
    %v1766 = vpack.c.bf16 %v1727, %v1723
    %v1767 = vpack.c.bf16 %v1729, %v1725
    %v1768 = vpack.c.bf16 %v1735, %v1731
    %v1769 = vpack.c.bf16 %v1737, %v1733
    %1770 = vmatprep.subr.bf16.mxu0 %v1753
    %1771 = vmatpush1.bf16.xpose.msra.mxu0 %v1752
    %1772 = vmatprep.subr.bf16.mxu0 %v1751
    %1773 = vmatpush1.bf16.xpose.msra.mxu0 %v1750
    %1774 = vmatprep.subr.bf16.mxu0 %v1749
    %1775 = vmatpush1.bf16.xpose.msra.mxu0 %v1748
    %1776 = vmatprep.subr.bf16.mxu0 %v1747
    %1777 = vmatpush1.bf16.xpose.msra.mxu0 %v1746
    %1778 = vmatprep.subr.bf16.mxu0 %v1745
    %1779 = vmatpush1.bf16.xpose.msra.mxu0 %v1744
    %1780 = vmatprep.subr.bf16.mxu0 %v1743
    %1781 = vmatpush1.bf16.xpose.msra.mxu0 %v1742
    %1782 = vmatprep.subr.bf16.mxu0 %v1741
    %1783 = vmatpush1.bf16.xpose.msra.mxu0 %v1740
    %1784 = vmatprep.subr.bf16.mxu0 %v1739
    %1785 = vmatpush1.bf16.xpose.msra.mxu0 %v1738
    %1786 = vmatprep.subr.bf16.mxu0 %v1769
    %1787 = vmatpush2.bf16.xpose.msra.mxu0 %v1768
    %1788 = vmatprep.subr.bf16.mxu0 %v1767
    %1789 = vmatpush2.bf16.xpose.msra.mxu0 %v1766
    %1790 = vmatprep.subr.bf16.mxu0 %v1765
    %1791 = vmatpush2.bf16.xpose.msra.mxu0 %v1764
    %1792 = vmatprep.subr.bf16.mxu0 %v1763
    %1793 = vmatpush2.bf16.xpose.msra.mxu0 %v1762
    %1794 = vmatprep.subr.bf16.mxu0 %v1761
    %1795 = vmatpush2.bf16.xpose.msra.mxu0 %v1760
    %1796 = vmatprep.subr.bf16.mxu0 %v1759
    %1797 = vmatpush2.bf16.xpose.msra.mxu0 %v1758
    %1798 = vmatprep.subr.bf16.mxu0 %v1757
    %1799 = vmatpush2.bf16.xpose.msra.mxu0 %v1756
    %1800 = vmatprep.subr.bf16.mxu0 %v1755
    %1801 = vmatpush2.bf16.xpose.msra.mxu0 %v1754
    %1802 = vmatprep.mubr.bf16.mxu0 %v1168
    %1803 = vmatmul.mubr.bf16.gmra.mxu0 %v1167
    %v1804 = vpop.f32.mrf.mxu0
    %v1805 = vadd.f32 0.0, %v1804
    %v1806 = vpop.f32.mrf.mxu0
    %v1807 = vadd.f32 0.0, %v1806
    %v1808 = vpop.f32.mrf.mxu0
    %v1809 = vadd.f32 0.0, %v1808
    %v1810 = vpop.f32.mrf.mxu0
    %v1811 = vadd.f32 0.0, %v1810
    %1812 = vdwg.mxu0
    %v1813 = vrcp.pop %v1809
    %v1814 = vrcp.pop %v1811
    %v1815 = vlaneseq
    %v1816 = vshrl.u32 %v1815, 7
    %v1817 = vsub.s32 0, %v1816
    %v1818 = vrot.slane %v1813, %v1817
    %v1819 = vlaneseq
    %v1820 = vshrl.u32 %v1819, 7
    %v1821 = vsub.s32 0, %v1820
    %v1822 = vrot.slane %v1814, %v1821
    %v1823 = vmul.f32 %v1805, %v1818
    %v1824 = vmul.f32 %v1807, %v1822
    %v1825 = vpack.c.bf16 %v1823, %v1823
    %v1826 = vpack.c.bf16 %v1824, %v1824
    %s1827 = scalar_lea.vmem [#allocation10], 2
    %v1828 = vld [vmem:[%s1827] sm:$0x3]
    %v1830 = vsel %vm326, %v1828, 0
    %v1833 = vsel %vm375, %v1825, 0
    %v1836 = vsel %vm375, %v1826, 0
    %1838 = vmatprep.subr.bf16.mxu0 0
    %1839 = vmatpush1.bf16.msra.mxu0 0
    %1840 = vmatprep.subr.bf16.mxu0 0
    %1841 = vmatpush1.bf16.msra.mxu0 0
    %1842 = vmatprep.subr.bf16.mxu0 0
    %1843 = vmatpush1.bf16.msra.mxu0 0
    %1844 = vmatprep.subr.bf16.mxu0 0
    %1845 = vmatpush1.bf16.msra.mxu0 0
    %1846 = vmatprep.subr.bf16.mxu0 0
    %1847 = vmatpush1.bf16.msra.mxu0 0
    %1848 = vmatprep.subr.bf16.mxu0 0
    %1849 = vmatpush1.bf16.msra.mxu0 0
    %1850 = vmatprep.subr.bf16.mxu0 0
    %1851 = vmatpush1.bf16.msra.mxu0 0
    %1852 = vmatprep.subr.bf16.mxu0 %v1836
    %1853 = vmatpush1.bf16.msra.mxu0 %v1833
    %1854 = vmatprep.subr.bf16.mxu0 0
    %1855 = vmatpush2.bf16.msra.mxu0 0
    %1856 = vmatprep.subr.bf16.mxu0 0
    %1857 = vmatpush2.bf16.msra.mxu0 0
    %1858 = vmatprep.subr.bf16.mxu0 0
    %1859 = vmatpush2.bf16.msra.mxu0 0
    %1860 = vmatprep.subr.bf16.mxu0 0
    %1861 = vmatpush2.bf16.msra.mxu0 0
    %1862 = vmatprep.subr.bf16.mxu0 0
    %1863 = vmatpush2.bf16.msra.mxu0 0
    %1864 = vmatprep.subr.bf16.mxu0 0
    %1865 = vmatpush2.bf16.msra.mxu0 0
    %1866 = vmatprep.subr.bf16.mxu0 0
    %1867 = vmatpush2.bf16.msra.mxu0 0
    %1868 = vmatprep.subr.bf16.mxu0 0
    %1869 = vmatpush2.bf16.msra.mxu0 0
    %1870 = vmatprep.mubr.bf16.mxu0 0
    %1871 = vmatmul.mubr.bf16.gmra.mxu0 %v1830
    %v1872 = vpop.f32.mrf.mxu0
    %v1873 = vadd.f32 0.0, %v1872
    %v1874 = vpop.f32.mrf.mxu0
    %v1875 = vadd.f32 0.0, %v1874
    %v1876 = vpop.f32.mrf.mxu0
    %v1877 = vpop.f32.mrf.mxu0
    %1878 = vdwg.mxu0
    %v1879 = vadd.f32 %v1008, %v1873
    %v1880 = vadd.f32 %v1009, %v1875
    %v1881 = vld [vmem:[#allocation11] sm:$0x3]
    %s1882 = scalar_lea.vmem [#allocation11], 2
    %v1883 = vld [vmem:[%s1882] sm:$0x3]
    %v1884 = vpack.c.bf16 %v1879, %v1879
    %v1885 = vpack.c.bf16 %v1880, %v1880
    %v1887 = vsel %vm142, %v1883, 0
    %v1890 = vsel %vm146, %v1884, 0
    %v1893 = vsel %vm146, %v1885, 0
    %1895 = vmatprep.subr.bf16.mxu0 0
    %1896 = vmatpush1.bf16.msra.mxu0 0
    %1897 = vmatprep.subr.bf16.mxu0 0
    %1898 = vmatpush1.bf16.msra.mxu0 0
    %1899 = vmatprep.subr.bf16.mxu0 0
    %1900 = vmatpush1.bf16.msra.mxu0 0
    %1901 = vmatprep.subr.bf16.mxu0 0
    %1902 = vmatpush1.bf16.msra.mxu0 0
    %1903 = vmatprep.subr.bf16.mxu0 0
    %1904 = vmatpush1.bf16.msra.mxu0 0
    %1905 = vmatprep.subr.bf16.mxu0 0
    %1906 = vmatpush1.bf16.msra.mxu0 0
    %1907 = vmatprep.subr.bf16.mxu0 0
    %1908 = vmatpush1.bf16.msra.mxu0 0
    %1909 = vmatprep.subr.bf16.mxu0 %v1893
    %1910 = vmatpush1.bf16.msra.mxu0 %v1890
    %1911 = vmatprep.subr.bf16.mxu0 0
    %1912 = vmatpush2.bf16.msra.mxu0 0
    %1913 = vmatprep.subr.bf16.mxu0 0
    %1914 = vmatpush2.bf16.msra.mxu0 0
    %1915 = vmatprep.subr.bf16.mxu0 0
    %1916 = vmatpush2.bf16.msra.mxu0 0
    %1917 = vmatprep.subr.bf16.mxu0 0
    %1918 = vmatpush2.bf16.msra.mxu0 0
    %1919 = vmatprep.subr.bf16.mxu0 0
    %1920 = vmatpush2.bf16.msra.mxu0 0
    %1921 = vmatprep.subr.bf16.mxu0 0
    %1922 = vmatpush2.bf16.msra.mxu0 0
    %1923 = vmatprep.subr.bf16.mxu0 0
    %1924 = vmatpush2.bf16.msra.mxu0 0
    %1925 = vmatprep.subr.bf16.mxu0 0
    %1926 = vmatpush2.bf16.msra.mxu0 0
    %1927 = vmatprep.mubr.bf16.mxu0 0
    %1928 = vmatmul.mubr.bf16.gmra.mxu0 %v1887
    %v1929 = vpop.f32.mrf.mxu0
    %v1930 = vadd.f32 0.0, %v1929
    %v1931 = vpop.f32.mrf.mxu0
    %v1932 = vadd.f32 0.0, %v1931
    %v1933 = vpop.f32.mrf.mxu0
    %v1934 = vpop.f32.mrf.mxu0
    %1935 = vdwg.mxu0
    %v1937 = vsel %vm142, %v1881, 0
    %1939 = vmatprep.subr.bf16.mxu0 0
    %1940 = vmatpush1.bf16.msra.mxu0 0
    %1941 = vmatprep.subr.bf16.mxu0 0
    %1942 = vmatpush1.bf16.msra.mxu0 0
    %1943 = vmatprep.subr.bf16.mxu0 0
    %1944 = vmatpush1.bf16.msra.mxu0 0
    %1945 = vmatprep.subr.bf16.mxu0 0
    %1946 = vmatpush1.bf16.msra.mxu0 0
    %1947 = vmatprep.subr.bf16.mxu0 0
    %1948 = vmatpush1.bf16.msra.mxu0 0
    %1949 = vmatprep.subr.bf16.mxu0 0
    %1950 = vmatpush1.bf16.msra.mxu0 0
    %1951 = vmatprep.subr.bf16.mxu0 0
    %1952 = vmatpush1.bf16.msra.mxu0 0
    %1953 = vmatprep.subr.bf16.mxu0 %v151
    %1954 = vmatpush1.bf16.msra.mxu0 %v148
    %1955 = vmatprep.subr.bf16.mxu0 0
    %1956 = vmatpush2.bf16.msra.mxu0 0
    %1957 = vmatprep.subr.bf16.mxu0 0
    %1958 = vmatpush2.bf16.msra.mxu0 0
    %1959 = vmatprep.subr.bf16.mxu0 0
    %1960 = vmatpush2.bf16.msra.mxu0 0
    %1961 = vmatprep.subr.bf16.mxu0 0
    %1962 = vmatpush2.bf16.msra.mxu0 0
    %1963 = vmatprep.subr.bf16.mxu0 0
    %1964 = vmatpush2.bf16.msra.mxu0 0
    %1965 = vmatprep.subr.bf16.mxu0 0
    %1966 = vmatpush2.bf16.msra.mxu0 0
    %1967 = vmatprep.subr.bf16.mxu0 0
    %1968 = vmatpush2.bf16.msra.mxu0 0
    %1969 = vmatprep.subr.bf16.mxu0 0
    %1970 = vmatpush2.bf16.msra.mxu0 0
    %1971 = vmatprep.mubr.bf16.mxu0 0
    %1972 = vmatmul.mubr.bf16.gmra.mxu0 %v1937
    %v1973 = vpop.f32.mrf.mxu0
    %v1974 = vadd.f32 %v1930, %v1973
    %v1975 = vpop.f32.mrf.mxu0
    %v1976 = vadd.f32 %v1932, %v1975
    %v1977 = vpop.f32.mrf.mxu0
    %v1978 = vpop.f32.mrf.mxu0
    %1979 = vdwg.mxu0
    %v1980 = vld [vmem:[%s8] sm:$0xf]
    %1982 = vset.pattern.permute.xlu0 0
    %1983 = vperm.xlu0 %1982, %v1980
    %v1984 = vpop.permute.xlu0 %1983
    %v1986 = vadd.f32 %v1974, %v1984
    %v1987 = vadd.f32 %v1976, %v1984
    %v1988 = vmax.f32 %v1986, 0.0
    %v1989 = vmax.f32 %v1987, 0.0
    %v1990 = vld [vmem:[%s9] sm:$0x3]
    %v1991 = vld [vmem:[%s10] sm:$0xf]
    %1993 = vset.pattern.permute.xlu0 0
    %1994 = vperm.xlu0 %1993, %v1991
    %v1995 = vpop.permute.xlu0 %1994
    %v1998 = vsel %vm142, %v1990, 0
    %2000 = vmatprep.subr.bf16.mxu0 0
    %2001 = vmatpush1.bf16.msra.mxu0 0
    %2002 = vmatprep.subr.bf16.mxu0 0
    %2003 = vmatpush1.bf16.msra.mxu0 0
    %2004 = vmatprep.subr.bf16.mxu0 0
    %2005 = vmatpush1.bf16.msra.mxu0 0
    %2006 = vmatprep.subr.bf16.mxu0 0
    %2007 = vmatpush1.bf16.msra.mxu0 0
    %2008 = vmatprep.subr.bf16.mxu0 0
    %2009 = vmatpush1.bf16.msra.mxu0 0
    %2010 = vmatprep.subr.bf16.mxu0 0
    %2011 = vmatpush1.bf16.msra.mxu0 0
    %2012 = vmatprep.subr.bf16.mxu0 0
    %2013 = vmatpush1.bf16.msra.mxu0 0
    %2014 = vmatprep.subr.bf16.mxu0 %v1106
    %2015 = vmatpush1.bf16.msra.mxu0 %v1103
    %2016 = vmatprep.subr.bf16.mxu0 0
    %2017 = vmatpush2.bf16.msra.mxu0 0
    %2018 = vmatprep.subr.bf16.mxu0 0
    %2019 = vmatpush2.bf16.msra.mxu0 0
    %2020 = vmatprep.subr.bf16.mxu0 0
    %2021 = vmatpush2.bf16.msra.mxu0 0
    %2022 = vmatprep.subr.bf16.mxu0 0
    %2023 = vmatpush2.bf16.msra.mxu0 0
    %2024 = vmatprep.subr.bf16.mxu0 0
    %2025 = vmatpush2.bf16.msra.mxu0 0
    %2026 = vmatprep.subr.bf16.mxu0 0
    %2027 = vmatpush2.bf16.msra.mxu0 0
    %2028 = vmatprep.subr.bf16.mxu0 0
    %2029 = vmatpush2.bf16.msra.mxu0 0
    %2030 = vmatprep.subr.bf16.mxu0 0
    %2031 = vmatpush2.bf16.msra.mxu0 0
    %2032 = vmatprep.mubr.bf16.mxu0 0
    %2033 = vmatmul.mubr.bf16.gmra.mxu0 %v1998
    %v2034 = vpop.f32.mrf.mxu0
    %v2035 = vadd.f32 %v1995, %v2034
    %v2036 = vpop.f32.mrf.mxu0
    %v2037 = vadd.f32 %v1995, %v2036
    %v2038 = vpop.f32.mrf.mxu0
    %v2039 = vpop.f32.mrf.mxu0
    %2040 = vdwg.mxu0
    %v2041 = vmax.f32 %v2035, 0.0
    %v2042 = vmax.f32 %v2037, 0.0
    %v2045 = vrot.slane %v2041, 4
    %v2046 = vrot.slane %v2042, 4
    %v2049 = vsel %vm375, %v1988, %v2045
    %v2050 = vsel %vm375, %v1989, %v2046
    %2051 = vst [vmem:[#allocation13] sm:$0xff] %v2049
    %2052 = vst [vmem:[#allocation13 + $0x8] sm:$0xff] %v2050
    %s2053 = scalar_lea.vmem [#allocation2], 16
    %v2054 = vld [vmem:[%s2053] sm:$0xff]
    %v2055 = vld [vmem:[%s2053 + $0x8] sm:$0xff]
    %v2058 = vcombine.high %v2054, %v2054
    %v2059 = vcombine.high %v2055, %v2055
    %v2062 = vpack.c.bf16 %v2054, %v2054
    %v2063 = vpack.c.bf16 %v2058, %v2058
    %v2064 = vpack.c.bf16 %v2055, %v2055
    %v2065 = vpack.c.bf16 %v2059, %v2059
    %v2066 = vld [vmem:[%s6] sm:$0xf]
    %v2067 = vld [vmem:[%s1] sm:$0xf]
    %v2068 = vld [vmem:[#allocation5] sm:$0xff]
    %2070 = vset.pattern.permute.xlu0 0
    %2071 = vperm.xlu0 %2070, %v2068
    %v2072 = vpop.permute.xlu0 %2071
    %v2075 = vsel %vm142, %v2067, 0
    %v2078 = vsel %vm146, %v2062, 0
    %v2081 = vsel %vm146, %v2063, 0
    %2083 = vmatprep.subr.bf16.mxu0 0
    %2084 = vmatpush1.bf16.msra.mxu0 0
    %2085 = vmatprep.subr.bf16.mxu0 0
    %2086 = vmatpush1.bf16.msra.mxu0 0
    %2087 = vmatprep.subr.bf16.mxu0 0
    %2088 = vmatpush1.bf16.msra.mxu0 0
    %2089 = vmatprep.subr.bf16.mxu0 0
    %2090 = vmatpush1.bf16.msra.mxu0 0
    %2091 = vmatprep.subr.bf16.mxu0 0
    %2092 = vmatpush1.bf16.msra.mxu0 0
    %2093 = vmatprep.subr.bf16.mxu0 0
    %2094 = vmatpush1.bf16.msra.mxu0 0
    %2095 = vmatprep.subr.bf16.mxu0 0
    %2096 = vmatpush1.bf16.msra.mxu0 0
    %2097 = vmatprep.subr.bf16.mxu0 %v2081
    %2098 = vmatpush1.bf16.msra.mxu0 %v2078
    %2099 = vmatprep.subr.bf16.mxu0 0
    %2100 = vmatpush2.bf16.msra.mxu0 0
    %2101 = vmatprep.subr.bf16.mxu0 0
    %2102 = vmatpush2.bf16.msra.mxu0 0
    %2103 = vmatprep.subr.bf16.mxu0 0
    %2104 = vmatpush2.bf16.msra.mxu0 0
    %2105 = vmatprep.subr.bf16.mxu0 0
    %2106 = vmatpush2.bf16.msra.mxu0 0
    %2107 = vmatprep.subr.bf16.mxu0 0
    %2108 = vmatpush2.bf16.msra.mxu0 0
    %2109 = vmatprep.subr.bf16.mxu0 0
    %2110 = vmatpush2.bf16.msra.mxu0 0
    %2111 = vmatprep.subr.bf16.mxu0 0
    %2112 = vmatpush2.bf16.msra.mxu0 0
    %2113 = vmatprep.subr.bf16.mxu0 0
    %2114 = vmatpush2.bf16.msra.mxu0 0
    %2115 = vmatprep.mubr.bf16.mxu0 0
    %2116 = vmatmul.mubr.bf16.gmra.mxu0 %v2075
    %v2117 = vpop.f32.mrf.mxu0
    %v2118 = vadd.f32 %v2072, %v2117
    %v2119 = vpop.f32.mrf.mxu0
    %v2120 = vadd.f32 %v2072, %v2119
    %v2121 = vpop.f32.mrf.mxu0
    %v2122 = vpop.f32.mrf.mxu0
    %2123 = vdwg.mxu0
    %v2124 = vmax.f32 %v2118, 0.0
    %v2125 = vmax.f32 %v2120, 0.0
    %v2126 = vld [vmem:[#allocation7] sm:$0xf]
    %v2127 = vld [vmem:[#allocation7 + $0x4] sm:$0xf]
    %v2128 = vld [vmem:[#allocation7 + $0x8] sm:$0x1]
    %v2129 = vld [vmem:[#allocation8] sm:$0xff]
    %v2130 = vld [vmem:[#allocation8 + $0x8] sm:$0xff]
    %v2131 = vld [vmem:[#allocation8 + $0x10] sm:$0x1]
    %2133 = vset.pattern.permute.xlu0 0
    %2134 = vperm.xlu0 %2133, %v2129
    %v2135 = vpop.permute.xlu0 %2134
    %2138 = vset.pattern.permute.xlu0 0
    %2139 = vperm.xlu0 %2138, %v2130
    %v2140 = vpop.permute.xlu0 %2139
    %2143 = vset.pattern.permute.xlu0 0
    %2144 = vperm.xlu0 %2143, %v2131
    %v2145 = vpop.permute.xlu0 %2144
    %v2150 = vunpack.c.l.b16 %v2126
    %v2151 = vunpack.c.l.b16 %v2127
    %v2152 = vunpack.c.l.b16 %v2128
    %v2153 = vpack.c.b16 %v2151, %v2150
    %v2154 = vpack.c.b16 %v2152, %v2152
    %v2156 = vsel %vm142, %v2153, 0
    %v2159 = vsel %vm142, %v2154, 0
    %2161 = vmatprep.subr.bf16.mxu0 0
    %2162 = vmatpush1.bf16.msra.mxu0 0
    %2163 = vmatprep.subr.bf16.mxu0 0
    %2164 = vmatpush1.bf16.msra.mxu0 0
    %2165 = vmatprep.subr.bf16.mxu0 0
    %2166 = vmatpush1.bf16.msra.mxu0 0
    %2167 = vmatprep.subr.bf16.mxu0 0
    %2168 = vmatpush1.bf16.msra.mxu0 0
    %2169 = vmatprep.subr.bf16.mxu0 0
    %2170 = vmatpush1.bf16.msra.mxu0 0
    %2171 = vmatprep.subr.bf16.mxu0 0
    %2172 = vmatpush1.bf16.msra.mxu0 0
    %2173 = vmatprep.subr.bf16.mxu0 0
    %2174 = vmatpush1.bf16.msra.mxu0 0
    %2175 = vmatprep.subr.bf16.mxu0 %v2081
    %2176 = vmatpush1.bf16.msra.mxu0 %v2078
    %2177 = vmatprep.subr.bf16.mxu0 0
    %2178 = vmatpush2.bf16.msra.mxu0 0
    %2179 = vmatprep.subr.bf16.mxu0 0
    %2180 = vmatpush2.bf16.msra.mxu0 0
    %2181 = vmatprep.subr.bf16.mxu0 0
    %2182 = vmatpush2.bf16.msra.mxu0 0
    %2183 = vmatprep.subr.bf16.mxu0 0
    %2184 = vmatpush2.bf16.msra.mxu0 0
    %2185 = vmatprep.subr.bf16.mxu0 0
    %2186 = vmatpush2.bf16.msra.mxu0 0
    %2187 = vmatprep.subr.bf16.mxu0 0
    %2188 = vmatpush2.bf16.msra.mxu0 0
    %2189 = vmatprep.subr.bf16.mxu0 0
    %2190 = vmatpush2.bf16.msra.mxu0 0
    %2191 = vmatprep.subr.bf16.mxu0 0
    %2192 = vmatpush2.bf16.msra.mxu0 0
    %2193 = vmatprep.mubr.bf16.mxu0 0
    %2194 = vmatmul.mubr.bf16.gmra.mxu0 %v2156
    %v2195 = vpop.f32.mrf.mxu0
    %v2196 = vadd.f32 %v2135, %v2195
    %v2197 = vpop.f32.mrf.mxu0
    %v2198 = vadd.f32 %v2135, %v2197
    %v2199 = vpop.f32.mrf.mxu0
    %v2200 = vadd.f32 %v2140, %v2199
    %v2201 = vpop.f32.mrf.mxu0
    %v2202 = vadd.f32 %v2140, %v2201
    %2203 = vmatprep.mubr.bf16.mxu0 0
    %2204 = vmatmul.mubr.bf16.gmra.mxu0 %v2159
    %v2205 = vpop.f32.mrf.mxu0
    %v2206 = vadd.f32 %v2145, %v2205
    %v2207 = vpop.f32.mrf.mxu0
    %v2208 = vadd.f32 %v2145, %v2207
    %v2209 = vpop.f32.mrf.mxu0
    %v2210 = vpop.f32.mrf.mxu0
    %2211 = vdwg.mxu0
    %v2212 = vmax.f32 %v2196, 0.0
    %v2213 = vmax.f32 %v2198, 0.0
    %v2214 = vmax.f32 %v2200, 0.0
    %v2215 = vmax.f32 %v2202, 0.0
    %v2216 = vmax.f32 %v2206, 0.0
    %v2217 = vmax.f32 %v2208, 0.0
    %v2218 = vpack.c.bf16 %v2212, %v2212
    %v2219 = vpack.c.bf16 %v2213, %v2213
    %v2220 = vpack.c.bf16 %v2216, %v2214
    %v2221 = vpack.c.bf16 %v2217, %v2215
    %v2222 = vpack.c.bf16 %v2124, %v2124
    %v2223 = vpack.c.bf16 %v2125, %v2125
    %2224 = vxpose.xlu0.c.b16.start [1/8] %v2222, 128
    %2225 = vxpose.xlu0.c.b16.cont [2/8] 0, 128
    %2226 = vxpose.xlu0.c.b16.cont [3/8] 0, 128
    %2227 = vxpose.xlu0.c.b16.cont [4/8] 0, 128
    %2228 = vxpose.xlu0.c.b16.cont [5/8] 0, 128
    %2229 = vxpose.xlu0.c.b16.cont [6/8] 0, 128
    %2230 = vxpose.xlu0.c.b16.cont [7/8] 0, 128
    %2231 = vxpose.xlu0.c.b16.end [8/8] 0, 128
    %v2232 = vpop.trf.xlu0
    %v2233 = vpop.trf.xlu0
    %v2234 = vpop.trf.xlu0
    %v2235 = vpop.trf.xlu0
    %v2236 = vpop.trf.xlu0
    %v2237 = vpop.trf.xlu0
    %v2238 = vpop.trf.xlu0
    %v2239 = vpop.trf.xlu0
    %2240 = vxpose.xlu0.c.b16.start [1/8] %v2223, 128
    %2241 = vxpose.xlu0.c.b16.cont [2/8] 0, 128
    %2242 = vxpose.xlu0.c.b16.cont [3/8] 0, 128
    %2243 = vxpose.xlu0.c.b16.cont [4/8] 0, 128
    %2244 = vxpose.xlu0.c.b16.cont [5/8] 0, 128
    %2245 = vxpose.xlu0.c.b16.cont [6/8] 0, 128
    %2246 = vxpose.xlu0.c.b16.cont [7/8] 0, 128
    %2247 = vxpose.xlu0.c.b16.end [8/8] 0, 128
    %v2248 = vpop.trf.xlu0
    %v2249 = vpop.trf.xlu0
    %v2250 = vpop.trf.xlu0
    %v2251 = vpop.trf.xlu0
    %v2252 = vpop.trf.xlu0
    %v2253 = vpop.trf.xlu0
    %v2254 = vpop.trf.xlu0
    %v2255 = vpop.trf.xlu0
    %v2257 = vsel %vm326, %v2232, 0
    %v2260 = vsel %vm326, %v2233, 0
    %v2263 = vsel %vm326, %v2234, 0
    %v2266 = vsel %vm326, %v2235, 0
    %v2269 = vsel %vm326, %v2236, 0
    %v2272 = vsel %vm326, %v2237, 0
    %v2275 = vsel %vm326, %v2238, 0
    %v2278 = vsel %vm326, %v2239, 0
    %v2281 = vsel %vm326, %v2248, 0
    %v2284 = vsel %vm326, %v2249, 0
    %v2287 = vsel %vm326, %v2250, 0
    %v2290 = vsel %vm326, %v2251, 0
    %v2293 = vsel %vm326, %v2252, 0
    %v2296 = vsel %vm326, %v2253, 0
    %v2299 = vsel %vm326, %v2254, 0
    %v2302 = vsel %vm326, %v2255, 0
    %v2305 = vsel %vm375, %v2218, 0
    %v2308 = vsel %vm375, %v2219, 0
    %2310 = vmatprep.subr.bf16.mxu0 0
    %2311 = vmatpush1.bf16.msra.mxu0 0
    %2312 = vmatprep.subr.bf16.mxu0 0
    %2313 = vmatpush1.bf16.msra.mxu0 0
    %2314 = vmatprep.subr.bf16.mxu0 0
    %2315 = vmatpush1.bf16.msra.mxu0 0
    %2316 = vmatprep.subr.bf16.mxu0 0
    %2317 = vmatpush1.bf16.msra.mxu0 0
    %2318 = vmatprep.subr.bf16.mxu0 0
    %2319 = vmatpush1.bf16.msra.mxu0 0
    %2320 = vmatprep.subr.bf16.mxu0 0
    %2321 = vmatpush1.bf16.msra.mxu0 0
    %2322 = vmatprep.subr.bf16.mxu0 0
    %2323 = vmatpush1.bf16.msra.mxu0 0
    %2324 = vmatprep.subr.bf16.mxu0 %v2308
    %2325 = vmatpush1.bf16.msra.mxu0 %v2305
    %2326 = vmatprep.subr.bf16.mxu0 0
    %2327 = vmatpush2.bf16.msra.mxu0 0
    %2328 = vmatprep.subr.bf16.mxu0 0
    %2329 = vmatpush2.bf16.msra.mxu0 0
    %2330 = vmatprep.subr.bf16.mxu0 0
    %2331 = vmatpush2.bf16.msra.mxu0 0
    %2332 = vmatprep.subr.bf16.mxu0 0
    %2333 = vmatpush2.bf16.msra.mxu0 0
    %2334 = vmatprep.subr.bf16.mxu0 0
    %2335 = vmatpush2.bf16.msra.mxu0 0
    %2336 = vmatprep.subr.bf16.mxu0 0
    %2337 = vmatpush2.bf16.msra.mxu0 0
    %2338 = vmatprep.subr.bf16.mxu0 0
    %2339 = vmatpush2.bf16.msra.mxu0 0
    %2340 = vmatprep.subr.bf16.mxu0 0
    %2341 = vmatpush2.bf16.msra.mxu0 0
    %2342 = vmatprep.mubr.bf16.mxu0 0
    %2343 = vmatmul.mubr.bf16.gmra.mxu0 %v2257
    %v2344 = vpop.f32.mrf.mxu0
    %v2345 = vadd.f32 0.0, %v2344
    %v2346 = vpop.f32.mrf.mxu0
    %v2347 = vadd.f32 0.0, %v2346
    %v2348 = vpop.f32.mrf.mxu0
    %v2349 = vadd.f32 0.0, %v2348
    %v2350 = vpop.f32.mrf.mxu0
    %v2351 = vadd.f32 0.0, %v2350
    %2352 = vmatprep.mubr.bf16.mxu0 0
    %2353 = vmatmul.mubr.bf16.gmra.mxu0 %v2260
    %v2354 = vpop.f32.mrf.mxu0
    %v2355 = vadd.f32 0.0, %v2354
    %v2356 = vpop.f32.mrf.mxu0
    %v2357 = vadd.f32 0.0, %v2356
    %v2358 = vpop.f32.mrf.mxu0
    %v2359 = vadd.f32 0.0, %v2358
    %v2360 = vpop.f32.mrf.mxu0
    %v2361 = vadd.f32 0.0, %v2360
    %2362 = vmatprep.mubr.bf16.mxu0 0
    %2363 = vmatmul.mubr.bf16.gmra.mxu0 %v2263
    %v2364 = vpop.f32.mrf.mxu0
    %v2365 = vadd.f32 0.0, %v2364
    %v2366 = vpop.f32.mrf.mxu0
    %v2367 = vadd.f32 0.0, %v2366
    %v2368 = vpop.f32.mrf.mxu0
    %v2369 = vadd.f32 0.0, %v2368
    %v2370 = vpop.f32.mrf.mxu0
    %v2371 = vadd.f32 0.0, %v2370
    %2372 = vmatprep.mubr.bf16.mxu0 0
    %2373 = vmatmul.mubr.bf16.gmra.mxu0 %v2266
    %v2374 = vpop.f32.mrf.mxu0
    %v2375 = vadd.f32 0.0, %v2374
    %v2376 = vpop.f32.mrf.mxu0
    %v2377 = vadd.f32 0.0, %v2376
    %v2378 = vpop.f32.mrf.mxu0
    %v2379 = vadd.f32 0.0, %v2378
    %v2380 = vpop.f32.mrf.mxu0
    %v2381 = vadd.f32 0.0, %v2380
    %2382 = vmatprep.mubr.bf16.mxu0 0
    %2383 = vmatmul.mubr.bf16.gmra.mxu0 %v2269
    %v2384 = vpop.f32.mrf.mxu0
    %v2385 = vadd.f32 0.0, %v2384
    %v2386 = vpop.f32.mrf.mxu0
    %v2387 = vadd.f32 0.0, %v2386
    %v2388 = vpop.f32.mrf.mxu0
    %v2389 = vadd.f32 0.0, %v2388
    %v2390 = vpop.f32.mrf.mxu0
    %v2391 = vadd.f32 0.0, %v2390
    %2392 = vmatprep.mubr.bf16.mxu0 0
    %2393 = vmatmul.mubr.bf16.gmra.mxu0 %v2272
    %v2394 = vpop.f32.mrf.mxu0
    %v2395 = vadd.f32 0.0, %v2394
    %v2396 = vpop.f32.mrf.mxu0
    %v2397 = vadd.f32 0.0, %v2396
    %v2398 = vpop.f32.mrf.mxu0
    %v2399 = vadd.f32 0.0, %v2398
    %v2400 = vpop.f32.mrf.mxu0
    %v2401 = vadd.f32 0.0, %v2400
    %2402 = vmatprep.mubr.bf16.mxu0 0
    %2403 = vmatmul.mubr.bf16.gmra.mxu0 %v2275
    %v2404 = vpop.f32.mrf.mxu0
    %v2405 = vadd.f32 0.0, %v2404
    %v2406 = vpop.f32.mrf.mxu0
    %v2407 = vadd.f32 0.0, %v2406
    %v2408 = vpop.f32.mrf.mxu0
    %v2409 = vadd.f32 0.0, %v2408
    %v2410 = vpop.f32.mrf.mxu0
    %v2411 = vadd.f32 0.0, %v2410
    %2412 = vmatprep.mubr.bf16.mxu0 0
    %2413 = vmatmul.mubr.bf16.gmra.mxu0 %v2278
    %v2414 = vpop.f32.mrf.mxu0
    %v2415 = vadd.f32 0.0, %v2414
    %v2416 = vpop.f32.mrf.mxu0
    %v2417 = vadd.f32 0.0, %v2416
    %v2418 = vpop.f32.mrf.mxu0
    %v2419 = vadd.f32 0.0, %v2418
    %v2420 = vpop.f32.mrf.mxu0
    %v2421 = vadd.f32 0.0, %v2420
    %2422 = vmatprep.mubr.bf16.mxu0 0
    %2423 = vmatmul.mubr.bf16.gmra.mxu0 %v2281
    %v2424 = vpop.f32.mrf.mxu0
    %v2425 = vadd.f32 0.0, %v2424
    %v2426 = vpop.f32.mrf.mxu0
    %v2427 = vadd.f32 0.0, %v2426
    %v2428 = vpop.f32.mrf.mxu0
    %v2429 = vadd.f32 0.0, %v2428
    %v2430 = vpop.f32.mrf.mxu0
    %v2431 = vadd.f32 0.0, %v2430
    %2432 = vmatprep.mubr.bf16.mxu0 0
    %2433 = vmatmul.mubr.bf16.gmra.mxu0 %v2284
    %v2434 = vpop.f32.mrf.mxu0
    %v2435 = vadd.f32 0.0, %v2434
    %v2436 = vpop.f32.mrf.mxu0
    %v2437 = vadd.f32 0.0, %v2436
    %v2438 = vpop.f32.mrf.mxu0
    %v2439 = vadd.f32 0.0, %v2438
    %v2440 = vpop.f32.mrf.mxu0
    %v2441 = vadd.f32 0.0, %v2440
    %2442 = vmatprep.mubr.bf16.mxu0 0
    %2443 = vmatmul.mubr.bf16.gmra.mxu0 %v2287
    %v2444 = vpop.f32.mrf.mxu0
    %v2445 = vadd.f32 0.0, %v2444
    %v2446 = vpop.f32.mrf.mxu0
    %v2447 = vadd.f32 0.0, %v2446
    %v2448 = vpop.f32.mrf.mxu0
    %v2449 = vadd.f32 0.0, %v2448
    %v2450 = vpop.f32.mrf.mxu0
    %v2451 = vadd.f32 0.0, %v2450
    %2452 = vmatprep.mubr.bf16.mxu0 0
    %2453 = vmatmul.mubr.bf16.gmra.mxu0 %v2290
    %v2454 = vpop.f32.mrf.mxu0
    %v2455 = vadd.f32 0.0, %v2454
    %v2456 = vpop.f32.mrf.mxu0
    %v2457 = vadd.f32 0.0, %v2456
    %v2458 = vpop.f32.mrf.mxu0
    %v2459 = vadd.f32 0.0, %v2458
    %v2460 = vpop.f32.mrf.mxu0
    %v2461 = vadd.f32 0.0, %v2460
    %2462 = vmatprep.mubr.bf16.mxu0 0
    %2463 = vmatmul.mubr.bf16.gmra.mxu0 %v2293
    %v2464 = vpop.f32.mrf.mxu0
    %v2465 = vadd.f32 0.0, %v2464
    %v2466 = vpop.f32.mrf.mxu0
    %v2467 = vadd.f32 0.0, %v2466
    %v2468 = vpop.f32.mrf.mxu0
    %v2469 = vadd.f32 0.0, %v2468
    %v2470 = vpop.f32.mrf.mxu0
    %v2471 = vadd.f32 0.0, %v2470
    %2472 = vmatprep.mubr.bf16.mxu0 0
    %2473 = vmatmul.mubr.bf16.gmra.mxu0 %v2296
    %v2474 = vpop.f32.mrf.mxu0
    %v2475 = vadd.f32 0.0, %v2474
    %v2476 = vpop.f32.mrf.mxu0
    %v2477 = vadd.f32 0.0, %v2476
    %v2478 = vpop.f32.mrf.mxu0
    %v2479 = vadd.f32 0.0, %v2478
    %v2480 = vpop.f32.mrf.mxu0
    %v2481 = vadd.f32 0.0, %v2480
    %2482 = vmatprep.mubr.bf16.mxu0 0
    %2483 = vmatmul.mubr.bf16.gmra.mxu0 %v2299
    %v2484 = vpop.f32.mrf.mxu0
    %v2485 = vadd.f32 0.0, %v2484
    %v2486 = vpop.f32.mrf.mxu0
    %v2487 = vadd.f32 0.0, %v2486
    %v2488 = vpop.f32.mrf.mxu0
    %v2489 = vadd.f32 0.0, %v2488
    %v2490 = vpop.f32.mrf.mxu0
    %v2491 = vadd.f32 0.0, %v2490
    %2492 = vmatprep.mubr.bf16.mxu0 0
    %2493 = vmatmul.mubr.bf16.gmra.mxu0 %v2302
    %v2494 = vpop.f32.mrf.mxu0
    %v2495 = vadd.f32 0.0, %v2494
    %v2496 = vpop.f32.mrf.mxu0
    %v2497 = vadd.f32 0.0, %v2496
    %v2498 = vpop.f32.mrf.mxu0
    %v2499 = vadd.f32 0.0, %v2498
    %v2500 = vpop.f32.mrf.mxu0
    %v2501 = vadd.f32 0.0, %v2500
    %2502 = vdwg.mxu0
    %v2503 = vmax.f32 %v2345, %v2347
    %2504 = vmax.xlane.f32.xlu0 %v2503
    %v2505 = vpop.xlane.xlu0 %2504
    %v2506 = vmax.f32 %v2349, %v2351
    %2507 = vmax.xlane.f32.xlu0 %v2506
    %v2508 = vpop.xlane.xlu0 %2507
    %v2509 = vmax.f32 %v2355, %v2357
    %2510 = vmax.xlane.f32.xlu0 %v2509
    %v2511 = vpop.xlane.xlu0 %2510
    %v2512 = vmax.f32 %v2359, %v2361
    %2513 = vmax.xlane.f32.xlu0 %v2512
    %v2514 = vpop.xlane.xlu0 %2513
    %v2515 = vmax.f32 %v2365, %v2367
    %2516 = vmax.xlane.f32.xlu0 %v2515
    %v2517 = vpop.xlane.xlu0 %2516
    %v2518 = vmax.f32 %v2369, %v2371
    %2519 = vmax.xlane.f32.xlu0 %v2518
    %v2520 = vpop.xlane.xlu0 %2519
    %v2521 = vmax.f32 %v2375, %v2377
    %2522 = vmax.xlane.f32.xlu0 %v2521
    %v2523 = vpop.xlane.xlu0 %2522
    %v2524 = vmax.f32 %v2379, %v2381
    %2525 = vmax.xlane.f32.xlu0 %v2524
    %v2526 = vpop.xlane.xlu0 %2525
    %v2527 = vmax.f32 %v2385, %v2387
    %2528 = vmax.xlane.f32.xlu0 %v2527
    %v2529 = vpop.xlane.xlu0 %2528
    %v2530 = vmax.f32 %v2389, %v2391
    %2531 = vmax.xlane.f32.xlu0 %v2530
    %v2532 = vpop.xlane.xlu0 %2531
    %v2533 = vmax.f32 %v2395, %v2397
    %2534 = vmax.xlane.f32.xlu0 %v2533
    %v2535 = vpop.xlane.xlu0 %2534
    %v2536 = vmax.f32 %v2399, %v2401
    %2537 = vmax.xlane.f32.xlu0 %v2536
    %v2538 = vpop.xlane.xlu0 %2537
    %v2539 = vmax.f32 %v2405, %v2407
    %2540 = vmax.xlane.f32.xlu0 %v2539
    %v2541 = vpop.xlane.xlu0 %2540
    %v2542 = vmax.f32 %v2409, %v2411
    %2543 = vmax.xlane.f32.xlu0 %v2542
    %v2544 = vpop.xlane.xlu0 %2543
    %v2545 = vmax.f32 %v2415, %v2417
    %2546 = vmax.xlane.f32.xlu0 %v2545
    %v2547 = vpop.xlane.xlu0 %2546
    %v2548 = vmax.f32 %v2419, %v2421
    %2549 = vmax.xlane.f32.xlu0 %v2548
    %v2550 = vpop.xlane.xlu0 %2549
    %v2551 = vmax.f32 %v2425, %v2427
    %2552 = vmax.xlane.f32.xlu0 %v2551
    %v2553 = vpop.xlane.xlu0 %2552
    %v2554 = vmax.f32 %v2429, %v2431
    %2555 = vmax.xlane.f32.xlu0 %v2554
    %v2556 = vpop.xlane.xlu0 %2555
    %v2557 = vmax.f32 %v2435, %v2437
    %2558 = vmax.xlane.f32.xlu0 %v2557
    %v2559 = vpop.xlane.xlu0 %2558
    %v2560 = vmax.f32 %v2439, %v2441
    %2561 = vmax.xlane.f32.xlu0 %v2560
    %v2562 = vpop.xlane.xlu0 %2561
    %v2563 = vmax.f32 %v2445, %v2447
    %2564 = vmax.xlane.f32.xlu0 %v2563
    %v2565 = vpop.xlane.xlu0 %2564
    %v2566 = vmax.f32 %v2449, %v2451
    %2567 = vmax.xlane.f32.xlu0 %v2566
    %v2568 = vpop.xlane.xlu0 %2567
    %v2569 = vmax.f32 %v2455, %v2457
    %2570 = vmax.xlane.f32.xlu0 %v2569
    %v2571 = vpop.xlane.xlu0 %2570
    %v2572 = vmax.f32 %v2459, %v2461
    %2573 = vmax.xlane.f32.xlu0 %v2572
    %v2574 = vpop.xlane.xlu0 %2573
    %v2575 = vmax.f32 %v2465, %v2467
    %2576 = vmax.xlane.f32.xlu0 %v2575
    %v2577 = vpop.xlane.xlu0 %2576
    %v2578 = vmax.f32 %v2469, %v2471
    %2579 = vmax.xlane.f32.xlu0 %v2578
    %v2580 = vpop.xlane.xlu0 %2579
    %v2581 = vmax.f32 %v2475, %v2477
    %2582 = vmax.xlane.f32.xlu0 %v2581
    %v2583 = vpop.xlane.xlu0 %2582
    %v2584 = vmax.f32 %v2479, %v2481
    %2585 = vmax.xlane.f32.xlu0 %v2584
    %v2586 = vpop.xlane.xlu0 %2585
    %v2587 = vmax.f32 %v2485, %v2487
    %2588 = vmax.xlane.f32.xlu0 %v2587
    %v2589 = vpop.xlane.xlu0 %2588
    %v2590 = vmax.f32 %v2489, %v2491
    %2591 = vmax.xlane.f32.xlu0 %v2590
    %v2592 = vpop.xlane.xlu0 %2591
    %v2593 = vmax.f32 %v2495, %v2497
    %2594 = vmax.xlane.f32.xlu0 %v2593
    %v2595 = vpop.xlane.xlu0 %2594
    %v2596 = vmax.f32 %v2499, %v2501
    %2597 = vmax.xlane.f32.xlu0 %v2596
    %v2598 = vpop.xlane.xlu0 %2597
    %v2599 = vsub.f32 %v2345, %v2505
    %v2600 = vsub.f32 %v2347, %v2505
    %v2601 = vsub.f32 %v2349, %v2508
    %v2602 = vsub.f32 %v2351, %v2508
    %v2603 = vsub.f32 %v2355, %v2511
    %v2604 = vsub.f32 %v2357, %v2511
    %v2605 = vsub.f32 %v2359, %v2514
    %v2606 = vsub.f32 %v2361, %v2514
    %v2607 = vsub.f32 %v2365, %v2517
    %v2608 = vsub.f32 %v2367, %v2517
    %v2609 = vsub.f32 %v2369, %v2520
    %v2610 = vsub.f32 %v2371, %v2520
    %v2611 = vsub.f32 %v2375, %v2523
    %v2612 = vsub.f32 %v2377, %v2523
    %v2613 = vsub.f32 %v2379, %v2526
    %v2614 = vsub.f32 %v2381, %v2526
    %v2615 = vsub.f32 %v2385, %v2529
    %v2616 = vsub.f32 %v2387, %v2529
    %v2617 = vsub.f32 %v2389, %v2532
    %v2618 = vsub.f32 %v2391, %v2532
    %v2619 = vsub.f32 %v2395, %v2535
    %v2620 = vsub.f32 %v2397, %v2535
    %v2621 = vsub.f32 %v2399, %v2538
    %v2622 = vsub.f32 %v2401, %v2538
    %v2623 = vsub.f32 %v2405, %v2541
    %v2624 = vsub.f32 %v2407, %v2541
    %v2625 = vsub.f32 %v2409, %v2544
    %v2626 = vsub.f32 %v2411, %v2544
    %v2627 = vsub.f32 %v2415, %v2547
    %v2628 = vsub.f32 %v2417, %v2547
    %v2629 = vsub.f32 %v2419, %v2550
    %v2630 = vsub.f32 %v2421, %v2550
    %v2631 = vsub.f32 %v2425, %v2553
    %v2632 = vsub.f32 %v2427, %v2553
    %v2633 = vsub.f32 %v2429, %v2556
    %v2634 = vsub.f32 %v2431, %v2556
    %v2635 = vsub.f32 %v2435, %v2559
    %v2636 = vsub.f32 %v2437, %v2559
    %v2637 = vsub.f32 %v2439, %v2562
    %v2638 = vsub.f32 %v2441, %v2562
    %v2639 = vsub.f32 %v2445, %v2565
    %v2640 = vsub.f32 %v2447, %v2565
    %v2641 = vsub.f32 %v2449, %v2568
    %v2642 = vsub.f32 %v2451, %v2568
    %v2643 = vsub.f32 %v2455, %v2571
    %v2644 = vsub.f32 %v2457, %v2571
    %v2645 = vsub.f32 %v2459, %v2574
    %v2646 = vsub.f32 %v2461, %v2574
    %v2647 = vsub.f32 %v2465, %v2577
    %v2648 = vsub.f32 %v2467, %v2577
    %v2649 = vsub.f32 %v2469, %v2580
    %v2650 = vsub.f32 %v2471, %v2580
    %v2651 = vsub.f32 %v2475, %v2583
    %v2652 = vsub.f32 %v2477, %v2583
    %v2653 = vsub.f32 %v2479, %v2586
    %v2654 = vsub.f32 %v2481, %v2586
    %v2655 = vsub.f32 %v2485, %v2589
    %v2656 = vsub.f32 %v2487, %v2589
    %v2657 = vsub.f32 %v2489, %v2592
    %v2658 = vsub.f32 %v2491, %v2592
    %v2659 = vsub.f32 %v2495, %v2595
    %v2660 = vsub.f32 %v2497, %v2595
    %v2661 = vsub.f32 %v2499, %v2598
    %v2662 = vsub.f32 %v2501, %v2598
    %v2663 = vmul.f32 %v2599, 1.442695
    %v2664 = vpow.pop %v2663
    %v2665 = vmul.f32 %v2600, 1.442695
    %v2666 = vpow.pop %v2665
    %v2667 = vmul.f32 %v2601, 1.442695
    %v2668 = vpow.pop %v2667
    %v2669 = vmul.f32 %v2602, 1.442695
    %v2670 = vpow.pop %v2669
    %v2671 = vmul.f32 %v2603, 1.442695
    %v2672 = vpow.pop %v2671
    %v2673 = vmul.f32 %v2604, 1.442695
    %v2674 = vpow.pop %v2673
    %v2675 = vmul.f32 %v2605, 1.442695
    %v2676 = vpow.pop %v2675
    %v2677 = vmul.f32 %v2606, 1.442695
    %v2678 = vpow.pop %v2677
    %v2679 = vmul.f32 %v2607, 1.442695
    %v2680 = vpow.pop %v2679
    %v2681 = vmul.f32 %v2608, 1.442695
    %v2682 = vpow.pop %v2681
    %v2683 = vmul.f32 %v2609, 1.442695
    %v2684 = vpow.pop %v2683
    %v2685 = vmul.f32 %v2610, 1.442695
    %v2686 = vpow.pop %v2685
    %v2687 = vmul.f32 %v2611, 1.442695
    %v2688 = vpow.pop %v2687
    %v2689 = vmul.f32 %v2612, 1.442695
    %v2690 = vpow.pop %v2689
    %v2691 = vmul.f32 %v2613, 1.442695
    %v2692 = vpow.pop %v2691
    %v2693 = vmul.f32 %v2614, 1.442695
    %v2694 = vpow.pop %v2693
    %v2695 = vmul.f32 %v2615, 1.442695
    %v2696 = vpow.pop %v2695
    %v2697 = vmul.f32 %v2616, 1.442695
    %v2698 = vpow.pop %v2697
    %v2699 = vmul.f32 %v2617, 1.442695
    %v2700 = vpow.pop %v2699
    %v2701 = vmul.f32 %v2618, 1.442695
    %v2702 = vpow.pop %v2701
    %v2703 = vmul.f32 %v2619, 1.442695
    %v2704 = vpow.pop %v2703
    %v2705 = vmul.f32 %v2620, 1.442695
    %v2706 = vpow.pop %v2705
    %v2707 = vmul.f32 %v2621, 1.442695
    %v2708 = vpow.pop %v2707
    %v2709 = vmul.f32 %v2622, 1.442695
    %v2710 = vpow.pop %v2709
    %v2711 = vmul.f32 %v2623, 1.442695
    %v2712 = vpow.pop %v2711
    %v2713 = vmul.f32 %v2624, 1.442695
    %v2714 = vpow.pop %v2713
    %v2715 = vmul.f32 %v2625, 1.442695
    %v2716 = vpow.pop %v2715
    %v2717 = vmul.f32 %v2626, 1.442695
    %v2718 = vpow.pop %v2717
    %v2719 = vmul.f32 %v2627, 1.442695
    %v2720 = vpow.pop %v2719
    %v2721 = vmul.f32 %v2628, 1.442695
    %v2722 = vpow.pop %v2721
    %v2723 = vmul.f32 %v2629, 1.442695
    %v2724 = vpow.pop %v2723
    %v2725 = vmul.f32 %v2630, 1.442695
    %v2726 = vpow.pop %v2725
    %v2727 = vmul.f32 %v2631, 1.442695
    %v2728 = vpow.pop %v2727
    %v2729 = vmul.f32 %v2632, 1.442695
    %v2730 = vpow.pop %v2729
    %v2731 = vmul.f32 %v2633, 1.442695
    %v2732 = vpow.pop %v2731
    %v2733 = vmul.f32 %v2634, 1.442695
    %v2734 = vpow.pop %v2733
    %v2735 = vmul.f32 %v2635, 1.442695
    %v2736 = vpow.pop %v2735
    %v2737 = vmul.f32 %v2636, 1.442695
    %v2738 = vpow.pop %v2737
    %v2739 = vmul.f32 %v2637, 1.442695
    %v2740 = vpow.pop %v2739
    %v2741 = vmul.f32 %v2638, 1.442695
    %v2742 = vpow.pop %v2741
    %v2743 = vmul.f32 %v2639, 1.442695
    %v2744 = vpow.pop %v2743
    %v2745 = vmul.f32 %v2640, 1.442695
    %v2746 = vpow.pop %v2745
    %v2747 = vmul.f32 %v2641, 1.442695
    %v2748 = vpow.pop %v2747
    %v2749 = vmul.f32 %v2642, 1.442695
    %v2750 = vpow.pop %v2749
    %v2751 = vmul.f32 %v2643, 1.442695
    %v2752 = vpow.pop %v2751
    %v2753 = vmul.f32 %v2644, 1.442695
    %v2754 = vpow.pop %v2753
    %v2755 = vmul.f32 %v2645, 1.442695
    %v2756 = vpow.pop %v2755
    %v2757 = vmul.f32 %v2646, 1.442695
    %v2758 = vpow.pop %v2757
    %v2759 = vmul.f32 %v2647, 1.442695
    %v2760 = vpow.pop %v2759
    %v2761 = vmul.f32 %v2648, 1.442695
    %v2762 = vpow.pop %v2761
    %v2763 = vmul.f32 %v2649, 1.442695
    %v2764 = vpow.pop %v2763
    %v2765 = vmul.f32 %v2650, 1.442695
    %v2766 = vpow.pop %v2765
    %v2767 = vmul.f32 %v2651, 1.442695
    %v2768 = vpow.pop %v2767
    %v2769 = vmul.f32 %v2652, 1.442695
    %v2770 = vpow.pop %v2769
    %v2771 = vmul.f32 %v2653, 1.442695
    %v2772 = vpow.pop %v2771
    %v2773 = vmul.f32 %v2654, 1.442695
    %v2774 = vpow.pop %v2773
    %v2775 = vmul.f32 %v2655, 1.442695
    %v2776 = vpow.pop %v2775
    %v2777 = vmul.f32 %v2656, 1.442695
    %v2778 = vpow.pop %v2777
    %v2779 = vmul.f32 %v2657, 1.442695
    %v2780 = vpow.pop %v2779
    %v2781 = vmul.f32 %v2658, 1.442695
    %v2782 = vpow.pop %v2781
    %v2783 = vmul.f32 %v2659, 1.442695
    %v2784 = vpow.pop %v2783
    %v2785 = vmul.f32 %v2660, 1.442695
    %v2786 = vpow.pop %v2785
    %v2787 = vmul.f32 %v2661, 1.442695
    %v2788 = vpow.pop %v2787
    %v2789 = vmul.f32 %v2662, 1.442695
    %v2790 = vpow.pop %v2789
    %v2791 = vpack.c.bf16 %v2668, %v2664
    %v2792 = vpack.c.bf16 %v2670, %v2666
    %v2793 = vpack.c.bf16 %v2676, %v2672
    %v2794 = vpack.c.bf16 %v2678, %v2674
    %v2795 = vpack.c.bf16 %v2684, %v2680
    %v2796 = vpack.c.bf16 %v2686, %v2682
    %v2797 = vpack.c.bf16 %v2692, %v2688
    %v2798 = vpack.c.bf16 %v2694, %v2690
    %v2799 = vpack.c.bf16 %v2700, %v2696
    %v2800 = vpack.c.bf16 %v2702, %v2698
    %v2801 = vpack.c.bf16 %v2708, %v2704
    %v2802 = vpack.c.bf16 %v2710, %v2706
    %v2803 = vpack.c.bf16 %v2716, %v2712
    %v2804 = vpack.c.bf16 %v2718, %v2714
    %v2805 = vpack.c.bf16 %v2724, %v2720
    %v2806 = vpack.c.bf16 %v2726, %v2722
    %v2807 = vpack.c.bf16 %v2732, %v2728
    %v2808 = vpack.c.bf16 %v2734, %v2730
    %v2809 = vpack.c.bf16 %v2740, %v2736
    %v2810 = vpack.c.bf16 %v2742, %v2738
    %v2811 = vpack.c.bf16 %v2748, %v2744
    %v2812 = vpack.c.bf16 %v2750, %v2746
    %v2813 = vpack.c.bf16 %v2756, %v2752
    %v2814 = vpack.c.bf16 %v2758, %v2754
    %v2815 = vpack.c.bf16 %v2764, %v2760
    %v2816 = vpack.c.bf16 %v2766, %v2762
    %v2817 = vpack.c.bf16 %v2772, %v2768
    %v2818 = vpack.c.bf16 %v2774, %v2770
    %v2819 = vpack.c.bf16 %v2780, %v2776
    %v2820 = vpack.c.bf16 %v2782, %v2778
    %v2821 = vpack.c.bf16 %v2788, %v2784
    %v2822 = vpack.c.bf16 %v2790, %v2786
    %2823 = vmatprep.subr.bf16.mxu0 %v2806
    %2824 = vmatpush1.bf16.xpose.msra.mxu0 %v2805
    %2825 = vmatprep.subr.bf16.mxu0 %v2804
    %2826 = vmatpush1.bf16.xpose.msra.mxu0 %v2803
    %2827 = vmatprep.subr.bf16.mxu0 %v2802
    %2828 = vmatpush1.bf16.xpose.msra.mxu0 %v2801
    %2829 = vmatprep.subr.bf16.mxu0 %v2800
    %2830 = vmatpush1.bf16.xpose.msra.mxu0 %v2799
    %2831 = vmatprep.subr.bf16.mxu0 %v2798
    %2832 = vmatpush1.bf16.xpose.msra.mxu0 %v2797
    %2833 = vmatprep.subr.bf16.mxu0 %v2796
    %2834 = vmatpush1.bf16.xpose.msra.mxu0 %v2795
    %2835 = vmatprep.subr.bf16.mxu0 %v2794
    %2836 = vmatpush1.bf16.xpose.msra.mxu0 %v2793
    %2837 = vmatprep.subr.bf16.mxu0 %v2792
    %2838 = vmatpush1.bf16.xpose.msra.mxu0 %v2791
    %2839 = vmatprep.subr.bf16.mxu0 %v2822
    %2840 = vmatpush2.bf16.xpose.msra.mxu0 %v2821
    %2841 = vmatprep.subr.bf16.mxu0 %v2820
    %2842 = vmatpush2.bf16.xpose.msra.mxu0 %v2819
    %2843 = vmatprep.subr.bf16.mxu0 %v2818
    %2844 = vmatpush2.bf16.xpose.msra.mxu0 %v2817
    %2845 = vmatprep.subr.bf16.mxu0 %v2816
    %2846 = vmatpush2.bf16.xpose.msra.mxu0 %v2815
    %2847 = vmatprep.subr.bf16.mxu0 %v2814
    %2848 = vmatpush2.bf16.xpose.msra.mxu0 %v2813
    %2849 = vmatprep.subr.bf16.mxu0 %v2812
    %2850 = vmatpush2.bf16.xpose.msra.mxu0 %v2811
    %2851 = vmatprep.subr.bf16.mxu0 %v2810
    %2852 = vmatpush2.bf16.xpose.msra.mxu0 %v2809
    %2853 = vmatprep.subr.bf16.mxu0 %v2808
    %2854 = vmatpush2.bf16.xpose.msra.mxu0 %v2807
    %2855 = vmatprep.mubr.bf16.mxu0 %v2221
    %2856 = vmatmul.mubr.bf16.gmra.mxu0 %v2220
    %v2857 = vpop.f32.mrf.mxu0
    %v2858 = vadd.f32 0.0, %v2857
    %v2859 = vpop.f32.mrf.mxu0
    %v2860 = vadd.f32 0.0, %v2859
    %v2861 = vpop.f32.mrf.mxu0
    %v2862 = vadd.f32 0.0, %v2861
    %v2863 = vpop.f32.mrf.mxu0
    %v2864 = vadd.f32 0.0, %v2863
    %2865 = vdwg.mxu0
    %v2866 = vrcp.pop %v2862
    %v2867 = vrcp.pop %v2864
    %v2868 = vlaneseq
    %v2869 = vshrl.u32 %v2868, 7
    %v2870 = vsub.s32 0, %v2869
    %v2871 = vrot.slane %v2866, %v2870
    %v2872 = vlaneseq
    %v2873 = vshrl.u32 %v2872, 7
    %v2874 = vsub.s32 0, %v2873
    %v2875 = vrot.slane %v2867, %v2874
    %v2876 = vmul.f32 %v2858, %v2871
    %v2877 = vmul.f32 %v2860, %v2875
    %v2878 = vpack.c.bf16 %v2876, %v2876
    %v2879 = vpack.c.bf16 %v2877, %v2877
    %v2880 = vld [vmem:[#allocation10] sm:$0x3]
    %v2882 = vsel %vm326, %v2880, 0
    %v2885 = vsel %vm375, %v2878, 0
    %v2888 = vsel %vm375, %v2879, 0
    %2890 = vmatprep.subr.bf16.mxu0 0
    %2891 = vmatpush1.bf16.msra.mxu0 0
    %2892 = vmatprep.subr.bf16.mxu0 0
    %2893 = vmatpush1.bf16.msra.mxu0 0
    %2894 = vmatprep.subr.bf16.mxu0 0
    %2895 = vmatpush1.bf16.msra.mxu0 0
    %2896 = vmatprep.subr.bf16.mxu0 0
    %2897 = vmatpush1.bf16.msra.mxu0 0
    %2898 = vmatprep.subr.bf16.mxu0 0
    %2899 = vmatpush1.bf16.msra.mxu0 0
    %2900 = vmatprep.subr.bf16.mxu0 0
    %2901 = vmatpush1.bf16.msra.mxu0 0
    %2902 = vmatprep.subr.bf16.mxu0 0
    %2903 = vmatpush1.bf16.msra.mxu0 0
    %2904 = vmatprep.subr.bf16.mxu0 %v2888
    %2905 = vmatpush1.bf16.msra.mxu0 %v2885
    %2906 = vmatprep.subr.bf16.mxu0 0
    %2907 = vmatpush2.bf16.msra.mxu0 0
    %2908 = vmatprep.subr.bf16.mxu0 0
    %2909 = vmatpush2.bf16.msra.mxu0 0
    %2910 = vmatprep.subr.bf16.mxu0 0
    %2911 = vmatpush2.bf16.msra.mxu0 0
    %2912 = vmatprep.subr.bf16.mxu0 0
    %2913 = vmatpush2.bf16.msra.mxu0 0
    %2914 = vmatprep.subr.bf16.mxu0 0
    %2915 = vmatpush2.bf16.msra.mxu0 0
    %2916 = vmatprep.subr.bf16.mxu0 0
    %2917 = vmatpush2.bf16.msra.mxu0 0
    %2918 = vmatprep.subr.bf16.mxu0 0
    %2919 = vmatpush2.bf16.msra.mxu0 0
    %2920 = vmatprep.subr.bf16.mxu0 0
    %2921 = vmatpush2.bf16.msra.mxu0 0
    %2922 = vmatprep.mubr.bf16.mxu0 0
    %2923 = vmatmul.mubr.bf16.gmra.mxu0 %v2882
    %v2924 = vpop.f32.mrf.mxu0
    %v2925 = vadd.f32 0.0, %v2924
    %v2926 = vpop.f32.mrf.mxu0
    %v2927 = vadd.f32 0.0, %v2926
    %v2928 = vpop.f32.mrf.mxu0
    %v2929 = vpop.f32.mrf.mxu0
    %2930 = vdwg.mxu0
    %2932 = vset.pattern.permute.xlu0 0
    %2933 = vperm.xlu0 %2932, %v2066
    %v2934 = vpop.permute.xlu0 %2933
    %v2936 = vadd.f32 %v2934, %v2925
    %v2937 = vadd.f32 %v2934, %v2927
    %v2938 = vld [vmem:[%s1010] sm:$0xf]
    %v2939 = vld [vmem:[%s1012] sm:$0xff]
    %2941 = vset.pattern.permute.xlu0 0
    %2942 = vperm.xlu0 %2941, %v2939
    %v2943 = vpop.permute.xlu0 %2942
    %v2946 = vsel %vm142, %v2938, 0
    %2948 = vmatprep.subr.bf16.mxu0 0
    %2949 = vmatpush1.bf16.msra.mxu0 0
    %2950 = vmatprep.subr.bf16.mxu0 0
    %2951 = vmatpush1.bf16.msra.mxu0 0
    %2952 = vmatprep.subr.bf16.mxu0 0
    %2953 = vmatpush1.bf16.msra.mxu0 0
    %2954 = vmatprep.subr.bf16.mxu0 0
    %2955 = vmatpush1.bf16.msra.mxu0 0
    %2956 = vmatprep.subr.bf16.mxu0 0
    %2957 = vmatpush1.bf16.msra.mxu0 0
    %2958 = vmatprep.subr.bf16.mxu0 0
    %2959 = vmatpush1.bf16.msra.mxu0 0
    %2960 = vmatprep.subr.bf16.mxu0 0
    %2961 = vmatpush1.bf16.msra.mxu0 0
    %2962 = vmatprep.subr.bf16.mxu0 %v2081
    %2963 = vmatpush1.bf16.msra.mxu0 %v2078
    %2964 = vmatprep.subr.bf16.mxu0 0
    %2965 = vmatpush2.bf16.msra.mxu0 0
    %2966 = vmatprep.subr.bf16.mxu0 0
    %2967 = vmatpush2.bf16.msra.mxu0 0
    %2968 = vmatprep.subr.bf16.mxu0 0
    %2969 = vmatpush2.bf16.msra.mxu0 0
    %2970 = vmatprep.subr.bf16.mxu0 0
    %2971 = vmatpush2.bf16.msra.mxu0 0
    %2972 = vmatprep.subr.bf16.mxu0 0
    %2973 = vmatpush2.bf16.msra.mxu0 0
    %2974 = vmatprep.subr.bf16.mxu0 0
    %2975 = vmatpush2.bf16.msra.mxu0 0
    %2976 = vmatprep.subr.bf16.mxu0 0
    %2977 = vmatpush2.bf16.msra.mxu0 0
    %2978 = vmatprep.subr.bf16.mxu0 0
    %2979 = vmatpush2.bf16.msra.mxu0 0
    %2980 = vmatprep.mubr.bf16.mxu0 0
    %2981 = vmatmul.mubr.bf16.gmra.mxu0 %v2946
    %v2982 = vpop.f32.mrf.mxu0
    %v2983 = vadd.f32 %v2943, %v2982
    %v2984 = vpop.f32.mrf.mxu0
    %v2985 = vadd.f32 %v2943, %v2984
    %v2986 = vpop.f32.mrf.mxu0
    %v2987 = vpop.f32.mrf.mxu0
    %2988 = vdwg.mxu0
    %v2989 = vmax.f32 %v2983, 0.0
    %v2990 = vmax.f32 %v2985, 0.0
    %v2991 = vld [vmem:[%s1065] sm:$0xf]
    %v2992 = vld [vmem:[%s1065 + $0x4] sm:$0xf]
    %v2993 = vld [vmem:[%s1065 + $0x8] sm:$0x1]
    %v2994 = vld [vmem:[%s1069] sm:$0xff]
    %v2995 = vld [vmem:[%s1069 + $0x8] sm:$0xff]
    %v2996 = vld [vmem:[%s1069 + $0x10] sm:$0x1]
    %2998 = vset.pattern.permute.xlu0 0
    %2999 = vperm.xlu0 %2998, %v2994
    %v3000 = vpop.permute.xlu0 %2999
    %3003 = vset.pattern.permute.xlu0 0
    %3004 = vperm.xlu0 %3003, %v2995
    %v3005 = vpop.permute.xlu0 %3004
    %3008 = vset.pattern.permute.xlu0 0
    %3009 = vperm.xlu0 %3008, %v2996
    %v3010 = vpop.permute.xlu0 %3009
    %v3015 = vunpack.c.l.b16 %v2991
    %v3016 = vunpack.c.l.b16 %v2992
    %v3017 = vunpack.c.l.b16 %v2993
    %v3018 = vpack.c.b16 %v3016, %v3015
    %v3019 = vpack.c.b16 %v3017, %v3017
    %v3021 = vsel %vm142, %v3018, 0
    %v3024 = vsel %vm142, %v3019, 0
    %v3027 = vsel %vm146, %v2064, 0
    %v3030 = vsel %vm146, %v2065, 0
    %3032 = vmatprep.subr.bf16.mxu0 0
    %3033 = vmatpush1.bf16.msra.mxu0 0
    %3034 = vmatprep.subr.bf16.mxu0 0
    %3035 = vmatpush1.bf16.msra.mxu0 0
    %3036 = vmatprep.subr.bf16.mxu0 0
    %3037 = vmatpush1.bf16.msra.mxu0 0
    %3038 = vmatprep.subr.bf16.mxu0 0
    %3039 = vmatpush1.bf16.msra.mxu0 0
    %3040 = vmatprep.subr.bf16.mxu0 0
    %3041 = vmatpush1.bf16.msra.mxu0 0
    %3042 = vmatprep.subr.bf16.mxu0 0
    %3043 = vmatpush1.bf16.msra.mxu0 0
    %3044 = vmatprep.subr.bf16.mxu0 0
    %3045 = vmatpush1.bf16.msra.mxu0 0
    %3046 = vmatprep.subr.bf16.mxu0 %v3030
    %3047 = vmatpush1.bf16.msra.mxu0 %v3027
    %3048 = vmatprep.subr.bf16.mxu0 0
    %3049 = vmatpush2.bf16.msra.mxu0 0
    %3050 = vmatprep.subr.bf16.mxu0 0
    %3051 = vmatpush2.bf16.msra.mxu0 0
    %3052 = vmatprep.subr.bf16.mxu0 0
    %3053 = vmatpush2.bf16.msra.mxu0 0
    %3054 = vmatprep.subr.bf16.mxu0 0
    %3055 = vmatpush2.bf16.msra.mxu0 0
    %3056 = vmatprep.subr.bf16.mxu0 0
    %3057 = vmatpush2.bf16.msra.mxu0 0
    %3058 = vmatprep.subr.bf16.mxu0 0
    %3059 = vmatpush2.bf16.msra.mxu0 0
    %3060 = vmatprep.subr.bf16.mxu0 0
    %3061 = vmatpush2.bf16.msra.mxu0 0
    %3062 = vmatprep.subr.bf16.mxu0 0
    %3063 = vmatpush2.bf16.msra.mxu0 0
    %3064 = vmatprep.mubr.bf16.mxu0 0
    %3065 = vmatmul.mubr.bf16.gmra.mxu0 %v3021
    %v3066 = vpop.f32.mrf.mxu0
    %v3067 = vadd.f32 %v3000, %v3066
    %v3068 = vpop.f32.mrf.mxu0
    %v3069 = vadd.f32 %v3000, %v3068
    %v3070 = vpop.f32.mrf.mxu0
    %v3071 = vadd.f32 %v3005, %v3070
    %v3072 = vpop.f32.mrf.mxu0
    %v3073 = vadd.f32 %v3005, %v3072
    %3074 = vmatprep.mubr.bf16.mxu0 0
    %3075 = vmatmul.mubr.bf16.gmra.mxu0 %v3024
    %v3076 = vpop.f32.mrf.mxu0
    %v3077 = vadd.f32 %v3010, %v3076
    %v3078 = vpop.f32.mrf.mxu0
    %v3079 = vadd.f32 %v3010, %v3078
    %v3080 = vpop.f32.mrf.mxu0
    %v3081 = vpop.f32.mrf.mxu0
    %3082 = vdwg.mxu0
    %v3083 = vmax.f32 %v3067, 0.0
    %v3084 = vmax.f32 %v3069, 0.0
    %v3085 = vmax.f32 %v3071, 0.0
    %v3086 = vmax.f32 %v3073, 0.0
    %v3087 = vmax.f32 %v3077, 0.0
    %v3088 = vmax.f32 %v3079, 0.0
    %v3089 = vpack.c.bf16 %v3083, %v3083
    %v3090 = vpack.c.bf16 %v3084, %v3084
    %v3091 = vpack.c.bf16 %v3087, %v3085
    %v3092 = vpack.c.bf16 %v3088, %v3086
    %v3093 = vpack.c.bf16 %v2989, %v2989
    %v3094 = vpack.c.bf16 %v2990, %v2990
    %3095 = vxpose.xlu0.c.b16.start [1/8] %v3093, 128
    %3096 = vxpose.xlu0.c.b16.cont [2/8] 0, 128
    %3097 = vxpose.xlu0.c.b16.cont [3/8] 0, 128
    %3098 = vxpose.xlu0.c.b16.cont [4/8] 0, 128
    %3099 = vxpose.xlu0.c.b16.cont [5/8] 0, 128
    %3100 = vxpose.xlu0.c.b16.cont [6/8] 0, 128
    %3101 = vxpose.xlu0.c.b16.cont [7/8] 0, 128
    %3102 = vxpose.xlu0.c.b16.end [8/8] 0, 128
    %v3103 = vpop.trf.xlu0
    %v3104 = vpop.trf.xlu0
    %v3105 = vpop.trf.xlu0
    %v3106 = vpop.trf.xlu0
    %v3107 = vpop.trf.xlu0
    %v3108 = vpop.trf.xlu0
    %v3109 = vpop.trf.xlu0
    %v3110 = vpop.trf.xlu0
    %3111 = vxpose.xlu0.c.b16.start [1/8] %v3094, 128
    %3112 = vxpose.xlu0.c.b16.cont [2/8] 0, 128
    %3113 = vxpose.xlu0.c.b16.cont [3/8] 0, 128
    %3114 = vxpose.xlu0.c.b16.cont [4/8] 0, 128
    %3115 = vxpose.xlu0.c.b16.cont [5/8] 0, 128
    %3116 = vxpose.xlu0.c.b16.cont [6/8] 0, 128
    %3117 = vxpose.xlu0.c.b16.cont [7/8] 0, 128
    %3118 = vxpose.xlu0.c.b16.end [8/8] 0, 128
    %v3119 = vpop.trf.xlu0
    %v3120 = vpop.trf.xlu0
    %v3121 = vpop.trf.xlu0
    %v3122 = vpop.trf.xlu0
    %v3123 = vpop.trf.xlu0
    %v3124 = vpop.trf.xlu0
    %v3125 = vpop.trf.xlu0
    %v3126 = vpop.trf.xlu0
    %v3128 = vsel %vm326, %v3103, 0
    %v3131 = vsel %vm326, %v3104, 0
    %v3134 = vsel %vm326, %v3105, 0
    %v3137 = vsel %vm326, %v3106, 0
    %v3140 = vsel %vm326, %v3107, 0
    %v3143 = vsel %vm326, %v3108, 0
    %v3146 = vsel %vm326, %v3109, 0
    %v3149 = vsel %vm326, %v3110, 0
    %v3152 = vsel %vm326, %v3119, 0
    %v3155 = vsel %vm326, %v3120, 0
    %v3158 = vsel %vm326, %v3121, 0
    %v3161 = vsel %vm326, %v3122, 0
    %v3164 = vsel %vm326, %v3123, 0
    %v3167 = vsel %vm326, %v3124, 0
    %v3170 = vsel %vm326, %v3125, 0
    %v3173 = vsel %vm326, %v3126, 0
    %v3176 = vsel %vm375, %v3089, 0
    %v3179 = vsel %vm375, %v3090, 0
    %3181 = vmatprep.subr.bf16.mxu0 0
    %3182 = vmatpush1.bf16.msra.mxu0 0
    %3183 = vmatprep.subr.bf16.mxu0 0
    %3184 = vmatpush1.bf16.msra.mxu0 0
    %3185 = vmatprep.subr.bf16.mxu0 0
    %3186 = vmatpush1.bf16.msra.mxu0 0
    %3187 = vmatprep.subr.bf16.mxu0 0
    %3188 = vmatpush1.bf16.msra.mxu0 0
    %3189 = vmatprep.subr.bf16.mxu0 0
    %3190 = vmatpush1.bf16.msra.mxu0 0
    %3191 = vmatprep.subr.bf16.mxu0 0
    %3192 = vmatpush1.bf16.msra.mxu0 0
    %3193 = vmatprep.subr.bf16.mxu0 0
    %3194 = vmatpush1.bf16.msra.mxu0 0
    %3195 = vmatprep.subr.bf16.mxu0 %v3179
    %3196 = vmatpush1.bf16.msra.mxu0 %v3176
    %3197 = vmatprep.subr.bf16.mxu0 0
    %3198 = vmatpush2.bf16.msra.mxu0 0
    %3199 = vmatprep.subr.bf16.mxu0 0
    %3200 = vmatpush2.bf16.msra.mxu0 0
    %3201 = vmatprep.subr.bf16.mxu0 0
    %3202 = vmatpush2.bf16.msra.mxu0 0
    %3203 = vmatprep.subr.bf16.mxu0 0
    %3204 = vmatpush2.bf16.msra.mxu0 0
    %3205 = vmatprep.subr.bf16.mxu0 0
    %3206 = vmatpush2.bf16.msra.mxu0 0
    %3207 = vmatprep.subr.bf16.mxu0 0
    %3208 = vmatpush2.bf16.msra.mxu0 0
    %3209 = vmatprep.subr.bf16.mxu0 0
    %3210 = vmatpush2.bf16.msra.mxu0 0
    %3211 = vmatprep.subr.bf16.mxu0 0
    %3212 = vmatpush2.bf16.msra.mxu0 0
    %3213 = vmatprep.mubr.bf16.mxu0 0
    %3214 = vmatmul.mubr.bf16.gmra.mxu0 %v3128
    %v3215 = vpop.f32.mrf.mxu0
    %v3216 = vadd.f32 0.0, %v3215
    %v3217 = vpop.f32.mrf.mxu0
    %v3218 = vadd.f32 0.0, %v3217
    %v3219 = vpop.f32.mrf.mxu0
    %v3220 = vadd.f32 0.0, %v3219
    %v3221 = vpop.f32.mrf.mxu0
    %v3222 = vadd.f32 0.0, %v3221
    %3223 = vmatprep.mubr.bf16.mxu0 0
    %3224 = vmatmul.mubr.bf16.gmra.mxu0 %v3131
    %v3225 = vpop.f32.mrf.mxu0
    %v3226 = vadd.f32 0.0, %v3225
    %v3227 = vpop.f32.mrf.mxu0
    %v3228 = vadd.f32 0.0, %v3227
    %v3229 = vpop.f32.mrf.mxu0
    %v3230 = vadd.f32 0.0, %v3229
    %v3231 = vpop.f32.mrf.mxu0
    %v3232 = vadd.f32 0.0, %v3231
    %3233 = vmatprep.mubr.bf16.mxu0 0
    %3234 = vmatmul.mubr.bf16.gmra.mxu0 %v3134
    %v3235 = vpop.f32.mrf.mxu0
    %v3236 = vadd.f32 0.0, %v3235
    %v3237 = vpop.f32.mrf.mxu0
    %v3238 = vadd.f32 0.0, %v3237
    %v3239 = vpop.f32.mrf.mxu0
    %v3240 = vadd.f32 0.0, %v3239
    %v3241 = vpop.f32.mrf.mxu0
    %v3242 = vadd.f32 0.0, %v3241
    %3243 = vmatprep.mubr.bf16.mxu0 0
    %3244 = vmatmul.mubr.bf16.gmra.mxu0 %v3137
    %v3245 = vpop.f32.mrf.mxu0
    %v3246 = vadd.f32 0.0, %v3245
    %v3247 = vpop.f32.mrf.mxu0
    %v3248 = vadd.f32 0.0, %v3247
    %v3249 = vpop.f32.mrf.mxu0
    %v3250 = vadd.f32 0.0, %v3249
    %v3251 = vpop.f32.mrf.mxu0
    %v3252 = vadd.f32 0.0, %v3251
    %3253 = vmatprep.mubr.bf16.mxu0 0
    %3254 = vmatmul.mubr.bf16.gmra.mxu0 %v3140
    %v3255 = vpop.f32.mrf.mxu0
    %v3256 = vadd.f32 0.0, %v3255
    %v3257 = vpop.f32.mrf.mxu0
    %v3258 = vadd.f32 0.0, %v3257
    %v3259 = vpop.f32.mrf.mxu0
    %v3260 = vadd.f32 0.0, %v3259
    %v3261 = vpop.f32.mrf.mxu0
    %v3262 = vadd.f32 0.0, %v3261
    %3263 = vmatprep.mubr.bf16.mxu0 0
    %3264 = vmatmul.mubr.bf16.gmra.mxu0 %v3143
    %v3265 = vpop.f32.mrf.mxu0
    %v3266 = vadd.f32 0.0, %v3265
    %v3267 = vpop.f32.mrf.mxu0
    %v3268 = vadd.f32 0.0, %v3267
    %v3269 = vpop.f32.mrf.mxu0
    %v3270 = vadd.f32 0.0, %v3269
    %v3271 = vpop.f32.mrf.mxu0
    %v3272 = vadd.f32 0.0, %v3271
    %3273 = vmatprep.mubr.bf16.mxu0 0
    %3274 = vmatmul.mubr.bf16.gmra.mxu0 %v3146
    %v3275 = vpop.f32.mrf.mxu0
    %v3276 = vadd.f32 0.0, %v3275
    %v3277 = vpop.f32.mrf.mxu0
    %v3278 = vadd.f32 0.0, %v3277
    %v3279 = vpop.f32.mrf.mxu0
    %v3280 = vadd.f32 0.0, %v3279
    %v3281 = vpop.f32.mrf.mxu0
    %v3282 = vadd.f32 0.0, %v3281
    %3283 = vmatprep.mubr.bf16.mxu0 0
    %3284 = vmatmul.mubr.bf16.gmra.mxu0 %v3149
    %v3285 = vpop.f32.mrf.mxu0
    %v3286 = vadd.f32 0.0, %v3285
    %v3287 = vpop.f32.mrf.mxu0
    %v3288 = vadd.f32 0.0, %v3287
    %v3289 = vpop.f32.mrf.mxu0
    %v3290 = vadd.f32 0.0, %v3289
    %v3291 = vpop.f32.mrf.mxu0
    %v3292 = vadd.f32 0.0, %v3291
    %3293 = vmatprep.mubr.bf16.mxu0 0
    %3294 = vmatmul.mubr.bf16.gmra.mxu0 %v3152
    %v3295 = vpop.f32.mrf.mxu0
    %v3296 = vadd.f32 0.0, %v3295
    %v3297 = vpop.f32.mrf.mxu0
    %v3298 = vadd.f32 0.0, %v3297
    %v3299 = vpop.f32.mrf.mxu0
    %v3300 = vadd.f32 0.0, %v3299
    %v3301 = vpop.f32.mrf.mxu0
    %v3302 = vadd.f32 0.0, %v3301
    %3303 = vmatprep.mubr.bf16.mxu0 0
    %3304 = vmatmul.mubr.bf16.gmra.mxu0 %v3155
    %v3305 = vpop.f32.mrf.mxu0
    %v3306 = vadd.f32 0.0, %v3305
    %v3307 = vpop.f32.mrf.mxu0
    %v3308 = vadd.f32 0.0, %v3307
    %v3309 = vpop.f32.mrf.mxu0
    %v3310 = vadd.f32 0.0, %v3309
    %v3311 = vpop.f32.mrf.mxu0
    %v3312 = vadd.f32 0.0, %v3311
    %3313 = vmatprep.mubr.bf16.mxu0 0
    %3314 = vmatmul.mubr.bf16.gmra.mxu0 %v3158
    %v3315 = vpop.f32.mrf.mxu0
    %v3316 = vadd.f32 0.0, %v3315
    %v3317 = vpop.f32.mrf.mxu0
    %v3318 = vadd.f32 0.0, %v3317
    %v3319 = vpop.f32.mrf.mxu0
    %v3320 = vadd.f32 0.0, %v3319
    %v3321 = vpop.f32.mrf.mxu0
    %v3322 = vadd.f32 0.0, %v3321
    %3323 = vmatprep.mubr.bf16.mxu0 0
    %3324 = vmatmul.mubr.bf16.gmra.mxu0 %v3161
    %v3325 = vpop.f32.mrf.mxu0
    %v3326 = vadd.f32 0.0, %v3325
    %v3327 = vpop.f32.mrf.mxu0
    %v3328 = vadd.f32 0.0, %v3327
    %v3329 = vpop.f32.mrf.mxu0
    %v3330 = vadd.f32 0.0, %v3329
    %v3331 = vpop.f32.mrf.mxu0
    %v3332 = vadd.f32 0.0, %v3331
    %3333 = vmatprep.mubr.bf16.mxu0 0
    %3334 = vmatmul.mubr.bf16.gmra.mxu0 %v3164
    %v3335 = vpop.f32.mrf.mxu0
    %v3336 = vadd.f32 0.0, %v3335
    %v3337 = vpop.f32.mrf.mxu0
    %v3338 = vadd.f32 0.0, %v3337
    %v3339 = vpop.f32.mrf.mxu0
    %v3340 = vadd.f32 0.0, %v3339
    %v3341 = vpop.f32.mrf.mxu0
    %v3342 = vadd.f32 0.0, %v3341
    %3343 = vmatprep.mubr.bf16.mxu0 0
    %3344 = vmatmul.mubr.bf16.gmra.mxu0 %v3167
    %v3345 = vpop.f32.mrf.mxu0
    %v3346 = vadd.f32 0.0, %v3345
    %v3347 = vpop.f32.mrf.mxu0
    %v3348 = vadd.f32 0.0, %v3347
    %v3349 = vpop.f32.mrf.mxu0
    %v3350 = vadd.f32 0.0, %v3349
    %v3351 = vpop.f32.mrf.mxu0
    %v3352 = vadd.f32 0.0, %v3351
    %3353 = vmatprep.mubr.bf16.mxu0 0
    %3354 = vmatmul.mubr.bf16.gmra.mxu0 %v3170
    %v3355 = vpop.f32.mrf.mxu0
    %v3356 = vadd.f32 0.0, %v3355
    %v3357 = vpop.f32.mrf.mxu0
    %v3358 = vadd.f32 0.0, %v3357
    %v3359 = vpop.f32.mrf.mxu0
    %v3360 = vadd.f32 0.0, %v3359
    %v3361 = vpop.f32.mrf.mxu0
    %v3362 = vadd.f32 0.0, %v3361
    %3363 = vmatprep.mubr.bf16.mxu0 0
    %3364 = vmatmul.mubr.bf16.gmra.mxu0 %v3173
    %v3365 = vpop.f32.mrf.mxu0
    %v3366 = vadd.f32 0.0, %v3365
    %v3367 = vpop.f32.mrf.mxu0
    %v3368 = vadd.f32 0.0, %v3367
    %v3369 = vpop.f32.mrf.mxu0
    %v3370 = vadd.f32 0.0, %v3369
    %v3371 = vpop.f32.mrf.mxu0
    %v3372 = vadd.f32 0.0, %v3371
    %3373 = vdwg.mxu0
    %v3374 = vmax.f32 %v3216, %v3218
    %3375 = vmax.xlane.f32.xlu0 %v3374
    %v3376 = vpop.xlane.xlu0 %3375
    %v3377 = vmax.f32 %v3220, %v3222
    %3378 = vmax.xlane.f32.xlu0 %v3377
    %v3379 = vpop.xlane.xlu0 %3378
    %v3380 = vmax.f32 %v3226, %v3228
    %3381 = vmax.xlane.f32.xlu0 %v3380
    %v3382 = vpop.xlane.xlu0 %3381
    %v3383 = vmax.f32 %v3230, %v3232
    %3384 = vmax.xlane.f32.xlu0 %v3383
    %v3385 = vpop.xlane.xlu0 %3384
    %v3386 = vmax.f32 %v3236, %v3238
    %3387 = vmax.xlane.f32.xlu0 %v3386
    %v3388 = vpop.xlane.xlu0 %3387
    %v3389 = vmax.f32 %v3240, %v3242
    %3390 = vmax.xlane.f32.xlu0 %v3389
    %v3391 = vpop.xlane.xlu0 %3390
    %v3392 = vmax.f32 %v3246, %v3248
    %3393 = vmax.xlane.f32.xlu0 %v3392
    %v3394 = vpop.xlane.xlu0 %3393
    %v3395 = vmax.f32 %v3250, %v3252
    %3396 = vmax.xlane.f32.xlu0 %v3395
    %v3397 = vpop.xlane.xlu0 %3396
    %v3398 = vmax.f32 %v3256, %v3258
    %3399 = vmax.xlane.f32.xlu0 %v3398
    %v3400 = vpop.xlane.xlu0 %3399
    %v3401 = vmax.f32 %v3260, %v3262
    %3402 = vmax.xlane.f32.xlu0 %v3401
    %v3403 = vpop.xlane.xlu0 %3402
    %v3404 = vmax.f32 %v3266, %v3268
    %3405 = vmax.xlane.f32.xlu0 %v3404
    %v3406 = vpop.xlane.xlu0 %3405
    %v3407 = vmax.f32 %v3270, %v3272
    %3408 = vmax.xlane.f32.xlu0 %v3407
    %v3409 = vpop.xlane.xlu0 %3408
    %v3410 = vmax.f32 %v3276, %v3278
    %3411 = vmax.xlane.f32.xlu0 %v3410
    %v3412 = vpop.xlane.xlu0 %3411
    %v3413 = vmax.f32 %v3280, %v3282
    %3414 = vmax.xlane.f32.xlu0 %v3413
    %v3415 = vpop.xlane.xlu0 %3414
    %v3416 = vmax.f32 %v3286, %v3288
    %3417 = vmax.xlane.f32.xlu0 %v3416
    %v3418 = vpop.xlane.xlu0 %3417
    %v3419 = vmax.f32 %v3290, %v3292
    %3420 = vmax.xlane.f32.xlu0 %v3419
    %v3421 = vpop.xlane.xlu0 %3420
    %v3422 = vmax.f32 %v3296, %v3298
    %3423 = vmax.xlane.f32.xlu0 %v3422
    %v3424 = vpop.xlane.xlu0 %3423
    %v3425 = vmax.f32 %v3300, %v3302
    %3426 = vmax.xlane.f32.xlu0 %v3425
    %v3427 = vpop.xlane.xlu0 %3426
    %v3428 = vmax.f32 %v3306, %v3308
    %3429 = vmax.xlane.f32.xlu0 %v3428
    %v3430 = vpop.xlane.xlu0 %3429
    %v3431 = vmax.f32 %v3310, %v3312
    %3432 = vmax.xlane.f32.xlu0 %v3431
    %v3433 = vpop.xlane.xlu0 %3432
    %v3434 = vmax.f32 %v3316, %v3318
    %3435 = vmax.xlane.f32.xlu0 %v3434
    %v3436 = vpop.xlane.xlu0 %3435
    %v3437 = vmax.f32 %v3320, %v3322
    %3438 = vmax.xlane.f32.xlu0 %v3437
    %v3439 = vpop.xlane.xlu0 %3438
    %v3440 = vmax.f32 %v3326, %v3328
    %3441 = vmax.xlane.f32.xlu0 %v3440
    %v3442 = vpop.xlane.xlu0 %3441
    %v3443 = vmax.f32 %v3330, %v3332
    %3444 = vmax.xlane.f32.xlu0 %v3443
    %v3445 = vpop.xlane.xlu0 %3444
    %v3446 = vmax.f32 %v3336, %v3338
    %3447 = vmax.xlane.f32.xlu0 %v3446
    %v3448 = vpop.xlane.xlu0 %3447
    %v3449 = vmax.f32 %v3340, %v3342
    %3450 = vmax.xlane.f32.xlu0 %v3449
    %v3451 = vpop.xlane.xlu0 %3450
    %v3452 = vmax.f32 %v3346, %v3348
    %3453 = vmax.xlane.f32.xlu0 %v3452
    %v3454 = vpop.xlane.xlu0 %3453
    %v3455 = vmax.f32 %v3350, %v3352
    %3456 = vmax.xlane.f32.xlu0 %v3455
    %v3457 = vpop.xlane.xlu0 %3456
    %v3458 = vmax.f32 %v3356, %v3358
    %3459 = vmax.xlane.f32.xlu0 %v3458
    %v3460 = vpop.xlane.xlu0 %3459
    %v3461 = vmax.f32 %v3360, %v3362
    %3462 = vmax.xlane.f32.xlu0 %v3461
    %v3463 = vpop.xlane.xlu0 %3462
    %v3464 = vmax.f32 %v3366, %v3368
    %3465 = vmax.xlane.f32.xlu0 %v3464
    %v3466 = vpop.xlane.xlu0 %3465
    %v3467 = vmax.f32 %v3370, %v3372
    %3468 = vmax.xlane.f32.xlu0 %v3467
    %v3469 = vpop.xlane.xlu0 %3468
    %v3470 = vsub.f32 %v3216, %v3376
    %v3471 = vsub.f32 %v3218, %v3376
    %v3472 = vsub.f32 %v3220, %v3379
    %v3473 = vsub.f32 %v3222, %v3379
    %v3474 = vsub.f32 %v3226, %v3382
    %v3475 = vsub.f32 %v3228, %v3382
    %v3476 = vsub.f32 %v3230, %v3385
    %v3477 = vsub.f32 %v3232, %v3385
    %v3478 = vsub.f32 %v3236, %v3388
    %v3479 = vsub.f32 %v3238, %v3388
    %v3480 = vsub.f32 %v3240, %v3391
    %v3481 = vsub.f32 %v3242, %v3391
    %v3482 = vsub.f32 %v3246, %v3394
    %v3483 = vsub.f32 %v3248, %v3394
    %v3484 = vsub.f32 %v3250, %v3397
    %v3485 = vsub.f32 %v3252, %v3397
    %v3486 = vsub.f32 %v3256, %v3400
    %v3487 = vsub.f32 %v3258, %v3400
    %v3488 = vsub.f32 %v3260, %v3403
    %v3489 = vsub.f32 %v3262, %v3403
    %v3490 = vsub.f32 %v3266, %v3406
    %v3491 = vsub.f32 %v3268, %v3406
    %v3492 = vsub.f32 %v3270, %v3409
    %v3493 = vsub.f32 %v3272, %v3409
    %v3494 = vsub.f32 %v3276, %v3412
    %v3495 = vsub.f32 %v3278, %v3412
    %v3496 = vsub.f32 %v3280, %v3415
    %v3497 = vsub.f32 %v3282, %v3415
    %v3498 = vsub.f32 %v3286, %v3418
    %v3499 = vsub.f32 %v3288, %v3418
    %v3500 = vsub.f32 %v3290, %v3421
    %v3501 = vsub.f32 %v3292, %v3421
    %v3502 = vsub.f32 %v3296, %v3424
    %v3503 = vsub.f32 %v3298, %v3424
    %v3504 = vsub.f32 %v3300, %v3427
    %v3505 = vsub.f32 %v3302, %v3427
    %v3506 = vsub.f32 %v3306, %v3430
    %v3507 = vsub.f32 %v3308, %v3430
    %v3508 = vsub.f32 %v3310, %v3433
    %v3509 = vsub.f32 %v3312, %v3433
    %v3510 = vsub.f32 %v3316, %v3436
    %v3511 = vsub.f32 %v3318, %v3436
    %v3512 = vsub.f32 %v3320, %v3439
    %v3513 = vsub.f32 %v3322, %v3439
    %v3514 = vsub.f32 %v3326, %v3442
    %v3515 = vsub.f32 %v3328, %v3442
    %v3516 = vsub.f32 %v3330, %v3445
    %v3517 = vsub.f32 %v3332, %v3445
    %v3518 = vsub.f32 %v3336, %v3448
    %v3519 = vsub.f32 %v3338, %v3448
    %v3520 = vsub.f32 %v3340, %v3451
    %v3521 = vsub.f32 %v3342, %v3451
    %v3522 = vsub.f32 %v3346, %v3454
    %v3523 = vsub.f32 %v3348, %v3454
    %v3524 = vsub.f32 %v3350, %v3457
    %v3525 = vsub.f32 %v3352, %v3457
    %v3526 = vsub.f32 %v3356, %v3460
    %v3527 = vsub.f32 %v3358, %v3460
    %v3528 = vsub.f32 %v3360, %v3463
    %v3529 = vsub.f32 %v3362, %v3463
    %v3530 = vsub.f32 %v3366, %v3466
    %v3531 = vsub.f32 %v3368, %v3466
    %v3532 = vsub.f32 %v3370, %v3469
    %v3533 = vsub.f32 %v3372, %v3469
    %v3534 = vmul.f32 %v3470, 1.442695
    %v3535 = vpow.pop %v3534
    %v3536 = vmul.f32 %v3471, 1.442695
    %v3537 = vpow.pop %v3536
    %v3538 = vmul.f32 %v3472, 1.442695
    %v3539 = vpow.pop %v3538
    %v3540 = vmul.f32 %v3473, 1.442695
    %v3541 = vpow.pop %v3540
    %v3542 = vmul.f32 %v3474, 1.442695
    %v3543 = vpow.pop %v3542
    %v3544 = vmul.f32 %v3475, 1.442695
    %v3545 = vpow.pop %v3544
    %v3546 = vmul.f32 %v3476, 1.442695
    %v3547 = vpow.pop %v3546
    %v3548 = vmul.f32 %v3477, 1.442695
    %v3549 = vpow.pop %v3548
    %v3550 = vmul.f32 %v3478, 1.442695
    %v3551 = vpow.pop %v3550
    %v3552 = vmul.f32 %v3479, 1.442695
    %v3553 = vpow.pop %v3552
    %v3554 = vmul.f32 %v3480, 1.442695
    %v3555 = vpow.pop %v3554
    %v3556 = vmul.f32 %v3481, 1.442695
    %v3557 = vpow.pop %v3556
    %v3558 = vmul.f32 %v3482, 1.442695
    %v3559 = vpow.pop %v3558
    %v3560 = vmul.f32 %v3483, 1.442695
    %v3561 = vpow.pop %v3560
    %v3562 = vmul.f32 %v3484, 1.442695
    %v3563 = vpow.pop %v3562
    %v3564 = vmul.f32 %v3485, 1.442695
    %v3565 = vpow.pop %v3564
    %v3566 = vmul.f32 %v3486, 1.442695
    %v3567 = vpow.pop %v3566
    %v3568 = vmul.f32 %v3487, 1.442695
    %v3569 = vpow.pop %v3568
    %v3570 = vmul.f32 %v3488, 1.442695
    %v3571 = vpow.pop %v3570
    %v3572 = vmul.f32 %v3489, 1.442695
    %v3573 = vpow.pop %v3572
    %v3574 = vmul.f32 %v3490, 1.442695
    %v3575 = vpow.pop %v3574
    %v3576 = vmul.f32 %v3491, 1.442695
    %v3577 = vpow.pop %v3576
    %v3578 = vmul.f32 %v3492, 1.442695
    %v3579 = vpow.pop %v3578
    %v3580 = vmul.f32 %v3493, 1.442695
    %v3581 = vpow.pop %v3580
    %v3582 = vmul.f32 %v3494, 1.442695
    %v3583 = vpow.pop %v3582
    %v3584 = vmul.f32 %v3495, 1.442695
    %v3585 = vpow.pop %v3584
    %v3586 = vmul.f32 %v3496, 1.442695
    %v3587 = vpow.pop %v3586
    %v3588 = vmul.f32 %v3497, 1.442695
    %v3589 = vpow.pop %v3588
    %v3590 = vmul.f32 %v3498, 1.442695
    %v3591 = vpow.pop %v3590
    %v3592 = vmul.f32 %v3499, 1.442695
    %v3593 = vpow.pop %v3592
    %v3594 = vmul.f32 %v3500, 1.442695
    %v3595 = vpow.pop %v3594
    %v3596 = vmul.f32 %v3501, 1.442695
    %v3597 = vpow.pop %v3596
    %v3598 = vmul.f32 %v3502, 1.442695
    %v3599 = vpow.pop %v3598
    %v3600 = vmul.f32 %v3503, 1.442695
    %v3601 = vpow.pop %v3600
    %v3602 = vmul.f32 %v3504, 1.442695
    %v3603 = vpow.pop %v3602
    %v3604 = vmul.f32 %v3505, 1.442695
    %v3605 = vpow.pop %v3604
    %v3606 = vmul.f32 %v3506, 1.442695
    %v3607 = vpow.pop %v3606
    %v3608 = vmul.f32 %v3507, 1.442695
    %v3609 = vpow.pop %v3608
    %v3610 = vmul.f32 %v3508, 1.442695
    %v3611 = vpow.pop %v3610
    %v3612 = vmul.f32 %v3509, 1.442695
    %v3613 = vpow.pop %v3612
    %v3614 = vmul.f32 %v3510, 1.442695
    %v3615 = vpow.pop %v3614
    %v3616 = vmul.f32 %v3511, 1.442695
    %v3617 = vpow.pop %v3616
    %v3618 = vmul.f32 %v3512, 1.442695
    %v3619 = vpow.pop %v3618
    %v3620 = vmul.f32 %v3513, 1.442695
    %v3621 = vpow.pop %v3620
    %v3622 = vmul.f32 %v3514, 1.442695
    %v3623 = vpow.pop %v3622
    %v3624 = vmul.f32 %v3515, 1.442695
    %v3625 = vpow.pop %v3624
    %v3626 = vmul.f32 %v3516, 1.442695
    %v3627 = vpow.pop %v3626
    %v3628 = vmul.f32 %v3517, 1.442695
    %v3629 = vpow.pop %v3628
    %v3630 = vmul.f32 %v3518, 1.442695
    %v3631 = vpow.pop %v3630
    %v3632 = vmul.f32 %v3519, 1.442695
    %v3633 = vpow.pop %v3632
    %v3634 = vmul.f32 %v3520, 1.442695
    %v3635 = vpow.pop %v3634
    %v3636 = vmul.f32 %v3521, 1.442695
    %v3637 = vpow.pop %v3636
    %v3638 = vmul.f32 %v3522, 1.442695
    %v3639 = vpow.pop %v3638
    %v3640 = vmul.f32 %v3523, 1.442695
    %v3641 = vpow.pop %v3640
    %v3642 = vmul.f32 %v3524, 1.442695
    %v3643 = vpow.pop %v3642
    %v3644 = vmul.f32 %v3525, 1.442695
    %v3645 = vpow.pop %v3644
    %v3646 = vmul.f32 %v3526, 1.442695
    %v3647 = vpow.pop %v3646
    %v3648 = vmul.f32 %v3527, 1.442695
    %v3649 = vpow.pop %v3648
    %v3650 = vmul.f32 %v3528, 1.442695
    %v3651 = vpow.pop %v3650
    %v3652 = vmul.f32 %v3529, 1.442695
    %v3653 = vpow.pop %v3652
    %v3654 = vmul.f32 %v3530, 1.442695
    %v3655 = vpow.pop %v3654
    %v3656 = vmul.f32 %v3531, 1.442695
    %v3657 = vpow.pop %v3656
    %v3658 = vmul.f32 %v3532, 1.442695
    %v3659 = vpow.pop %v3658
    %v3660 = vmul.f32 %v3533, 1.442695
    %v3661 = vpow.pop %v3660
    %v3662 = vpack.c.bf16 %v3539, %v3535
    %v3663 = vpack.c.bf16 %v3541, %v3537
    %v3664 = vpack.c.bf16 %v3547, %v3543
    %v3665 = vpack.c.bf16 %v3549, %v3545
    %v3666 = vpack.c.bf16 %v3555, %v3551
    %v3667 = vpack.c.bf16 %v3557, %v3553
    %v3668 = vpack.c.bf16 %v3563, %v3559
    %v3669 = vpack.c.bf16 %v3565, %v3561
    %v3670 = vpack.c.bf16 %v3571, %v3567
    %v3671 = vpack.c.bf16 %v3573, %v3569
    %v3672 = vpack.c.bf16 %v3579, %v3575
    %v3673 = vpack.c.bf16 %v3581, %v3577
    %v3674 = vpack.c.bf16 %v3587, %v3583
    %v3675 = vpack.c.bf16 %v3589, %v3585
    %v3676 = vpack.c.bf16 %v3595, %v3591
    %v3677 = vpack.c.bf16 %v3597, %v3593
    %v3678 = vpack.c.bf16 %v3603, %v3599
    %v3679 = vpack.c.bf16 %v3605, %v3601
    %v3680 = vpack.c.bf16 %v3611, %v3607
    %v3681 = vpack.c.bf16 %v3613, %v3609
    %v3682 = vpack.c.bf16 %v3619, %v3615
    %v3683 = vpack.c.bf16 %v3621, %v3617
    %v3684 = vpack.c.bf16 %v3627, %v3623
    %v3685 = vpack.c.bf16 %v3629, %v3625
    %v3686 = vpack.c.bf16 %v3635, %v3631
    %v3687 = vpack.c.bf16 %v3637, %v3633
    %v3688 = vpack.c.bf16 %v3643, %v3639
    %v3689 = vpack.c.bf16 %v3645, %v3641
    %v3690 = vpack.c.bf16 %v3651, %v3647
    %v3691 = vpack.c.bf16 %v3653, %v3649
    %v3692 = vpack.c.bf16 %v3659, %v3655
    %v3693 = vpack.c.bf16 %v3661, %v3657
    %3694 = vmatprep.subr.bf16.mxu0 %v3677
    %3695 = vmatpush1.bf16.xpose.msra.mxu0 %v3676
    %3696 = vmatprep.subr.bf16.mxu0 %v3675
    %3697 = vmatpush1.bf16.xpose.msra.mxu0 %v3674
    %3698 = vmatprep.subr.bf16.mxu0 %v3673
    %3699 = vmatpush1.bf16.xpose.msra.mxu0 %v3672
    %3700 = vmatprep.subr.bf16.mxu0 %v3671
    %3701 = vmatpush1.bf16.xpose.msra.mxu0 %v3670
    %3702 = vmatprep.subr.bf16.mxu0 %v3669
    %3703 = vmatpush1.bf16.xpose.msra.mxu0 %v3668
    %3704 = vmatprep.subr.bf16.mxu0 %v3667
    %3705 = vmatpush1.bf16.xpose.msra.mxu0 %v3666
    %3706 = vmatprep.subr.bf16.mxu0 %v3665
    %3707 = vmatpush1.bf16.xpose.msra.mxu0 %v3664
    %3708 = vmatprep.subr.bf16.mxu0 %v3663
    %3709 = vmatpush1.bf16.xpose.msra.mxu0 %v3662
    %3710 = vmatprep.subr.bf16.mxu0 %v3693
    %3711 = vmatpush2.bf16.xpose.msra.mxu0 %v3692
    %3712 = vmatprep.subr.bf16.mxu0 %v3691
    %3713 = vmatpush2.bf16.xpose.msra.mxu0 %v3690
    %3714 = vmatprep.subr.bf16.mxu0 %v3689
    %3715 = vmatpush2.bf16.xpose.msra.mxu0 %v3688
    %3716 = vmatprep.subr.bf16.mxu0 %v3687
    %3717 = vmatpush2.bf16.xpose.msra.mxu0 %v3686
    %3718 = vmatprep.subr.bf16.mxu0 %v3685
    %3719 = vmatpush2.bf16.xpose.msra.mxu0 %v3684
    %3720 = vmatprep.subr.bf16.mxu0 %v3683
    %3721 = vmatpush2.bf16.xpose.msra.mxu0 %v3682
    %3722 = vmatprep.subr.bf16.mxu0 %v3681
    %3723 = vmatpush2.bf16.xpose.msra.mxu0 %v3680
    %3724 = vmatprep.subr.bf16.mxu0 %v3679
    %3725 = vmatpush2.bf16.xpose.msra.mxu0 %v3678
    %3726 = vmatprep.mubr.bf16.mxu0 %v3092
    %3727 = vmatmul.mubr.bf16.gmra.mxu0 %v3091
    %v3728 = vpop.f32.mrf.mxu0
    %v3729 = vadd.f32 0.0, %v3728
    %v3730 = vpop.f32.mrf.mxu0
    %v3731 = vadd.f32 0.0, %v3730
    %v3732 = vpop.f32.mrf.mxu0
    %v3733 = vadd.f32 0.0, %v3732
    %v3734 = vpop.f32.mrf.mxu0
    %v3735 = vadd.f32 0.0, %v3734
    %3736 = vdwg.mxu0
    %v3737 = vrcp.pop %v3733
    %v3738 = vrcp.pop %v3735
    %v3739 = vlaneseq
    %v3740 = vshrl.u32 %v3739, 7
    %v3741 = vsub.s32 0, %v3740
    %v3742 = vrot.slane %v3737, %v3741
    %v3743 = vlaneseq
    %v3744 = vshrl.u32 %v3743, 7
    %v3745 = vsub.s32 0, %v3744
    %v3746 = vrot.slane %v3738, %v3745
    %v3747 = vmul.f32 %v3729, %v3742
    %v3748 = vmul.f32 %v3731, %v3746
    %v3749 = vpack.c.bf16 %v3747, %v3747
    %v3750 = vpack.c.bf16 %v3748, %v3748
    %v3751 = vld [vmem:[%s1827] sm:$0x3]
    %v3753 = vsel %vm326, %v3751, 0
    %v3756 = vsel %vm375, %v3749, 0
    %v3759 = vsel %vm375, %v3750, 0
    %3761 = vmatprep.subr.bf16.mxu0 0
    %3762 = vmatpush1.bf16.msra.mxu0 0
    %3763 = vmatprep.subr.bf16.mxu0 0
    %3764 = vmatpush1.bf16.msra.mxu0 0
    %3765 = vmatprep.subr.bf16.mxu0 0
    %3766 = vmatpush1.bf16.msra.mxu0 0
    %3767 = vmatprep.subr.bf16.mxu0 0
    %3768 = vmatpush1.bf16.msra.mxu0 0
    %3769 = vmatprep.subr.bf16.mxu0 0
    %3770 = vmatpush1.bf16.msra.mxu0 0
    %3771 = vmatprep.subr.bf16.mxu0 0
    %3772 = vmatpush1.bf16.msra.mxu0 0
    %3773 = vmatprep.subr.bf16.mxu0 0
    %3774 = vmatpush1.bf16.msra.mxu0 0
    %3775 = vmatprep.subr.bf16.mxu0 %v3759
    %3776 = vmatpush1.bf16.msra.mxu0 %v3756
    %3777 = vmatprep.subr.bf16.mxu0 0
    %3778 = vmatpush2.bf16.msra.mxu0 0
    %3779 = vmatprep.subr.bf16.mxu0 0
    %3780 = vmatpush2.bf16.msra.mxu0 0
    %3781 = vmatprep.subr.bf16.mxu0 0
    %3782 = vmatpush2.bf16.msra.mxu0 0
    %3783 = vmatprep.subr.bf16.mxu0 0
    %3784 = vmatpush2.bf16.msra.mxu0 0
    %3785 = vmatprep.subr.bf16.mxu0 0
    %3786 = vmatpush2.bf16.msra.mxu0 0
    %3787 = vmatprep.subr.bf16.mxu0 0
    %3788 = vmatpush2.bf16.msra.mxu0 0
    %3789 = vmatprep.subr.bf16.mxu0 0
    %3790 = vmatpush2.bf16.msra.mxu0 0
    %3791 = vmatprep.subr.bf16.mxu0 0
    %3792 = vmatpush2.bf16.msra.mxu0 0
    %3793 = vmatprep.mubr.bf16.mxu0 0
    %3794 = vmatmul.mubr.bf16.gmra.mxu0 %v3753
    %v3795 = vpop.f32.mrf.mxu0
    %v3796 = vadd.f32 0.0, %v3795
    %v3797 = vpop.f32.mrf.mxu0
    %v3798 = vadd.f32 0.0, %v3797
    %v3799 = vpop.f32.mrf.mxu0
    %v3800 = vpop.f32.mrf.mxu0
    %3801 = vdwg.mxu0
    %v3802 = vadd.f32 %v2936, %v3796
    %v3803 = vadd.f32 %v2937, %v3798
    %v3804 = vld [vmem:[#allocation11] sm:$0x3]
    %v3805 = vld [vmem:[%s1882] sm:$0x3]
    %v3806 = vpack.c.bf16 %v3802, %v3802
    %v3807 = vpack.c.bf16 %v3803, %v3803
    %v3809 = vsel %vm142, %v3805, 0
    %v3812 = vsel %vm146, %v3806, 0
    %v3815 = vsel %vm146, %v3807, 0
    %3817 = vmatprep.subr.bf16.mxu0 0
    %3818 = vmatpush1.bf16.msra.mxu0 0
    %3819 = vmatprep.subr.bf16.mxu0 0
    %3820 = vmatpush1.bf16.msra.mxu0 0
    %3821 = vmatprep.subr.bf16.mxu0 0
    %3822 = vmatpush1.bf16.msra.mxu0 0
    %3823 = vmatprep.subr.bf16.mxu0 0
    %3824 = vmatpush1.bf16.msra.mxu0 0
    %3825 = vmatprep.subr.bf16.mxu0 0
    %3826 = vmatpush1.bf16.msra.mxu0 0
    %3827 = vmatprep.subr.bf16.mxu0 0
    %3828 = vmatpush1.bf16.msra.mxu0 0
    %3829 = vmatprep.subr.bf16.mxu0 0
    %3830 = vmatpush1.bf16.msra.mxu0 0
    %3831 = vmatprep.subr.bf16.mxu0 %v3815
    %3832 = vmatpush1.bf16.msra.mxu0 %v3812
    %3833 = vmatprep.subr.bf16.mxu0 0
    %3834 = vmatpush2.bf16.msra.mxu0 0
    %3835 = vmatprep.subr.bf16.mxu0 0
    %3836 = vmatpush2.bf16.msra.mxu0 0
    %3837 = vmatprep.subr.bf16.mxu0 0
    %3838 = vmatpush2.bf16.msra.mxu0 0
    %3839 = vmatprep.subr.bf16.mxu0 0
    %3840 = vmatpush2.bf16.msra.mxu0 0
    %3841 = vmatprep.subr.bf16.mxu0 0
    %3842 = vmatpush2.bf16.msra.mxu0 0
    %3843 = vmatprep.subr.bf16.mxu0 0
    %3844 = vmatpush2.bf16.msra.mxu0 0
    %3845 = vmatprep.subr.bf16.mxu0 0
    %3846 = vmatpush2.bf16.msra.mxu0 0
    %3847 = vmatprep.subr.bf16.mxu0 0
    %3848 = vmatpush2.bf16.msra.mxu0 0
    %3849 = vmatprep.mubr.bf16.mxu0 0
    %3850 = vmatmul.mubr.bf16.gmra.mxu0 %v3809
    %v3851 = vpop.f32.mrf.mxu0
    %v3852 = vadd.f32 0.0, %v3851
    %v3853 = vpop.f32.mrf.mxu0
    %v3854 = vadd.f32 0.0, %v3853
    %v3855 = vpop.f32.mrf.mxu0
    %v3856 = vpop.f32.mrf.mxu0
    %3857 = vdwg.mxu0
    %v3859 = vsel %vm142, %v3804, 0
    %3861 = vmatprep.subr.bf16.mxu0 0
    %3862 = vmatpush1.bf16.msra.mxu0 0
    %3863 = vmatprep.subr.bf16.mxu0 0
    %3864 = vmatpush1.bf16.msra.mxu0 0
    %3865 = vmatprep.subr.bf16.mxu0 0
    %3866 = vmatpush1.bf16.msra.mxu0 0
    %3867 = vmatprep.subr.bf16.mxu0 0
    %3868 = vmatpush1.bf16.msra.mxu0 0
    %3869 = vmatprep.subr.bf16.mxu0 0
    %3870 = vmatpush1.bf16.msra.mxu0 0
    %3871 = vmatprep.subr.bf16.mxu0 0
    %3872 = vmatpush1.bf16.msra.mxu0 0
    %3873 = vmatprep.subr.bf16.mxu0 0
    %3874 = vmatpush1.bf16.msra.mxu0 0
    %3875 = vmatprep.subr.bf16.mxu0 %v2081
    %3876 = vmatpush1.bf16.msra.mxu0 %v2078
    %3877 = vmatprep.subr.bf16.mxu0 0
    %3878 = vmatpush2.bf16.msra.mxu0 0
    %3879 = vmatprep.subr.bf16.mxu0 0
    %3880 = vmatpush2.bf16.msra.mxu0 0
    %3881 = vmatprep.subr.bf16.mxu0 0
    %3882 = vmatpush2.bf16.msra.mxu0 0
    %3883 = vmatprep.subr.bf16.mxu0 0
    %3884 = vmatpush2.bf16.msra.mxu0 0
    %3885 = vmatprep.subr.bf16.mxu0 0
    %3886 = vmatpush2.bf16.msra.mxu0 0
    %3887 = vmatprep.subr.bf16.mxu0 0
    %3888 = vmatpush2.bf16.msra.mxu0 0
    %3889 = vmatprep.subr.bf16.mxu0 0
    %3890 = vmatpush2.bf16.msra.mxu0 0
    %3891 = vmatprep.subr.bf16.mxu0 0
    %3892 = vmatpush2.bf16.msra.mxu0 0
    %3893 = vmatprep.mubr.bf16.mxu0 0
    %3894 = vmatmul.mubr.bf16.gmra.mxu0 %v3859
    %v3895 = vpop.f32.mrf.mxu0
    %v3896 = vadd.f32 %v3852, %v3895
    %v3897 = vpop.f32.mrf.mxu0
    %v3898 = vadd.f32 %v3854, %v3897
    %v3899 = vpop.f32.mrf.mxu0
    %v3900 = vpop.f32.mrf.mxu0
    %3901 = vdwg.mxu0
    %v3902 = vld [vmem:[%s8] sm:$0xf]
    %3904 = vset.pattern.permute.xlu0 0
    %3905 = vperm.xlu0 %3904, %v3902
    %v3906 = vpop.permute.xlu0 %3905
    %v3908 = vadd.f32 %v3896, %v3906
    %v3909 = vadd.f32 %v3898, %v3906
    %v3910 = vmax.f32 %v3908, 0.0
    %v3911 = vmax.f32 %v3909, 0.0
    %v3912 = vld [vmem:[%s9] sm:$0x3]
    %v3913 = vld [vmem:[%s10] sm:$0xf]
    %3915 = vset.pattern.permute.xlu0 0
    %3916 = vperm.xlu0 %3915, %v3913
    %v3917 = vpop.permute.xlu0 %3916
    %v3920 = vsel %vm142, %v3912, 0
    %3922 = vmatprep.subr.bf16.mxu0 0
    %3923 = vmatpush1.bf16.msra.mxu0 0
    %3924 = vmatprep.subr.bf16.mxu0 0
    %3925 = vmatpush1.bf16.msra.mxu0 0
    %3926 = vmatprep.subr.bf16.mxu0 0
    %3927 = vmatpush1.bf16.msra.mxu0 0
    %3928 = vmatprep.subr.bf16.mxu0 0
    %3929 = vmatpush1.bf16.msra.mxu0 0
    %3930 = vmatprep.subr.bf16.mxu0 0
    %3931 = vmatpush1.bf16.msra.mxu0 0
    %3932 = vmatprep.subr.bf16.mxu0 0
    %3933 = vmatpush1.bf16.msra.mxu0 0
    %3934 = vmatprep.subr.bf16.mxu0 0
    %3935 = vmatpush1.bf16.msra.mxu0 0
    %3936 = vmatprep.subr.bf16.mxu0 %v3030
    %3937 = vmatpush1.bf16.msra.mxu0 %v3027
    %3938 = vmatprep.subr.bf16.mxu0 0
    %3939 = vmatpush2.bf16.msra.mxu0 0
    %3940 = vmatprep.subr.bf16.mxu0 0
    %3941 = vmatpush2.bf16.msra.mxu0 0
    %3942 = vmatprep.subr.bf16.mxu0 0
    %3943 = vmatpush2.bf16.msra.mxu0 0
    %3944 = vmatprep.subr.bf16.mxu0 0
    %3945 = vmatpush2.bf16.msra.mxu0 0
    %3946 = vmatprep.subr.bf16.mxu0 0
    %3947 = vmatpush2.bf16.msra.mxu0 0
    %3948 = vmatprep.subr.bf16.mxu0 0
    %3949 = vmatpush2.bf16.msra.mxu0 0
    %3950 = vmatprep.subr.bf16.mxu0 0
    %3951 = vmatpush2.bf16.msra.mxu0 0
    %3952 = vmatprep.subr.bf16.mxu0 0
    %3953 = vmatpush2.bf16.msra.mxu0 0
    %3954 = vmatprep.mubr.bf16.mxu0 0
    %3955 = vmatmul.mubr.bf16.gmra.mxu0 %v3920
    %v3956 = vpop.f32.mrf.mxu0
    %v3957 = vadd.f32 %v3917, %v3956
    %v3958 = vpop.f32.mrf.mxu0
    %v3959 = vadd.f32 %v3917, %v3958
    %v3960 = vpop.f32.mrf.mxu0
    %v3961 = vpop.f32.mrf.mxu0
    %3962 = vdwg.mxu0
    %v3963 = vmax.f32 %v3957, 0.0
    %v3964 = vmax.f32 %v3959, 0.0
    %v3967 = vrot.slane %v3963, 4
    %v3968 = vrot.slane %v3964, 4
    %v3971 = vsel %vm375, %v3910, %v3967
    %v3972 = vsel %vm375, %v3911, %v3968
    %s3973 = scalar_lea.vmem [#allocation13], 16
    %3974 = vst [vmem:[%s3973] sm:$0xff] %v3971
    %3975 = vst [vmem:[%s3973 + $0x8] sm:$0xff] %v3972
    // Predicated region
    $region70: #{_forward_impl.1} parent=1 // pred_check
      _
    $region71: #{_forward_impl.1} parent=1 // pred_check_branch
      %3977 = sbr.rel (0) target = $region73
    $region72: #{_forward_impl.1} parent=1 // pred_region
      %s3979 = ssub.s32 512, 512
      %3980 = vsyncadd [#allocation4], %s3979
      %s3981 = sshll.u32 [#allocation13], 4
      %s3982 = int_to_ptr.vmem [resolvable:$true] %s3981
      %3987 = dma.vmem_to_hbm [thread:$0]  %s3982, 512, %s11, [#allocation4], 256, 256, 16
    $region73: #{_forward_impl.1} parent=1 // pred_fallthru
      _
    // Predicated region
    $region74: #{_forward_impl.1} parent=1 // pred_check
      _
    $region75: #{_forward_impl.1} parent=1 // pred_check_branch
      %3989 = sbr.rel (0) target = $region77
    $region76: #{_forward_impl.1} parent=1 // pred_region
      %3990 = dma.done [#allocation4], 512
    $region77: #{_forward_impl.1} parent=1 // pred_fallthru
      _
    %3991 = vsyncpa [#allocation3], 1
    %3992 = vsyncpa [#allocation6], 1
    %3993 = vsyncpa [#allocation9], 1
    %3994 = vsyncpa [#allocation12], 1
    %3995 = vsyncpa [#allocation4], 1

</llo_original>
